<compile_context>
chip_gen: v7x
topology: tpu7x:2x2x1
jax: 0.10.0
libtpu: 0.0.40
codegen_flags: <defaults>
</compile_context>

<pallas_src>
import math

import jax
import jax.numpy as jnp
import numpy as np
from jax import lax
from jax.experimental import pallas as pl
from jax.experimental.pallas import tpu as pltpu


def _round_up(x, m):
    return ((x + m - 1) // m) * m


def _pad_to(a, shape):
    return jnp.pad(a, [(0, t - s) for s, t in zip(a.shape, shape)])


# ----------------------------------------------------------------------------
# Fused sampled linear:  out = x @ (w_mu + w_xi).T + (b_mu + b_xi)
# ----------------------------------------------------------------------------
def _fused_linear_kernel(x_ref, wmu_ref, wxi_ref, bmu_ref, bxi_ref, o_ref, acc_ref):
    k = pl.program_id(2)

    @pl.when(k == 0)
    def _():
        acc_ref[...] = jnp.zeros_like(acc_ref)

    # Sample the weight tile in-kernel (VPU add hides under the MXU slot);
    # contract on K directly so no transposed weight copy is made in HBM.
    w = wmu_ref[...] + wxi_ref[...]                       # (tn, tk)
    acc_ref[...] += lax.dot_general(
        x_ref[...], w, (((1,), (1,)), ((), ())),
        preferred_element_type=jnp.float32)

    @pl.when(k == pl.num_programs(2) - 1)
    def _():
        bias = bmu_ref[...] + bxi_ref[...]                # (1, tn), epilogue only
        o_ref[...] = (acc_ref[...] + bias).astype(o_ref.dtype)


def fused_sampled_linear(x, w_mu, w_xi, b_mu, b_xi):
    """x:(M,K), w_mu/w_xi:(N,K), b_mu/b_xi:(N,) -> (M,N). Sampling fused in-kernel."""
    M, K = x.shape
    N = w_mu.shape[0]
    # Tile caps chosen to stay far below v7x's 64 MiB VMEM even double-buffered.
    tm = min(512, _round_up(M, 8))
    tn = min(256, _round_up(N, 128))      # lane-dense (multiple of 128) output
    tk = min(512, _round_up(K, 128))
    Mp, Np, Kp = _round_up(M, tm), _round_up(N, tn), _round_up(K, tk)

    f32 = jnp.float32
    xp = _pad_to(x.astype(f32), (Mp, Kp))
    wmup = _pad_to(w_mu.astype(f32), (Np, Kp))
    wxip = _pad_to(w_xi.astype(f32), (Np, Kp))
    bmup = _pad_to(b_mu.reshape(1, N).astype(f32), (1, Np))
    bxip = _pad_to(b_xi.reshape(1, N).astype(f32), (1, Np))

    out = pl.pallas_call(
        _fused_linear_kernel,
        out_shape=jax.ShapeDtypeStruct((Mp, Np), f32),
        grid=(Mp // tm, Np // tn, Kp // tk),
        in_specs=[
            pl.BlockSpec((tm, tk), lambda i, j, k: (i, k)),
            pl.BlockSpec((tn, tk), lambda i, j, k: (j, k)),
            pl.BlockSpec((tn, tk), lambda i, j, k: (j, k)),
            pl.BlockSpec((1, tn), lambda i, j, k: (0, j)),
            pl.BlockSpec((1, tn), lambda i, j, k: (0, j)),
        ],
        out_specs=pl.BlockSpec((tm, tn), lambda i, j, k: (i, j)),
        scratch_shapes=[pltpu.VMEM((tm, tn), jnp.float32)],
        compiler_params=pltpu.CompilerParams(
            dimension_semantics=("parallel", "parallel", "arbitrary"),
            vmem_limit_bytes=32 * 1024 * 1024),
        cost_estimate=pl.CostEstimate(
            flops=2 * Mp * Np * Kp,
            transcendentals=0,
            bytes_accessed=4 * (Mp * Kp + 2 * Np * Kp + 2 * Np + Mp * Np)),
    )(xp, wmup, wxip, bmup, bxip)
    return out[:M, :N]


# ----------------------------------------------------------------------------
# Fused sampled conv2d (3x3, stride 1): accumulated shifted-window matmul
# ----------------------------------------------------------------------------
def _make_conv_kernel(OH, OW, C, OC, KH, KW):
    def kernel(x_ref, wmu_ref, wxi_ref, bmu_ref, bxi_ref, o_ref, acc_ref):
        # x_ref: (1, Hp, Wp, C) spatially pre-padded NHWC block for one image.
        acc_ref[...] = jnp.zeros_like(acc_ref)
        w = wmu_ref[...] + wxi_ref[...]                   # (KH*KW, C, OC), sampled in-kernel
        for t in range(KH * KW):                          # accumulate over taps; no im2col
            kh, kw = divmod(t, KW)
            xt = x_ref[0, kh:kh + OH, kw:kw + OW, :].reshape(OH * OW, C)
            acc_ref[...] += jnp.dot(xt, w[t], preferred_element_type=jnp.float32)
        bias = bmu_ref[...] + bxi_ref[...]                # (1, OC), epilogue only
        o_ref[...] = acc_ref[...] + bias
    return kernel


def stochastic_conv2d_nhwc_flat(x_nchw, params, noise, stride=1, padding=1):
    """Sampled F.conv2d; returns (B*OH*OW, OC), rows ordered (b, oh, ow) (NHWC)."""
    assert stride == 1  # TODO(synk): general stride needs strided window slicing.
    B, C, H, W = x_nchw.shape
    OC, _, KH, KW = params["mu"].shape
    OH = H + 2 * padding - KH + 1
    OW = W + 2 * padding - KW + 1
    Hp, Wp = H + 2 * padding, W + 2 * padding

    f32 = jnp.float32
    x = jnp.transpose(x_nchw, (0, 2, 3, 1)).astype(f32)   # single small input transpose
    xpad = jnp.pad(x, ((0, 0), (padding, padding), (padding, padding), (0, 0)))
    # Per-tap weight layout (KH*KW, C, OC) — tiny arrays, trace-time cost only.
    wmu = jnp.transpose(params["mu"], (2, 3, 1, 0)).reshape(KH * KW, C, OC).astype(f32)
    wxi = jnp.transpose(noise["stdev_xi"], (2, 3, 1, 0)).reshape(KH * KW, C, OC).astype(f32)
    bmu = params["b_mu"].reshape(1, OC).astype(f32)
    bxi = noise["b_stdev_xi"].reshape(1, OC).astype(f32)

    out = pl.pallas_call(
        _make_conv_kernel(OH, OW, C, OC, KH, KW),
        out_shape=jax.ShapeDtypeStruct((B * OH * OW, OC), f32),
        grid=(B,),
        in_specs=[
            pl.BlockSpec((1, Hp, Wp, C), lambda b: (b, 0, 0, 0)),
            pl.BlockSpec((KH * KW, C, OC), lambda b: (0, 0, 0)),
            pl.BlockSpec((KH * KW, C, OC), lambda b: (0, 0, 0)),
            pl.BlockSpec((1, OC), lambda b: (0, 0)),
            pl.BlockSpec((1, OC), lambda b: (0, 0)),
        ],
        out_specs=pl.BlockSpec((OH * OW, OC), lambda b: (b, 0)),
        scratch_shapes=[pltpu.VMEM((OH * OW, OC), jnp.float32)],
        compiler_params=pltpu.CompilerParams(
            dimension_semantics=("parallel",),          # batch across TCs (v7x megacore)
            vmem_limit_bytes=32 * 1024 * 1024),
        cost_estimate=pl.CostEstimate(
            flops=2 * B * OH * OW * OC * C * KH * KW,
            transcendentals=0,
            bytes_accessed=4 * (B * Hp * Wp * C + 2 * KH * KW * C * OC
                                + 2 * OC + B * OH * OW * OC)),
    )(xpad, wmu, wxi, bmu, bxi)
    return out


# ----------------------------------------------------------------------------
# Fused KL divergence: one tiled-reduction launch for ALL parameter tensors
# ----------------------------------------------------------------------------
_KL_TILE_ROWS = 256  # 256x128 f32 = 128 KiB per operand per block


def _kl_kernel(mu1_ref, lv1_ref, mu2_ref, lv2_ref, o_ref):
    @pl.when(pl.program_id(0) == 0)
    def _():
        o_ref[0, 0] = 0.0

    lv1 = lv1_ref[...]
    lv2 = lv2_ref[...]
    diff = mu2_ref[...] - mu1_ref[...]
    # Log-space form: 2 EUP transcendentals/elem (vs 2 exp + log + div) and
    # numerically stable.  Zero-padded entries contribute exactly 0.
    kl = 0.5 * (lv2 - lv1) + 0.5 * (jnp.exp(lv1 - lv2) + diff * diff * jnp.exp(-lv2)) - 0.5
    o_ref[0, 0] += jnp.sum(kl)


def fused_kl_div(mu1_list, lv1_list, mu2_list, lv2_list):
    def cat(arrs):
        return jnp.concatenate([a.reshape(-1).astype(jnp.float32) for a in arrs])

    mu1, lv1, mu2, lv2 = cat(mu1_list), cat(lv1_list), cat(mu2_list), cat(lv2_list)
    L = mu1.shape[0]
    tile_elems = _KL_TILE_ROWS * 128
    Lp = _round_up(L, tile_elems)
    ntiles = Lp // tile_elems

    def prep(a):
        return jnp.pad(a, (0, Lp - L)).reshape(Lp // 128, 128)

    out = pl.pallas_call(
        _kl_kernel,
        out_shape=jax.ShapeDtypeStruct((1, 1), jnp.float32),
        grid=(ntiles,),
        in_specs=[pl.BlockSpec((_KL_TILE_ROWS, 128), lambda i: (i, 0))] * 4,
        out_specs=pl.BlockSpec((1, 1), lambda i: (0, 0), memory_space=pltpu.SMEM),
        compiler_params=pltpu.CompilerParams(
            dimension_semantics=("arbitrary",),
            vmem_limit_bytes=32 * 1024 * 1024),
        cost_estimate=pl.CostEstimate(
            flops=8 * Lp, transcendentals=2 * Lp, bytes_accessed=4 * 4 * Lp),
    )(prep(mu1), prep(lv1), prep(mu2), prep(lv2))
    return out[0, 0]


# ----------------------------------------------------------------------------
# Stochastic layer parameter setup / sampling (glue kept in JAX)
# ----------------------------------------------------------------------------
def init_stochastic_layer(key, weights_size):
    """Mirrors StochasticLayer.__init__ / init_mu / init_logvar."""
    n = weights_size[1]
    stdev = math.sqrt(1.0 / n)
    k_w, k_b = jax.random.split(key)
    return dict(
        mu=jax.random.uniform(k_w, weights_size, jnp.float32, -stdev, stdev),
        logvar=jnp.zeros(weights_size, jnp.float32),
        b_mu=jax.random.uniform(k_b, (weights_size[0],), jnp.float32, -stdev, stdev),
        b_logvar=jnp.zeros((weights_size[0],), jnp.float32),
    )


def init_xi(key, params):
    """Mirrors StochasticLayer.init_xi: stdev_xi = exp(0.5*logvar) * N(0,1)."""
    k_w, k_b = jax.random.split(key)
    xi = jax.random.normal(k_w, params["mu"].shape, jnp.float32)
    b_xi = jax.random.normal(k_b, params["b_mu"].shape, jnp.float32)
    return dict(
        stdev_xi=jnp.exp(0.5 * params["logvar"]) * xi,
        b_stdev_xi=jnp.exp(0.5 * params["b_logvar"]) * b_xi,
    )


# ----------------------------------------------------------------------------
# Concrete StochasticModel
# ----------------------------------------------------------------------------
def model_forward(x, conv_p, conv_n, lin_p, lin_n):
    """conv(3x3, s1, p1) -> flatten -> linear, numerically matching the NCHW spec."""
    B, C, H, W = x.shape
    OC, _, KH, KW = conv_p["mu"].shape
    OH = H + 2 - KH + 1
    OW = W + 2 - KW + 1

    h = stochastic_conv2d_nhwc_flat(x, conv_p, conv_n, stride=1, padding=1)
    h = h.reshape(B, OH * OW * OC)  # NHWC flatten — no activation transpose

    hidden = lin_p["mu"].shape[0]

    # Permute the (small) linear weight's input dim from NCHW- to NHWC-flatten
    # order once, instead of transposing the activation on the hot path.
    def perm(wf):
        return (wf.reshape(hidden, OC, OH, OW)
                  .transpose(0, 2, 3, 1)
                  .reshape(hidden, OH * OW * OC))

    return fused_sampled_linear(h, perm(lin_p["mu"]), perm(lin_n["stdev_xi"]),
                                lin_p["b_mu"], lin_n["b_stdev_xi"])


def model_calc_kl_div(layers, prior_layers):
    """StochasticModel.calc_kl_div: weight + bias KL over all layers, one launch."""
    mu1, lv1, mu2, lv2 = [], [], [], []
    for p, q in zip(layers, prior_layers):
        mu1 += [p["mu"], p["b_mu"]]
        lv1 += [p["logvar"], p["b_logvar"]]
        mu2 += [q["mu"], q["b_mu"]]
        lv2 += [q["logvar"], q["b_logvar"]]
    return fused_kl_div(mu1, lv1, mu2, lv2)


# TODO(synk): calc_r_div's data-dependent finiteness early-return (Python-level
# branch on tensor contents) has no clean in-kernel equivalent; only the KL
# path is kernelized.


# ----------------------------------------------------------------------------
# Main
# ----------------------------------------------------------------------------
if __name__ == "__main__":
    key = jax.random.PRNGKey(0)
    kx, kc, kl_, kcx, klx, kpc, kpl = jax.random.split(key, 7)

    B, C, H, W = 2, 4, 16, 16
    OC, KH, KW = 8, 3, 3
    HIDDEN = 32

    x = jax.random.normal(kx, (B, C, H, W), jnp.float32)

    conv_p = init_stochastic_layer(kc, (OC, C, KH, KW))
    lin_p = init_stochastic_layer(kl_, (HIDDEN, OC * H * W))
    conv_n = init_xi(kcx, conv_p)
    lin_n = init_xi(klx, lin_p)

    # --- forward pass (Pallas kernels) ---
    fwd = jax.jit(model_forward)
    out = jax.block_until_ready(fwd(x, conv_p, conv_n, lin_p, lin_n))

    # --- reference check of the forward pass ---
    w_conv = conv_p["mu"] + conv_n["stdev_xi"]
    b_conv = conv_p["b_mu"] + conv_n["b_stdev_xi"]
    ref_conv = lax.conv_general_dilated(
        x, w_conv, (1, 1), ((1, 1), (1, 1)),
        dimension_numbers=("NCHW", "OIHW", "NCHW"),
        precision=lax.Precision.HIGHEST,
    ) + b_conv[None, :, None, None]
    w_lin = lin_p["mu"] + lin_n["stdev_xi"]
    b_lin = lin_p["b_mu"] + lin_n["b_stdev_xi"]
    ref_out = (
        jnp.dot(ref_conv.reshape(B, -1), w_lin.T, precision=lax.Precision.HIGHEST)
        + b_lin[None, :]
    )
    np.testing.assert_allclose(np.asarray(out), np.asarray(ref_out), rtol=2e-2, atol=2e-2)

    # --- calc_kl_div against a prior model (single fused Pallas reduction) ---
    prior_conv = init_stochastic_layer(kpc, (OC, C, KH, KW))
    prior_lin = init_stochastic_layer(kpl, (HIDDEN, OC * H * W))
    kl_fn = jax.jit(model_calc_kl_div)
    kl = jax.block_until_ready(kl_fn([conv_p, lin_p], [prior_conv, prior_lin]))

    def _ref_kl(mu1, lv1, mu2, lv2):
        v1, v2 = jnp.exp(lv1), jnp.exp(lv2)
        return jnp.sum(0.5 * jnp.log(v2 / v1) + 0.5 * (v1 + (mu2 - mu1) ** 2) / v2 - 0.5)

    ref_kl = jnp.float32(0.0)
    for p, q in ((conv_p, prior_conv), (lin_p, prior_lin)):
        ref_kl = ref_kl + _ref_kl(p["mu"], p["logvar"], q["mu"], q["logvar"])
        ref_kl = ref_kl + _ref_kl(p["b_mu"], p["b_logvar"], q["b_mu"], q["b_logvar"])
    np.testing.assert_allclose(float(kl), float(ref_kl), rtol=1e-3, atol=1e-3)

    print("KERNEL_OK")
</pallas_src>

<mosaic_0001>
module attributes {stable_mosaic.version = 11 : i64} {
  func.func @kernel(%arg0: i32, %arg1: memref<1x18x18x4xf32, #tpu.memory_space<vmem>>, %arg2: memref<9x4x8xf32, #tpu.memory_space<vmem>>, %arg3: memref<9x4x8xf32, #tpu.memory_space<vmem>>, %arg4: memref<1x8xf32, #tpu.memory_space<vmem>>, %arg5: memref<1x8xf32, #tpu.memory_space<vmem>>, %arg6: memref<256x8xf32, #tpu.memory_space<vmem>>, %arg7: memref<256x8xf32, #tpu.memory_space<vmem>>) attributes {dimension_semantics = [#tpu.dimension_semantics<parallel>], iteration_bounds = array<i64: 2>, scalar_prefetch = 0 : i64, scratch_operands = 1 : i64, tpu.core_type = #tpu.core_type<tc>, window_params = [{transform_indices = @transform_0, window_bounds = array<i64: 1, 18, 18, 4>}, {pipeline_mode = #tpu.pipeline_mode<synchronous>, transform_indices = @transform_1, window_bounds = array<i64: 9, 4, 8>}, {pipeline_mode = #tpu.pipeline_mode<synchronous>, transform_indices = @transform_2, window_bounds = array<i64: 9, 4, 8>}, {pipeline_mode = #tpu.pipeline_mode<synchronous>, transform_indices = @transform_3, window_bounds = array<i64: 1, 8>}, {pipeline_mode = #tpu.pipeline_mode<synchronous>, transform_indices = @transform_4, window_bounds = array<i64: 1, 8>}, {transform_indices = @transform_5, window_bounds = array<i64: 256, 8>}]} {
    %cst = arith.constant 0.000000e+00 : f32
    %0 = vector.broadcast %cst : f32 to vector<256x8xf32>
    %c0 = arith.constant 0 : index
    %c0_0 = arith.constant 0 : index
    %1 = vector.load %arg7[%c0, %c0_0] : memref<256x8xf32, #tpu.memory_space<vmem>>, vector<256x8xf32>
    tpu.vector_store %arg7[%c0, %c0_0], %0 {strides = array<i32>} : memref<256x8xf32, #tpu.memory_space<vmem>>, vector<256x8xf32>,
    %c0_1 = arith.constant 0 : index
    %c0_2 = arith.constant 0 : index
    %c0_3 = arith.constant 0 : index
    %2 = vector.load %arg2[%c0_1, %c0_2, %c0_3] : memref<9x4x8xf32, #tpu.memory_space<vmem>>, vector<9x4x8xf32>
    %c0_4 = arith.constant 0 : index
    %c0_5 = arith.constant 0 : index
    %c0_6 = arith.constant 0 : index
    %3 = vector.load %arg3[%c0_4, %c0_5, %c0_6] : memref<9x4x8xf32, #tpu.memory_space<vmem>>, vector<9x4x8xf32>
    %4 = arith.addf %2, %3 : vector<9x4x8xf32>
    %c0_7 = arith.constant 0 : index
    %c0_8 = arith.constant 0 : index
    %c0_9 = arith.constant 0 : index
    %c0_10 = arith.constant 0 : index
    %5 = vector.load %arg1[%c0_7, %c0_8, %c0_9, %c0_10] : memref<1x18x18x4xf32, #tpu.memory_space<vmem>>, vector<1x16x16x4xf32>
    %6 = vector.shape_cast %5 : vector<1x16x16x4xf32> to vector<16x16x4xf32>
    %7 = vector.shape_cast %6 : vector<16x16x4xf32> to vector<256x4xf32>
    %c0_11 = arith.constant 0 : index
    %c0_12 = arith.constant 0 : index
    %8 = vector.load %arg7[%c0_11, %c0_12] : memref<256x8xf32, #tpu.memory_space<vmem>>, vector<256x8xf32>
    %9 = vector.extract_strided_slice %4 {offsets = [0, 0, 0], sizes = [1, 4, 8], strides = [1, 1, 1]} : vector<9x4x8xf32> to vector<1x4x8xf32>
    %10 = vector.shape_cast %9 : vector<1x4x8xf32> to vector<4x8xf32>
    %cst_13 = arith.constant dense<0.000000e+00> : vector<256x8xf32>
    %11 = tpu.matmul %7, %10, %cst_13 {dimension_numbers = #tpu.dot_dimension_numbers<[1], [0], [0], [1], [0, 0, 1, 1], [], []>} : vector<256x4xf32>, vector<4x8xf32>, vector<256x8xf32> -> vector<256x8xf32>
    %12 = arith.addf %8, %11 : vector<256x8xf32>
    %c0_14 = arith.constant 0 : index
    %c0_15 = arith.constant 0 : index
    %13 = vector.load %arg7[%c0_14, %c0_15] : memref<256x8xf32, #tpu.memory_space<vmem>>, vector<256x8xf32>
    tpu.vector_store %arg7[%c0_14, %c0_15], %12 {strides = array<i32>} : memref<256x8xf32, #tpu.memory_space<vmem>>, vector<256x8xf32>,
    %c0_16 = arith.constant 0 : index
    %c0_17 = arith.constant 0 : index
    %c1 = arith.constant 1 : index
    %c0_18 = arith.constant 0 : index
    %14 = vector.load %arg1[%c0_16, %c0_17, %c1, %c0_18] : memref<1x18x18x4xf32, #tpu.memory_space<vmem>>, vector<1x16x16x4xf32>
    %15 = vector.shape_cast %14 : vector<1x16x16x4xf32> to vector<16x16x4xf32>
    %16 = vector.shape_cast %15 : vector<16x16x4xf32> to vector<256x4xf32>
    %c0_19 = arith.constant 0 : index
    %c0_20 = arith.constant 0 : index
    %17 = vector.load %arg7[%c0_19, %c0_20] : memref<256x8xf32, #tpu.memory_space<vmem>>, vector<256x8xf32>
    %18 = vector.extract_strided_slice %4 {offsets = [1, 0, 0], sizes = [1, 4, 8], strides = [1, 1, 1]} : vector<9x4x8xf32> to vector<1x4x8xf32>
    %19 = vector.shape_cast %18 : vector<1x4x8xf32> to vector<4x8xf32>
    %cst_21 = arith.constant dense<0.000000e+00> : vector<256x8xf32>
    %20 = tpu.matmul %16, %19, %cst_21 {dimension_numbers = #tpu.dot_dimension_numbers<[1], [0], [0], [1], [0, 0, 1, 1], [], []>} : vector<256x4xf32>, vector<4x8xf32>, vector<256x8xf32> -> vector<256x8xf32>
    %21 = arith.addf %17, %20 : vector<256x8xf32>
    %c0_22 = arith.constant 0 : index
    %c0_23 = arith.constant 0 : index
    %22 = vector.load %arg7[%c0_22, %c0_23] : memref<256x8xf32, #tpu.memory_space<vmem>>, vector<256x8xf32>
    tpu.vector_store %arg7[%c0_22, %c0_23], %21 {strides = array<i32>} : memref<256x8xf32, #tpu.memory_space<vmem>>, vector<256x8xf32>,
    %c0_24 = arith.constant 0 : index
    %c0_25 = arith.constant 0 : index
    %c2 = arith.constant 2 : index
    %c0_26 = arith.constant 0 : index
    %23 = vector.load %arg1[%c0_24, %c0_25, %c2, %c0_26] : memref<1x18x18x4xf32, #tpu.memory_space<vmem>>, vector<1x16x16x4xf32>
    %24 = vector.shape_cast %23 : vector<1x16x16x4xf32> to vector<16x16x4xf32>
    %25 = vector.shape_cast %24 : vector<16x16x4xf32> to vector<256x4xf32>
    %c0_27 = arith.constant 0 : index
    %c0_28 = arith.constant 0 : index
    %26 = vector.load %arg7[%c0_27, %c0_28] : memref<256x8xf32, #tpu.memory_space<vmem>>, vector<256x8xf32>
    %27 = vector.extract_strided_slice %4 {offsets = [2, 0, 0], sizes = [1, 4, 8], strides = [1, 1, 1]} : vector<9x4x8xf32> to vector<1x4x8xf32>
    %28 = vector.shape_cast %27 : vector<1x4x8xf32> to vector<4x8xf32>
    %cst_29 = arith.constant dense<0.000000e+00> : vector<256x8xf32>
    %29 = tpu.matmul %25, %28, %cst_29 {dimension_numbers = #tpu.dot_dimension_numbers<[1], [0], [0], [1], [0, 0, 1, 1], [], []>} : vector<256x4xf32>, vector<4x8xf32>, vector<256x8xf32> -> vector<256x8xf32>
    %30 = arith.addf %26, %29 : vector<256x8xf32>
    %c0_30 = arith.constant 0 : index
    %c0_31 = arith.constant 0 : index
    %31 = vector.load %arg7[%c0_30, %c0_31] : memref<256x8xf32, #tpu.memory_space<vmem>>, vector<256x8xf32>
    tpu.vector_store %arg7[%c0_30, %c0_31], %30 {strides = array<i32>} : memref<256x8xf32, #tpu.memory_space<vmem>>, vector<256x8xf32>,
    %c0_32 = arith.constant 0 : index
    %c1_33 = arith.constant 1 : index
    %c0_34 = arith.constant 0 : index
    %c0_35 = arith.constant 0 : index
    %32 = vector.load %arg1[%c0_32, %c1_33, %c0_34, %c0_35] : memref<1x18x18x4xf32, #tpu.memory_space<vmem>>, vector<1x16x16x4xf32>
    %33 = vector.shape_cast %32 : vector<1x16x16x4xf32> to vector<16x16x4xf32>
    %34 = vector.shape_cast %33 : vector<16x16x4xf32> to vector<256x4xf32>
    %c0_36 = arith.constant 0 : index
    %c0_37 = arith.constant 0 : index
    %35 = vector.load %arg7[%c0_36, %c0_37] : memref<256x8xf32, #tpu.memory_space<vmem>>, vector<256x8xf32>
    %36 = vector.extract_strided_slice %4 {offsets = [3, 0, 0], sizes = [1, 4, 8], strides = [1, 1, 1]} : vector<9x4x8xf32> to vector<1x4x8xf32>
    %37 = vector.shape_cast %36 : vector<1x4x8xf32> to vector<4x8xf32>
    %cst_38 = arith.constant dense<0.000000e+00> : vector<256x8xf32>
    %38 = tpu.matmul %34, %37, %cst_38 {dimension_numbers = #tpu.dot_dimension_numbers<[1], [0], [0], [1], [0, 0, 1, 1], [], []>} : vector<256x4xf32>, vector<4x8xf32>, vector<256x8xf32> -> vector<256x8xf32>
    %39 = arith.addf %35, %38 : vector<256x8xf32>
    %c0_39 = arith.constant 0 : index
    %c0_40 = arith.constant 0 : index
    %40 = vector.load %arg7[%c0_39, %c0_40] : memref<256x8xf32, #tpu.memory_space<vmem>>, vector<256x8xf32>
    tpu.vector_store %arg7[%c0_39, %c0_40], %39 {strides = array<i32>} : memref<256x8xf32, #tpu.memory_space<vmem>>, vector<256x8xf32>,
    %c0_41 = arith.constant 0 : index
    %c1_42 = arith.constant 1 : index
    %c1_43 = arith.constant 1 : index
    %c0_44 = arith.constant 0 : index
    %41 = vector.load %arg1[%c0_41, %c1_42, %c1_43, %c0_44] : memref<1x18x18x4xf32, #tpu.memory_space<vmem>>, vector<1x16x16x4xf32>
    %42 = vector.shape_cast %41 : vector<1x16x16x4xf32> to vector<16x16x4xf32>
    %43 = vector.shape_cast %42 : vector<16x16x4xf32> to vector<256x4xf32>
    %c0_45 = arith.constant 0 : index
    %c0_46 = arith.constant 0 : index
    %44 = vector.load %arg7[%c0_45, %c0_46] : memref<256x8xf32, #tpu.memory_space<vmem>>, vector<256x8xf32>
    %45 = vector.extract_strided_slice %4 {offsets = [4, 0, 0], sizes = [1, 4, 8], strides = [1, 1, 1]} : vector<9x4x8xf32> to vector<1x4x8xf32>
    %46 = vector.shape_cast %45 : vector<1x4x8xf32> to vector<4x8xf32>
    %cst_47 = arith.constant dense<0.000000e+00> : vector<256x8xf32>
    %47 = tpu.matmul %43, %46, %cst_47 {dimension_numbers = #tpu.dot_dimension_numbers<[1], [0], [0], [1], [0, 0, 1, 1], [], []>} : vector<256x4xf32>, vector<4x8xf32>, vector<256x8xf32> -> vector<256x8xf32>
    %48 = arith.addf %44, %47 : vector<256x8xf32>
    %c0_48 = arith.constant 0 : index
    %c0_49 = arith.constant 0 : index
    %49 = vector.load %arg7[%c0_48, %c0_49] : memref<256x8xf32, #tpu.memory_space<vmem>>, vector<256x8xf32>
    tpu.vector_store %arg7[%c0_48, %c0_49], %48 {strides = array<i32>} : memref<256x8xf32, #tpu.memory_space<vmem>>, vector<256x8xf32>,
    %c0_50 = arith.constant 0 : index
    %c1_51 = arith.constant 1 : index
    %c2_52 = arith.constant 2 : index
    %c0_53 = arith.constant 0 : index
    %50 = vector.load %arg1[%c0_50, %c1_51, %c2_52, %c0_53] : memref<1x18x18x4xf32, #tpu.memory_space<vmem>>, vector<1x16x16x4xf32>
    %51 = vector.shape_cast %50 : vector<1x16x16x4xf32> to vector<16x16x4xf32>
    %52 = vector.shape_cast %51 : vector<16x16x4xf32> to vector<256x4xf32>
    %c0_54 = arith.constant 0 : index
    %c0_55 = arith.constant 0 : index
    %53 = vector.load %arg7[%c0_54, %c0_55] : memref<256x8xf32, #tpu.memory_space<vmem>>, vector<256x8xf32>
    %54 = vector.extract_strided_slice %4 {offsets = [5, 0, 0], sizes = [1, 4, 8], strides = [1, 1, 1]} : vector<9x4x8xf32> to vector<1x4x8xf32>
    %55 = vector.shape_cast %54 : vector<1x4x8xf32> to vector<4x8xf32>
    %cst_56 = arith.constant dense<0.000000e+00> : vector<256x8xf32>
    %56 = tpu.matmul %52, %55, %cst_56 {dimension_numbers = #tpu.dot_dimension_numbers<[1], [0], [0], [1], [0, 0, 1, 1], [], []>} : vector<256x4xf32>, vector<4x8xf32>, vector<256x8xf32> -> vector<256x8xf32>
    %57 = arith.addf %53, %56 : vector<256x8xf32>
    %c0_57 = arith.constant 0 : index
    %c0_58 = arith.constant 0 : index
    %58 = vector.load %arg7[%c0_57, %c0_58] : memref<256x8xf32, #tpu.memory_space<vmem>>, vector<256x8xf32>
    tpu.vector_store %arg7[%c0_57, %c0_58], %57 {strides = array<i32>} : memref<256x8xf32, #tpu.memory_space<vmem>>, vector<256x8xf32>,
    %c0_59 = arith.constant 0 : index
    %c2_60 = arith.constant 2 : index
    %c0_61 = arith.constant 0 : index
    %c0_62 = arith.constant 0 : index
    %59 = vector.load %arg1[%c0_59, %c2_60, %c0_61, %c0_62] : memref<1x18x18x4xf32, #tpu.memory_space<vmem>>, vector<1x16x16x4xf32>
    %60 = vector.shape_cast %59 : vector<1x16x16x4xf32> to vector<16x16x4xf32>
    %61 = vector.shape_cast %60 : vector<16x16x4xf32> to vector<256x4xf32>
    %c0_63 = arith.constant 0 : index
    %c0_64 = arith.constant 0 : index
    %62 = vector.load %arg7[%c0_63, %c0_64] : memref<256x8xf32, #tpu.memory_space<vmem>>, vector<256x8xf32>
    %63 = vector.extract_strided_slice %4 {offsets = [6, 0, 0], sizes = [1, 4, 8], strides = [1, 1, 1]} : vector<9x4x8xf32> to vector<1x4x8xf32>
    %64 = vector.shape_cast %63 : vector<1x4x8xf32> to vector<4x8xf32>
    %cst_65 = arith.constant dense<0.000000e+00> : vector<256x8xf32>
    %65 = tpu.matmul %61, %64, %cst_65 {dimension_numbers = #tpu.dot_dimension_numbers<[1], [0], [0], [1], [0, 0, 1, 1], [], []>} : vector<256x4xf32>, vector<4x8xf32>, vector<256x8xf32> -> vector<256x8xf32>
    %66 = arith.addf %62, %65 : vector<256x8xf32>
    %c0_66 = arith.constant 0 : index
    %c0_67 = arith.constant 0 : index
    %67 = vector.load %arg7[%c0_66, %c0_67] : memref<256x8xf32, #tpu.memory_space<vmem>>, vector<256x8xf32>
    tpu.vector_store %arg7[%c0_66, %c0_67], %66 {strides = array<i32>} : memref<256x8xf32, #tpu.memory_space<vmem>>, vector<256x8xf32>,
    %c0_68 = arith.constant 0 : index
    %c2_69 = arith.constant 2 : index
    %c1_70 = arith.constant 1 : index
    %c0_71 = arith.constant 0 : index
    %68 = vector.load %arg1[%c0_68, %c2_69, %c1_70, %c0_71] : memref<1x18x18x4xf32, #tpu.memory_space<vmem>>, vector<1x16x16x4xf32>
    %69 = vector.shape_cast %68 : vector<1x16x16x4xf32> to vector<16x16x4xf32>
    %70 = vector.shape_cast %69 : vector<16x16x4xf32> to vector<256x4xf32>
    %c0_72 = arith.constant 0 : index
    %c0_73 = arith.constant 0 : index
    %71 = vector.load %arg7[%c0_72, %c0_73] : memref<256x8xf32, #tpu.memory_space<vmem>>, vector<256x8xf32>
    %72 = vector.extract_strided_slice %4 {offsets = [7, 0, 0], sizes = [1, 4, 8], strides = [1, 1, 1]} : vector<9x4x8xf32> to vector<1x4x8xf32>
    %73 = vector.shape_cast %72 : vector<1x4x8xf32> to vector<4x8xf32>
    %cst_74 = arith.constant dense<0.000000e+00> : vector<256x8xf32>
    %74 = tpu.matmul %70, %73, %cst_74 {dimension_numbers = #tpu.dot_dimension_numbers<[1], [0], [0], [1], [0, 0, 1, 1], [], []>} : vector<256x4xf32>, vector<4x8xf32>, vector<256x8xf32> -> vector<256x8xf32>
    %75 = arith.addf %71, %74 : vector<256x8xf32>
    %c0_75 = arith.constant 0 : index
    %c0_76 = arith.constant 0 : index
    %76 = vector.load %arg7[%c0_75, %c0_76] : memref<256x8xf32, #tpu.memory_space<vmem>>, vector<256x8xf32>
    tpu.vector_store %arg7[%c0_75, %c0_76], %75 {strides = array<i32>} : memref<256x8xf32, #tpu.memory_space<vmem>>, vector<256x8xf32>,
    %c0_77 = arith.constant 0 : index
    %c2_78 = arith.constant 2 : index
    %c2_79 = arith.constant 2 : index
    %c0_80 = arith.constant 0 : index
    %77 = vector.load %arg1[%c0_77, %c2_78, %c2_79, %c0_80] : memref<1x18x18x4xf32, #tpu.memory_space<vmem>>, vector<1x16x16x4xf32>
    %78 = vector.shape_cast %77 : vector<1x16x16x4xf32> to vector<16x16x4xf32>
    %79 = vector.shape_cast %78 : vector<16x16x4xf32> to vector<256x4xf32>
    %c0_81 = arith.constant 0 : index
    %c0_82 = arith.constant 0 : index
    %80 = vector.load %arg7[%c0_81, %c0_82] : memref<256x8xf32, #tpu.memory_space<vmem>>, vector<256x8xf32>
    %81 = vector.extract_strided_slice %4 {offsets = [8, 0, 0], sizes = [1, 4, 8], strides = [1, 1, 1]} : vector<9x4x8xf32> to vector<1x4x8xf32>
    %82 = vector.shape_cast %81 : vector<1x4x8xf32> to vector<4x8xf32>
    %cst_83 = arith.constant dense<0.000000e+00> : vector<256x8xf32>
    %83 = tpu.matmul %79, %82, %cst_83 {dimension_numbers = #tpu.dot_dimension_numbers<[1], [0], [0], [1], [0, 0, 1, 1], [], []>} : vector<256x4xf32>, vector<4x8xf32>, vector<256x8xf32> -> vector<256x8xf32>
    %84 = arith.addf %80, %83 : vector<256x8xf32>
    %c0_84 = arith.constant 0 : index
    %c0_85 = arith.constant 0 : index
    %85 = vector.load %arg7[%c0_84, %c0_85] : memref<256x8xf32, #tpu.memory_space<vmem>>, vector<256x8xf32>
    tpu.vector_store %arg7[%c0_84, %c0_85], %84 {strides = array<i32>} : memref<256x8xf32, #tpu.memory_space<vmem>>, vector<256x8xf32>,
    %c0_86 = arith.constant 0 : index
    %c0_87 = arith.constant 0 : index
    %86 = vector.load %arg4[%c0_86, %c0_87] : memref<1x8xf32, #tpu.memory_space<vmem>>, vector<1x8xf32>
    %c0_88 = arith.constant 0 : index
    %c0_89 = arith.constant 0 : index
    %87 = vector.load %arg5[%c0_88, %c0_89] : memref<1x8xf32, #tpu.memory_space<vmem>>, vector<1x8xf32>
    %88 = arith.addf %86, %87 : vector<1x8xf32>
    %c0_90 = arith.constant 0 : index
    %c0_91 = arith.constant 0 : index
    %89 = vector.load %arg7[%c0_90, %c0_91] : memref<256x8xf32, #tpu.memory_space<vmem>>, vector<256x8xf32>
    %90 = vector.broadcast %88 : vector<1x8xf32> to vector<256x8xf32>
    %91 = arith.addf %89, %90 : vector<256x8xf32>
    %c0_92 = arith.constant 0 : index
    %c0_93 = arith.constant 0 : index
    %92 = vector.load %arg6[%c0_92, %c0_93] : memref<256x8xf32, #tpu.memory_space<vmem>>, vector<256x8xf32>
    tpu.vector_store %arg6[%c0_92, %c0_93], %91 {strides = array<i32>} : memref<256x8xf32, #tpu.memory_space<vmem>>, vector<256x8xf32>,
    return
  }
  func.func @transform_0(%arg0: i32) -> (i32, i32, i32, i32) {
    %c0_i32 = arith.constant 0 : i32
    %c0_i32_0 = arith.constant 0 : i32
    %c0_i32_1 = arith.constant 0 : i32
    %c0_i32_2 = arith.constant 0 : i32
    return %arg0, %c0_i32, %c0_i32_0, %c0_i32_1 : i32, i32, i32, i32
  }
  func.func @transform_1(%arg0: i32) -> (i32, i32, i32) {
    %c0_i32 = arith.constant 0 : i32
    %c0_i32_0 = arith.constant 0 : i32
    %c0_i32_1 = arith.constant 0 : i32
    %c0_i32_2 = arith.constant 0 : i32
    return %c0_i32, %c0_i32_0, %c0_i32_1 : i32, i32, i32
  }
  func.func @transform_2(%arg0: i32) -> (i32, i32, i32) {
    %c0_i32 = arith.constant 0 : i32
    %c0_i32_0 = arith.constant 0 : i32
    %c0_i32_1 = arith.constant 0 : i32
    %c0_i32_2 = arith.constant 0 : i32
    return %c0_i32, %c0_i32_0, %c0_i32_1 : i32, i32, i32
  }
  func.func @transform_3(%arg0: i32) -> (i32, i32) {
    %c0_i32 = arith.constant 0 : i32
    %c0_i32_0 = arith.constant 0 : i32
    %c0_i32_1 = arith.constant 0 : i32
    return %c0_i32, %c0_i32_0 : i32, i32
  }
  func.func @transform_4(%arg0: i32) -> (i32, i32) {
    %c0_i32 = arith.constant 0 : i32
    %c0_i32_0 = arith.constant 0 : i32
    %c0_i32_1 = arith.constant 0 : i32
    return %c0_i32, %c0_i32_0 : i32, i32
  }
  func.func @transform_5(%arg0: i32) -> (i32, i32) {
    %c0_i32 = arith.constant 0 : i32
    %c0_i32_0 = arith.constant 0 : i32
    return %arg0, %c0_i32 : i32, i32
  }
}

module attributes {stable_mosaic.version = 11 : i64} {
  func.func @_fused_linear_kernel(%arg0: i32, %arg1: i32, %arg2: i32, %arg3: memref<8x512xf32, #tpu.memory_space<vmem>>, %arg4: memref<128x512xf32, #tpu.memory_space<vmem>>, %arg5: memref<128x512xf32, #tpu.memory_space<vmem>>, %arg6: memref<1x128xf32, #tpu.memory_space<vmem>>, %arg7: memref<1x128xf32, #tpu.memory_space<vmem>>, %arg8: memref<8x128xf32, #tpu.memory_space<vmem>>, %arg9: memref<8x128xf32, #tpu.memory_space<vmem>>) attributes {dimension_semantics = [#tpu.dimension_semantics<parallel>, #tpu.dimension_semantics<parallel>, #tpu.dimension_semantics<arbitrary>], iteration_bounds = array<i64: 1, 1, 4>, scalar_prefetch = 0 : i64, scratch_operands = 1 : i64, tpu.core_type = #tpu.core_type<tc>, window_params = [{transform_indices = @transform_0, window_bounds = array<i64: 8, 512>}, {transform_indices = @transform_1, window_bounds = array<i64: 128, 512>}, {transform_indices = @transform_2, window_bounds = array<i64: 128, 512>}, {transform_indices = @transform_3, window_bounds = array<i64: 1, 128>}, {transform_indices = @transform_4, window_bounds = array<i64: 1, 128>}, {transform_indices = @transform_5, window_bounds = array<i64: 8, 128>}]} {
    %c0_i32 = arith.constant 0 : i32
    %0 = arith.cmpi eq, %arg2, %c0_i32 : i32
    %1 = arith.extui %0 : i1 to i32
    %c0_i32_0 = arith.constant 0 : i32
    %2 = arith.cmpi ne, %1, %c0_i32_0 : i32
    scf.if %2 {
      %cst_11 = arith.constant 0.000000e+00 : f32
      %14 = vector.broadcast %cst_11 : f32 to vector<8x128xf32>
      %c0_12 = arith.constant 0 : index
      %c0_13 = arith.constant 0 : index
      %15 = vector.load %arg9[%c0_12, %c0_13] : memref<8x128xf32, #tpu.memory_space<vmem>>, vector<8x128xf32>
      tpu.vector_store %arg9[%c0_12, %c0_13], %14 {strides = array<i32>} : memref<8x128xf32, #tpu.memory_space<vmem>>, vector<8x128xf32>,
    } else {
    }
    %c0 = arith.constant 0 : index
    %c0_1 = arith.constant 0 : index
    %3 = vector.load %arg4[%c0, %c0_1] : memref<128x512xf32, #tpu.memory_space<vmem>>, vector<128x512xf32>
    %c0_2 = arith.constant 0 : index
    %c0_3 = arith.constant 0 : index
    %4 = vector.load %arg5[%c0_2, %c0_3] : memref<128x512xf32, #tpu.memory_space<vmem>>, vector<128x512xf32>
    %5 = arith.addf %3, %4 : vector<128x512xf32>
    %c0_4 = arith.constant 0 : index
    %c0_5 = arith.constant 0 : index
    %6 = vector.load %arg9[%c0_4, %c0_5] : memref<8x128xf32, #tpu.memory_space<vmem>>, vector<8x128xf32>
    %c0_6 = arith.constant 0 : index
    %c0_7 = arith.constant 0 : index
    %7 = vector.load %arg3[%c0_6, %c0_7] : memref<8x512xf32, #tpu.memory_space<vmem>>, vector<8x512xf32>
    %cst = arith.constant dense<0.000000e+00> : vector<8x128xf32>
    %8 = tpu.matmul %7, %5, %cst {dimension_numbers = #tpu.dot_dimension_numbers<[1], [1], [0], [0], [0, 0, 1, 0], [], []>} : vector<8x512xf32>, vector<128x512xf32>, vector<8x128xf32> -> vector<8x128xf32>
    %9 = arith.addf %6, %8 : vector<8x128xf32>
    %c0_8 = arith.constant 0 : index
    %c0_9 = arith.constant 0 : index
    %10 = vector.load %arg9[%c0_8, %c0_9] : memref<8x128xf32, #tpu.memory_space<vmem>>, vector<8x128xf32>
    tpu.vector_store %arg9[%c0_8, %c0_9], %9 {strides = array<i32>} : memref<8x128xf32, #tpu.memory_space<vmem>>, vector<8x128xf32>,
    %c3_i32 = arith.constant 3 : i32
    %11 = arith.cmpi eq, %arg2, %c3_i32 : i32
    %12 = arith.extui %11 : i1 to i32
    %c0_i32_10 = arith.constant 0 : i32
    %13 = arith.cmpi ne, %12, %c0_i32_10 : i32
    scf.if %13 {
      %c0_11 = arith.constant 0 : index
      %c0_12 = arith.constant 0 : index
      %14 = vector.load %arg6[%c0_11, %c0_12] : memref<1x128xf32, #tpu.memory_space<vmem>>, vector<1x128xf32>
      %c0_13 = arith.constant 0 : index
      %c0_14 = arith.constant 0 : index
      %15 = vector.load %arg7[%c0_13, %c0_14] : memref<1x128xf32, #tpu.memory_space<vmem>>, vector<1x128xf32>
      %16 = arith.addf %14, %15 : vector<1x128xf32>
      %c0_15 = arith.constant 0 : index
      %c0_16 = arith.constant 0 : index
      %17 = vector.load %arg9[%c0_15, %c0_16] : memref<8x128xf32, #tpu.memory_space<vmem>>, vector<8x128xf32>
      %18 = vector.broadcast %16 : vector<1x128xf32> to vector<8x128xf32>
      %19 = arith.addf %17, %18 : vector<8x128xf32>
      %c0_17 = arith.constant 0 : index
      %c0_18 = arith.constant 0 : index
      %20 = vector.load %arg8[%c0_17, %c0_18] : memref<8x128xf32, #tpu.memory_space<vmem>>, vector<8x128xf32>
      tpu.vector_store %arg8[%c0_17, %c0_18], %19 {strides = array<i32>} : memref<8x128xf32, #tpu.memory_space<vmem>>, vector<8x128xf32>,
    } else {
    }
    return
  }
  func.func @transform_0(%arg0: i32, %arg1: i32, %arg2: i32) -> (i32, i32) {
    %c0_i32 = arith.constant 0 : i32
    return %arg0, %arg2 : i32, i32
  }
  func.func @transform_1(%arg0: i32, %arg1: i32, %arg2: i32) -> (i32, i32) {
    %c0_i32 = arith.constant 0 : i32
    return %arg1, %arg2 : i32, i32
  }
  func.func @transform_2(%arg0: i32, %arg1: i32, %arg2: i32) -> (i32, i32) {
    %c0_i32 = arith.constant 0 : i32
    return %arg1, %arg2 : i32, i32
  }
  func.func @transform_3(%arg0: i32, %arg1: i32, %arg2: i32) -> (i32, i32) {
    %c0_i32 = arith.constant 0 : i32
    %c0_i32_0 = arith.constant 0 : i32
    return %c0_i32, %arg1 : i32, i32
  }
  func.func @transform_4(%arg0: i32, %arg1: i32, %arg2: i32) -> (i32, i32) {
    %c0_i32 = arith.constant 0 : i32
    %c0_i32_0 = arith.constant 0 : i32
    return %c0_i32, %arg1 : i32, i32
  }
  func.func @transform_5(%arg0: i32, %arg1: i32, %arg2: i32) -> (i32, i32) {
    %c0_i32 = arith.constant 0 : i32
    return %arg0, %arg1 : i32, i32
  }
}

</mosaic_0001>

<llo_original>
// kernel: model_forward.3
$region0: #{model_forward.3}
  #allocation0 [shape = 'u32[]', space=smem, size = 0x4, offset = 0x4, fixed_abs, tag = 'smem constant byte address 0x4 - core index']
  #allocation1 [shape = 'u32[144,128]{1,0:T(1,128)}', space=vmem, size = 0x12000, scoped, tag = 'internal scratch']
  #allocation2 [shape = 'f32[8,128]{1,0:T(8,128)}', space=vmem, size = 0x1000, scoped, tag = 'scratch operand']
  %s0 = inlined_call_operand.vmem [shape: f32[8,2048], index: 0, kind: input, shape index: {}]
  %s1 = inlined_call_operand.vmem [shape: f32[128,2048], index: 1, kind: input, shape index: {}]
  %s2 = inlined_call_operand.vmem [shape: f32[128,2048], index: 2, kind: input, shape index: {}]
  %s3 = inlined_call_operand.vmem [shape: f32[1,128], index: 3, kind: input, shape index: {}]
  %s4 = inlined_call_operand.vmem [shape: f32[1,128], index: 4, kind: input, shape index: {}]
  %s5 = inlined_call_operand.vmem [shape: f32[8,128], index: 5, kind: output, shape index: {}]
  %s6 = sld [smem:[#allocation0]]
  $region107: #{model_forward.3} parent=0
    _
  %s8 = ssub.s32 1, %s6
  %s9 = scalar_select 0, %s8, %s6
  $region1: #{model_forward.3} parent=0
    #allocation3 [shape = 'u8[524288]{0}', space=vmem, size = 0x80000, scoped, tag = 'input window, operand 1']
    #allocation4 [shape = 'u8[524288]{0}', space=vmem, size = 0x80000, scoped, tag = 'input window, operand 2']
    loop: start=0, step=1, limit=6
    $region2: #{model_forward.3} parent=1 // loop_pre_header
      _
    $region3: #{model_forward.3} parent=1 // loop_header
      %s11 = sphi 0, %s15
      %p12 = scmp.ge.s32.totalorder %s11, 6
      %s18 = sphi 0, %s37
      %s19 = sphi 0, %s33
      %s20 = sphi 0, %s29
      %s21 = sphi 0, %s18
      %s22 = sphi 0, %s19
      %s23 = sphi 0, %s20
      %s24 = sphi 0, %s21
      %s25 = sphi 0, %s22
      %s26 = sphi 0, %s23
      %s42 = sphi 0, %s44
      %s45 = sphi 0, %s42
      %s46 = sphi 0, %s45
      %s62 = sphi 0, %s46
      %s70 = sphi 0, %s72
      %s73 = sphi 0, %s70
      %s74 = sphi 0, %s73
      %s90 = sphi 0, %s74
      %s98 = sphi 0, %s100
      %s101 = sphi 0, %s98
      %s102 = sphi 0, %s101
      %s118 = sphi 0, %s102
      %s124 = sphi 0, %s126
      %s127 = sphi 0, %s124
      %s128 = sphi 0, %s127
      %s144 = sphi 0, %s128
      %s150 = sphi 0, %s152
      %s153 = sphi 0, %s150
      %s154 = sphi 0, %s153
      %s170 = sphi 0, %s154
      %s178 = sphi 0, %s180
      %s181 = sphi 0, %s178
      %s182 = sphi 0, %s181
      %s198 = sphi 0, %s182
    $region4: #{model_forward.3} parent=1 // loop_header_branch
      %14 = sbr.rel (%p12) target = $region8
    $region5: #{model_forward.3} parent=1 // loop_body
      %s16 = ssub.s32 %s11, 1
      %s17 = ssub.s32 %s11, 2
      %s27 = sadd.s32 1, %s20
      %p28 = scmp.ge.s32.totalorder %s27, 4
      %s29 = scalar_select %p28, 0, %s27
      %s30 = sadd.s32 1, %s19
      %s31 = scalar_select %p28, %s30, %s19
      %p32 = scmp.ge.s32.totalorder %s31, 1
      %s33 = scalar_select %p32, 0, %s31
      %s34 = sadd.s32 1, %s18
      %s35 = scalar_select %p32, %s34, %s18
      %p36 = scmp.ge.s32.totalorder %s35, 1
      %s37 = scalar_select %p36, 0, %s35
      %s38 = ssub.s32 %s18, %s37
      %s39 = ssub.s32 %s20, %s29
      %s40 = sor.u32 %s38, %s39
      %p41 = scmp.eq.s32.totalorder %s40, 0
      %s43 = sadd.s32 %s42, 1
      %s44 = scalar_select %p41, %s42, %s43
      %p47 = pneg %p41
      %p48 = scmp.eq.s32.totalorder %s11, 3
      %p49 = por %p47, %p48
      %p50 = scmp.ne.s32.totalorder %s42, %s45
      %p51 = scmp.eq.s32.totalorder %s11, 0
      %p52 = por %p50, %p51
      %p53 = scmp.ne.s32.totalorder %s42, %s45
      %p54 = scmp.eq.s32.totalorder %s16, 3
      %p55 = por %p53, %p54
      %p56 = scmp.ne.s32.totalorder %s45, %s46
      %p57 = scmp.eq.s32.totalorder %s16, 0
      %p58 = por %p56, %p57
      %p59 = scmp.ne.s32.totalorder %s45, %s46
      %p60 = scmp.eq.s32.totalorder %s17, 3
      %p61 = por %p59, %p60
      %p63 = scmp.ne.s32.totalorder %s46, %s62
      %p64 = scmp.eq.s32.totalorder %s17, 0
      %p65 = por %p63, %p64
      %s66 = ssub.s32 %s19, %s33
      %s67 = ssub.s32 %s20, %s29
      %s68 = sor.u32 %s66, %s67
      %p69 = scmp.eq.s32.totalorder %s68, 0
      %s71 = sadd.s32 %s70, 1
      %s72 = scalar_select %p69, %s70, %s71
      %p75 = pneg %p69
      %p76 = scmp.eq.s32.totalorder %s11, 3
      %p77 = por %p75, %p76
      %p78 = scmp.ne.s32.totalorder %s70, %s73
      %p79 = scmp.eq.s32.totalorder %s11, 0
      %p80 = por %p78, %p79
      %p81 = scmp.ne.s32.totalorder %s70, %s73
      %p82 = scmp.eq.s32.totalorder %s16, 3
      %p83 = por %p81, %p82
      %p84 = scmp.ne.s32.totalorder %s73, %s74
      %p85 = scmp.eq.s32.totalorder %s16, 0
      %p86 = por %p84, %p85
      %p87 = scmp.ne.s32.totalorder %s73, %s74
      %p88 = scmp.eq.s32.totalorder %s17, 3
      %p89 = por %p87, %p88
      %p91 = scmp.ne.s32.totalorder %s74, %s90
      %p92 = scmp.eq.s32.totalorder %s17, 0
      %p93 = por %p91, %p92
      %s94 = ssub.s32 %s19, %s33
      %s95 = ssub.s32 %s20, %s29
      %s96 = sor.u32 %s94, %s95
      %p97 = scmp.eq.s32.totalorder %s96, 0
      %s99 = sadd.s32 %s98, 1
      %s100 = scalar_select %p97, %s98, %s99
      %p103 = pneg %p97
      %p104 = scmp.eq.s32.totalorder %s11, 3
      %p105 = por %p103, %p104
      %p106 = scmp.ne.s32.totalorder %s98, %s101
      %p107 = scmp.eq.s32.totalorder %s11, 0
      %p108 = por %p106, %p107
      %p109 = scmp.ne.s32.totalorder %s98, %s101
      %p110 = scmp.eq.s32.totalorder %s16, 3
      %p111 = por %p109, %p110
      %p112 = scmp.ne.s32.totalorder %s101, %s102
      %p113 = scmp.eq.s32.totalorder %s16, 0
      %p114 = por %p112, %p113
      %p115 = scmp.ne.s32.totalorder %s101, %s102
      %p116 = scmp.eq.s32.totalorder %s17, 3
      %p117 = por %p115, %p116
      %p119 = scmp.ne.s32.totalorder %s102, %s118
      %p120 = scmp.eq.s32.totalorder %s17, 0
      %p121 = por %p119, %p120
      %s122 = ssub.s32 %s19, %s33
      %p123 = scmp.eq.s32.totalorder %s122, 0
      %s125 = sadd.s32 %s124, 1
      %s126 = scalar_select %p123, %s124, %s125
      %p129 = pneg %p123
      %p130 = scmp.eq.s32.totalorder %s11, 3
      %p131 = por %p129, %p130
      %p132 = scmp.ne.s32.totalorder %s124, %s127
      %p133 = scmp.eq.s32.totalorder %s11, 0
      %p134 = por %p132, %p133
      %p135 = scmp.ne.s32.totalorder %s124, %s127
      %p136 = scmp.eq.s32.totalorder %s16, 3
      %p137 = por %p135, %p136
      %p138 = scmp.ne.s32.totalorder %s127, %s128
      %p139 = scmp.eq.s32.totalorder %s16, 0
      %p140 = por %p138, %p139
      %p141 = scmp.ne.s32.totalorder %s127, %s128
      %p142 = scmp.eq.s32.totalorder %s17, 3
      %p143 = por %p141, %p142
      %p145 = scmp.ne.s32.totalorder %s128, %s144
      %p146 = scmp.eq.s32.totalorder %s17, 0
      %p147 = por %p145, %p146
      %s148 = ssub.s32 %s19, %s33
      %p149 = scmp.eq.s32.totalorder %s148, 0
      %s151 = sadd.s32 %s150, 1
      %s152 = scalar_select %p149, %s150, %s151
      %p155 = pneg %p149
      %p156 = scmp.eq.s32.totalorder %s11, 3
      %p157 = por %p155, %p156
      %p158 = scmp.ne.s32.totalorder %s150, %s153
      %p159 = scmp.eq.s32.totalorder %s11, 0
      %p160 = por %p158, %p159
      %p161 = scmp.ne.s32.totalorder %s150, %s153
      %p162 = scmp.eq.s32.totalorder %s16, 3
      %p163 = por %p161, %p162
      %p164 = scmp.ne.s32.totalorder %s153, %s154
      %p165 = scmp.eq.s32.totalorder %s16, 0
      %p166 = por %p164, %p165
      %p167 = scmp.ne.s32.totalorder %s153, %s154
      %p168 = scmp.eq.s32.totalorder %s17, 3
      %p169 = por %p167, %p168
      %p171 = scmp.ne.s32.totalorder %s154, %s170
      %p172 = scmp.eq.s32.totalorder %s17, 0
      %p173 = por %p171, %p172
      %s174 = ssub.s32 %s18, %s37
      %s175 = ssub.s32 %s19, %s33
      %s176 = sor.u32 %s174, %s175
      %p177 = scmp.eq.s32.totalorder %s176, 0
      %s179 = sadd.s32 %s178, 1
      %s180 = scalar_select %p177, %s178, %s179
      %p183 = pneg %p177
      %p184 = scmp.eq.s32.totalorder %s11, 3
      %p185 = por %p183, %p184
      %p186 = scmp.ne.s32.totalorder %s178, %s181
      %p187 = scmp.eq.s32.totalorder %s11, 0
      %p188 = por %p186, %p187
      %p189 = scmp.ne.s32.totalorder %s178, %s181
      %p190 = scmp.eq.s32.totalorder %s16, 3
      %p191 = por %p189, %p190
      %p192 = scmp.ne.s32.totalorder %s181, %s182
      %p193 = scmp.eq.s32.totalorder %s16, 0
      %p194 = por %p192, %p193
      %p195 = scmp.ne.s32.totalorder %s181, %s182
      %p196 = scmp.eq.s32.totalorder %s17, 3
      %p197 = por %p195, %p196
      %p199 = scmp.ne.s32.totalorder %s182, %s198
      %p200 = scmp.eq.s32.totalorder %s17, 0
      %p201 = por %p199, %p200
      %p202 = scmp.le.s32.totalorder 1, %s11
      %p203 = scmp.lt.s32.totalorder %s11, 5
      %p204 = pnand %p202, %p203
      %p205 = pneg %p204
      // Predicated region
      $region9: #{model_forward.3} parent=5 // pred_check
        _
      $region10: #{model_forward.3} parent=5 // pred_check_branch
        %207 = sbr.rel (%p204) target = $region12
      $region11: #{model_forward.3} parent=5 // pred_region
        %s208 = ssub.s32 %s11, 1
        // Predicated region
        $region13: #{model_forward.3} parent=11 // pred_check
          %p209 = pneg %p140
        $region14: #{model_forward.3} parent=11 // pred_check_branch
          %211 = sbr.rel (%p209) target = $region16
        $region15: #{model_forward.3} parent=11 // pred_region
          %p212 = scmp.lt.s32.totalorder %s22, 0
          %s213 = scalar_select %p212, %s22, 0
          %s214 = scalar_lea.vmem %s3, %s213
        $region16: #{model_forward.3} parent=11 // pred_fallthru
          _
        // Predicated region
        $region17: #{model_forward.3} parent=11 // pred_check
          %p215 = pneg %p166
        $region18: #{model_forward.3} parent=11 // pred_check_branch
          %217 = sbr.rel (%p215) target = $region20
        $region19: #{model_forward.3} parent=11 // pred_region
          %p218 = scmp.lt.s32.totalorder %s22, 0
          %s219 = scalar_select %p218, %s22, 0
          %s220 = scalar_lea.vmem %s4, %s219
        $region20: #{model_forward.3} parent=11 // pred_fallthru
          _
      $region12: #{model_forward.3} parent=5 // pred_fallthru
        _
      %p221 = scmp.lt.s32.totalorder %s11, 4
      // Predicated region
      $region21: #{model_forward.3} parent=5 // pred_check
        %p222 = pneg %p221
      $region22: #{model_forward.3} parent=5 // pred_check_branch
        %224 = sbr.rel (%p222) target = $region24
      $region23: #{model_forward.3} parent=5 // pred_region
        // Predicated region
        $region25: #{model_forward.3} parent=23 // pred_check
          %p225 = pneg %p52
        $region26: #{model_forward.3} parent=23 // pred_check_branch
          %227 = sbr.rel (%p225) target = $region28
        $region27: #{model_forward.3} parent=23 // pred_region
          %s228 = smul.u32 4, %s20
          %p229 = scmp.lt.s32.totalorder %s18, 0
          %s230 = scalar_select %p229, %s18, 0
          %p231 = scmp.lt.s32.totalorder %s228, 15
          %s232 = scalar_select %p231, %s228, 15
          %s233 = smul.addr %s230, 16
          %s234 = sadd.s32 %s232, %s233
          %s235 = smul.addr %s234, 8
          %s236 = scalar_lea.vmem %s0, %s235
          %s237 = smul.u32 4, %s20
        $region28: #{model_forward.3} parent=23 // pred_fallthru
          _
        // Predicated region
        $region29: #{model_forward.3} parent=23 // pred_check
          %p238 = pneg %p80
        $region30: #{model_forward.3} parent=23 // pred_check_branch
          %240 = sbr.rel (%p238) target = $region32
        $region31: #{model_forward.3} parent=23 // pred_region
          %s241 = sand.u32 %s70, 1
          %s242 = sand.u32 %s70, 1
          %s243 = smul.addr %s242, 512
          %s244 = scalar_lea.vmem [#allocation3], %s243
          %s245 = smul.u32 16, %s19
          %s246 = smul.u32 4, %s20
          %s247 = smul.addr %s245, 16
          %s248 = sadd.s32 %s246, %s247
          %s249 = smul.addr %s248, 8
          %s250 = scalar_lea.vmem %s1, %s249
          // Predicated region
          $region33: #{model_forward.3} parent=31 // pred_check
            _
          $region34: #{model_forward.3} parent=31 // pred_check_branch
            %252 = sbr.rel (0) target = $region36
          $region35: #{model_forward.3} parent=31 // pred_region
            // Predicated region
            $region37: #{model_forward.3} parent=35 // pred_check
              _
            $region38: #{model_forward.3} parent=35 // pred_check_branch
              %254 = sbr.rel (0) target = $region40
            $region39: #{model_forward.3} parent=35 // pred_region
              loop: start=0, step=1, limit=1
              $region41: #{model_forward.3} parent=39 // loop_pre_header
                _
              $region42: #{model_forward.3} parent=39 // loop_header
                %s256 = sphi 0, %s260
                %p257 = scmp.ge.s32.totalorder %s256, 1
                %s261 = sphi %s250, %s250
                %s262 = sphi %s244, %s244
              $region43: #{model_forward.3} parent=39 // loop_header_branch
                %259 = sbr.rel (%p257) target = $region47
              $region44: #{model_forward.3} parent=39 // loop_body
                %v263 = vld [vmem:[%s261] sm:$0xff]
                %264 = vst [vmem:[%s262] sm:$0xff] %v263
                %v265 = vld [vmem:[%s261 + $0x8] sm:$0xff]
                %266 = vst [vmem:[%s262 + $0x8] sm:$0xff] %v265
                %v267 = vld [vmem:[%s261 + $0x10] sm:$0xff]
                %268 = vst [vmem:[%s262 + $0x10] sm:$0xff] %v267
                %v269 = vld [vmem:[%s261 + $0x18] sm:$0xff]
                %270 = vst [vmem:[%s262 + $0x18] sm:$0xff] %v269
                %v271 = vld [vmem:[%s261 + $0x80] sm:$0xff]
                %272 = vst [vmem:[%s262 + $0x20] sm:$0xff] %v271
                %v273 = vld [vmem:[%s261 + $0x88] sm:$0xff]
                %274 = vst [vmem:[%s262 + $0x28] sm:$0xff] %v273
                %v275 = vld [vmem:[%s261 + $0x90] sm:$0xff]
                %276 = vst [vmem:[%s262 + $0x30] sm:$0xff] %v275
                %v277 = vld [vmem:[%s261 + $0x98] sm:$0xff]
                %278 = vst [vmem:[%s262 + $0x38] sm:$0xff] %v277
                %v279 = vld [vmem:[%s261 + $0x100] sm:$0xff]
                %280 = vst [vmem:[%s262 + $0x40] sm:$0xff] %v279
                %v281 = vld [vmem:[%s261 + $0x108] sm:$0xff]
                %282 = vst [vmem:[%s262 + $0x48] sm:$0xff] %v281
                %v283 = vld [vmem:[%s261 + $0x110] sm:$0xff]
                %284 = vst [vmem:[%s262 + $0x50] sm:$0xff] %v283
                %v285 = vld [vmem:[%s261 + $0x118] sm:$0xff]
                %286 = vst [vmem:[%s262 + $0x58] sm:$0xff] %v285
                %v287 = vld [vmem:[%s261 + $0x180] sm:$0xff]
                %288 = vst [vmem:[%s262 + $0x60] sm:$0xff] %v287
                %v289 = vld [vmem:[%s261 + $0x188] sm:$0xff]
                %290 = vst [vmem:[%s262 + $0x68] sm:$0xff] %v289
                %v291 = vld [vmem:[%s261 + $0x190] sm:$0xff]
                %292 = vst [vmem:[%s262 + $0x70] sm:$0xff] %v291
                %v293 = vld [vmem:[%s261 + $0x198] sm:$0xff]
                %294 = vst [vmem:[%s262 + $0x78] sm:$0xff] %v293
                %v295 = vld [vmem:[%s261 + $0x200] sm:$0xff]
                %296 = vst [vmem:[%s262 + $0x80] sm:$0xff] %v295
                %v297 = vld [vmem:[%s261 + $0x208] sm:$0xff]
                %298 = vst [vmem:[%s262 + $0x88] sm:$0xff] %v297
                %v299 = vld [vmem:[%s261 + $0x210] sm:$0xff]
                %300 = vst [vmem:[%s262 + $0x90] sm:$0xff] %v299
                %v301 = vld [vmem:[%s261 + $0x218] sm:$0xff]
                %302 = vst [vmem:[%s262 + $0x98] sm:$0xff] %v301
                %v303 = vld [vmem:[%s261 + $0x280] sm:$0xff]
                %304 = vst [vmem:[%s262 + $0xa0] sm:$0xff] %v303
                %v305 = vld [vmem:[%s261 + $0x288] sm:$0xff]
                %306 = vst [vmem:[%s262 + $0xa8] sm:$0xff] %v305
                %v307 = vld [vmem:[%s261 + $0x290] sm:$0xff]
                %308 = vst [vmem:[%s262 + $0xb0] sm:$0xff] %v307
                %v309 = vld [vmem:[%s261 + $0x298] sm:$0xff]
                %310 = vst [vmem:[%s262 + $0xb8] sm:$0xff] %v309
                %v311 = vld [vmem:[%s261 + $0x300] sm:$0xff]
                %312 = vst [vmem:[%s262 + $0xc0] sm:$0xff] %v311
                %v313 = vld [vmem:[%s261 + $0x308] sm:$0xff]
                %314 = vst [vmem:[%s262 + $0xc8] sm:$0xff] %v313
                %v315 = vld [vmem:[%s261 + $0x310] sm:$0xff]
                %316 = vst [vmem:[%s262 + $0xd0] sm:$0xff] %v315
                %v317 = vld [vmem:[%s261 + $0x318] sm:$0xff]
                %318 = vst [vmem:[%s262 + $0xd8] sm:$0xff] %v317
                %v319 = vld [vmem:[%s261 + $0x380] sm:$0xff]
                %320 = vst [vmem:[%s262 + $0xe0] sm:$0xff] %v319
                %v321 = vld [vmem:[%s261 + $0x388] sm:$0xff]
                %322 = vst [vmem:[%s262 + $0xe8] sm:$0xff] %v321
                %v323 = vld [vmem:[%s261 + $0x390] sm:$0xff]
                %324 = vst [vmem:[%s262 + $0xf0] sm:$0xff] %v323
                %v325 = vld [vmem:[%s261 + $0x398] sm:$0xff]
                %326 = vst [vmem:[%s262 + $0xf8] sm:$0xff] %v325
                %v327 = vld [vmem:[%s261 + $0x400] sm:$0xff]
                %328 = vst [vmem:[%s262 + $0x100] sm:$0xff] %v327
                %v329 = vld [vmem:[%s261 + $0x408] sm:$0xff]
                %330 = vst [vmem:[%s262 + $0x108] sm:$0xff] %v329
                %v331 = vld [vmem:[%s261 + $0x410] sm:$0xff]
                %332 = vst [vmem:[%s262 + $0x110] sm:$0xff] %v331
                %v333 = vld [vmem:[%s261 + $0x418] sm:$0xff]
                %334 = vst [vmem:[%s262 + $0x118] sm:$0xff] %v333
                %v335 = vld [vmem:[%s261 + $0x480] sm:$0xff]
                %336 = vst [vmem:[%s262 + $0x120] sm:$0xff] %v335
                %v337 = vld [vmem:[%s261 + $0x488] sm:$0xff]
                %338 = vst [vmem:[%s262 + $0x128] sm:$0xff] %v337
                %v339 = vld [vmem:[%s261 + $0x490] sm:$0xff]
                %340 = vst [vmem:[%s262 + $0x130] sm:$0xff] %v339
                %v341 = vld [vmem:[%s261 + $0x498] sm:$0xff]
                %342 = vst [vmem:[%s262 + $0x138] sm:$0xff] %v341
                %v343 = vld [vmem:[%s261 + $0x500] sm:$0xff]
                %344 = vst [vmem:[%s262 + $0x140] sm:$0xff] %v343
                %v345 = vld [vmem:[%s261 + $0x508] sm:$0xff]
                %346 = vst [vmem:[%s262 + $0x148] sm:$0xff] %v345
                %v347 = vld [vmem:[%s261 + $0x510] sm:$0xff]
                %348 = vst [vmem:[%s262 + $0x150] sm:$0xff] %v347
                %v349 = vld [vmem:[%s261 + $0x518] sm:$0xff]
                %350 = vst [vmem:[%s262 + $0x158] sm:$0xff] %v349
                %v351 = vld [vmem:[%s261 + $0x580] sm:$0xff]
                %352 = vst [vmem:[%s262 + $0x160] sm:$0xff] %v351
                %v353 = vld [vmem:[%s261 + $0x588] sm:$0xff]
                %354 = vst [vmem:[%s262 + $0x168] sm:$0xff] %v353
                %v355 = vld [vmem:[%s261 + $0x590] sm:$0xff]
                %356 = vst [vmem:[%s262 + $0x170] sm:$0xff] %v355
                %v357 = vld [vmem:[%s261 + $0x598] sm:$0xff]
                %358 = vst [vmem:[%s262 + $0x178] sm:$0xff] %v357
                %v359 = vld [vmem:[%s261 + $0x600] sm:$0xff]
                %360 = vst [vmem:[%s262 + $0x180] sm:$0xff] %v359
                %v361 = vld [vmem:[%s261 + $0x608] sm:$0xff]
                %362 = vst [vmem:[%s262 + $0x188] sm:$0xff] %v361
                %v363 = vld [vmem:[%s261 + $0x610] sm:$0xff]
                %364 = vst [vmem:[%s262 + $0x190] sm:$0xff] %v363
                %v365 = vld [vmem:[%s261 + $0x618] sm:$0xff]
                %366 = vst [vmem:[%s262 + $0x198] sm:$0xff] %v365
                %v367 = vld [vmem:[%s261 + $0x680] sm:$0xff]
                %368 = vst [vmem:[%s262 + $0x1a0] sm:$0xff] %v367
                %v369 = vld [vmem:[%s261 + $0x688] sm:$0xff]
                %370 = vst [vmem:[%s262 + $0x1a8] sm:$0xff] %v369
                %v371 = vld [vmem:[%s261 + $0x690] sm:$0xff]
                %372 = vst [vmem:[%s262 + $0x1b0] sm:$0xff] %v371
                %v373 = vld [vmem:[%s261 + $0x698] sm:$0xff]
                %374 = vst [vmem:[%s262 + $0x1b8] sm:$0xff] %v373
                %v375 = vld [vmem:[%s261 + $0x700] sm:$0xff]
                %376 = vst [vmem:[%s262 + $0x1c0] sm:$0xff] %v375
                %v377 = vld [vmem:[%s261 + $0x708] sm:$0xff]
                %378 = vst [vmem:[%s262 + $0x1c8] sm:$0xff] %v377
                %v379 = vld [vmem:[%s261 + $0x710] sm:$0xff]
                %380 = vst [vmem:[%s262 + $0x1d0] sm:$0xff] %v379
                %v381 = vld [vmem:[%s261 + $0x718] sm:$0xff]
                %382 = vst [vmem:[%s262 + $0x1d8] sm:$0xff] %v381
                %v383 = vld [vmem:[%s261 + $0x780] sm:$0xff]
                %384 = vst [vmem:[%s262 + $0x1e0] sm:$0xff] %v383
                %v385 = vld [vmem:[%s261 + $0x788] sm:$0xff]
                %386 = vst [vmem:[%s262 + $0x1e8] sm:$0xff] %v385
                %v387 = vld [vmem:[%s261 + $0x790] sm:$0xff]
                %388 = vst [vmem:[%s262 + $0x1f0] sm:$0xff] %v387
                %v389 = vld [vmem:[%s261 + $0x798] sm:$0xff]
                %390 = vst [vmem:[%s262 + $0x1f8] sm:$0xff] %v389
              $region45: #{model_forward.3} parent=39 // loop_footer
                %s260 = sadd.s32 1, %s256
              $region46: #{model_forward.3} parent=39 // loop_footer_branch
                %255 = sbr.rel target = $region42
              $region47: #{model_forward.3} parent=39 // loop_exit
                _
            $region40: #{model_forward.3} parent=35 // pred_fallthru
              _
            // Predicated region
            $region48: #{model_forward.3} parent=35 // pred_check
              _
            $region49: #{model_forward.3} parent=35 // pred_check_branch
              %392 = sbr.rel target = $region51
            $region50: #{model_forward.3} parent=35 // pred_region
              _
            $region51: #{model_forward.3} parent=35 // pred_fallthru
              _
          $region36: #{model_forward.3} parent=31 // pred_fallthru
            _
          %393 = vnop
        $region32: #{model_forward.3} parent=23 // pred_fallthru
          _
        // Predicated region
        $region52: #{model_forward.3} parent=23 // pred_check
          %p394 = pneg %p108
        $region53: #{model_forward.3} parent=23 // pred_check_branch
          %396 = sbr.rel (%p394) target = $region55
        $region54: #{model_forward.3} parent=23 // pred_region
          %s397 = sand.u32 %s98, 1
          %s398 = sand.u32 %s98, 1
          %s399 = smul.addr %s398, 512
          %s400 = scalar_lea.vmem [#allocation4], %s399
          %s401 = smul.u32 16, %s19
          %s402 = smul.u32 4, %s20
          %s403 = smul.addr %s401, 16
          %s404 = sadd.s32 %s402, %s403
          %s405 = smul.addr %s404, 8
          %s406 = scalar_lea.vmem %s2, %s405
          // Predicated region
          $region56: #{model_forward.3} parent=54 // pred_check
            _
          $region57: #{model_forward.3} parent=54 // pred_check_branch
            %408 = sbr.rel (0) target = $region59
          $region58: #{model_forward.3} parent=54 // pred_region
            // Predicated region
            $region60: #{model_forward.3} parent=58 // pred_check
              _
            $region61: #{model_forward.3} parent=58 // pred_check_branch
              %410 = sbr.rel (0) target = $region63
            $region62: #{model_forward.3} parent=58 // pred_region
              loop: start=0, step=1, limit=1
              $region64: #{model_forward.3} parent=62 // loop_pre_header
                _
              $region65: #{model_forward.3} parent=62 // loop_header
                %s412 = sphi 0, %s416
                %p413 = scmp.ge.s32.totalorder %s412, 1
                %s417 = sphi %s406, %s406
                %s418 = sphi %s400, %s400
              $region66: #{model_forward.3} parent=62 // loop_header_branch
                %415 = sbr.rel (%p413) target = $region70
              $region67: #{model_forward.3} parent=62 // loop_body
                %v419 = vld [vmem:[%s417] sm:$0xff]
                %420 = vst [vmem:[%s418] sm:$0xff] %v419
                %v421 = vld [vmem:[%s417 + $0x8] sm:$0xff]
                %422 = vst [vmem:[%s418 + $0x8] sm:$0xff] %v421
                %v423 = vld [vmem:[%s417 + $0x10] sm:$0xff]
                %424 = vst [vmem:[%s418 + $0x10] sm:$0xff] %v423
                %v425 = vld [vmem:[%s417 + $0x18] sm:$0xff]
                %426 = vst [vmem:[%s418 + $0x18] sm:$0xff] %v425
                %v427 = vld [vmem:[%s417 + $0x80] sm:$0xff]
                %428 = vst [vmem:[%s418 + $0x20] sm:$0xff] %v427
                %v429 = vld [vmem:[%s417 + $0x88] sm:$0xff]
                %430 = vst [vmem:[%s418 + $0x28] sm:$0xff] %v429
                %v431 = vld [vmem:[%s417 + $0x90] sm:$0xff]
                %432 = vst [vmem:[%s418 + $0x30] sm:$0xff] %v431
                %v433 = vld [vmem:[%s417 + $0x98] sm:$0xff]
                %434 = vst [vmem:[%s418 + $0x38] sm:$0xff] %v433
                %v435 = vld [vmem:[%s417 + $0x100] sm:$0xff]
                %436 = vst [vmem:[%s418 + $0x40] sm:$0xff] %v435
                %v437 = vld [vmem:[%s417 + $0x108] sm:$0xff]
                %438 = vst [vmem:[%s418 + $0x48] sm:$0xff] %v437
                %v439 = vld [vmem:[%s417 + $0x110] sm:$0xff]
                %440 = vst [vmem:[%s418 + $0x50] sm:$0xff] %v439
                %v441 = vld [vmem:[%s417 + $0x118] sm:$0xff]
                %442 = vst [vmem:[%s418 + $0x58] sm:$0xff] %v441
                %v443 = vld [vmem:[%s417 + $0x180] sm:$0xff]
                %444 = vst [vmem:[%s418 + $0x60] sm:$0xff] %v443
                %v445 = vld [vmem:[%s417 + $0x188] sm:$0xff]
                %446 = vst [vmem:[%s418 + $0x68] sm:$0xff] %v445
                %v447 = vld [vmem:[%s417 + $0x190] sm:$0xff]
                %448 = vst [vmem:[%s418 + $0x70] sm:$0xff] %v447
                %v449 = vld [vmem:[%s417 + $0x198] sm:$0xff]
                %450 = vst [vmem:[%s418 + $0x78] sm:$0xff] %v449
                %v451 = vld [vmem:[%s417 + $0x200] sm:$0xff]
                %452 = vst [vmem:[%s418 + $0x80] sm:$0xff] %v451
                %v453 = vld [vmem:[%s417 + $0x208] sm:$0xff]
                %454 = vst [vmem:[%s418 + $0x88] sm:$0xff] %v453
                %v455 = vld [vmem:[%s417 + $0x210] sm:$0xff]
                %456 = vst [vmem:[%s418 + $0x90] sm:$0xff] %v455
                %v457 = vld [vmem:[%s417 + $0x218] sm:$0xff]
                %458 = vst [vmem:[%s418 + $0x98] sm:$0xff] %v457
                %v459 = vld [vmem:[%s417 + $0x280] sm:$0xff]
                %460 = vst [vmem:[%s418 + $0xa0] sm:$0xff] %v459
                %v461 = vld [vmem:[%s417 + $0x288] sm:$0xff]
                %462 = vst [vmem:[%s418 + $0xa8] sm:$0xff] %v461
                %v463 = vld [vmem:[%s417 + $0x290] sm:$0xff]
                %464 = vst [vmem:[%s418 + $0xb0] sm:$0xff] %v463
                %v465 = vld [vmem:[%s417 + $0x298] sm:$0xff]
                %466 = vst [vmem:[%s418 + $0xb8] sm:$0xff] %v465
                %v467 = vld [vmem:[%s417 + $0x300] sm:$0xff]
                %468 = vst [vmem:[%s418 + $0xc0] sm:$0xff] %v467
                %v469 = vld [vmem:[%s417 + $0x308] sm:$0xff]
                %470 = vst [vmem:[%s418 + $0xc8] sm:$0xff] %v469
                %v471 = vld [vmem:[%s417 + $0x310] sm:$0xff]
                %472 = vst [vmem:[%s418 + $0xd0] sm:$0xff] %v471
                %v473 = vld [vmem:[%s417 + $0x318] sm:$0xff]
                %474 = vst [vmem:[%s418 + $0xd8] sm:$0xff] %v473
                %v475 = vld [vmem:[%s417 + $0x380] sm:$0xff]
                %476 = vst [vmem:[%s418 + $0xe0] sm:$0xff] %v475
                %v477 = vld [vmem:[%s417 + $0x388] sm:$0xff]
                %478 = vst [vmem:[%s418 + $0xe8] sm:$0xff] %v477
                %v479 = vld [vmem:[%s417 + $0x390] sm:$0xff]
                %480 = vst [vmem:[%s418 + $0xf0] sm:$0xff] %v479
                %v481 = vld [vmem:[%s417 + $0x398] sm:$0xff]
                %482 = vst [vmem:[%s418 + $0xf8] sm:$0xff] %v481
                %v483 = vld [vmem:[%s417 + $0x400] sm:$0xff]
                %484 = vst [vmem:[%s418 + $0x100] sm:$0xff] %v483
                %v485 = vld [vmem:[%s417 + $0x408] sm:$0xff]
                %486 = vst [vmem:[%s418 + $0x108] sm:$0xff] %v485
                %v487 = vld [vmem:[%s417 + $0x410] sm:$0xff]
                %488 = vst [vmem:[%s418 + $0x110] sm:$0xff] %v487
                %v489 = vld [vmem:[%s417 + $0x418] sm:$0xff]
                %490 = vst [vmem:[%s418 + $0x118] sm:$0xff] %v489
                %v491 = vld [vmem:[%s417 + $0x480] sm:$0xff]
                %492 = vst [vmem:[%s418 + $0x120] sm:$0xff] %v491
                %v493 = vld [vmem:[%s417 + $0x488] sm:$0xff]
                %494 = vst [vmem:[%s418 + $0x128] sm:$0xff] %v493
                %v495 = vld [vmem:[%s417 + $0x490] sm:$0xff]
                %496 = vst [vmem:[%s418 + $0x130] sm:$0xff] %v495
                %v497 = vld [vmem:[%s417 + $0x498] sm:$0xff]
                %498 = vst [vmem:[%s418 + $0x138] sm:$0xff] %v497
                %v499 = vld [vmem:[%s417 + $0x500] sm:$0xff]
                %500 = vst [vmem:[%s418 + $0x140] sm:$0xff] %v499
                %v501 = vld [vmem:[%s417 + $0x508] sm:$0xff]
                %502 = vst [vmem:[%s418 + $0x148] sm:$0xff] %v501
                %v503 = vld [vmem:[%s417 + $0x510] sm:$0xff]
                %504 = vst [vmem:[%s418 + $0x150] sm:$0xff] %v503
                %v505 = vld [vmem:[%s417 + $0x518] sm:$0xff]
                %506 = vst [vmem:[%s418 + $0x158] sm:$0xff] %v505
                %v507 = vld [vmem:[%s417 + $0x580] sm:$0xff]
                %508 = vst [vmem:[%s418 + $0x160] sm:$0xff] %v507
                %v509 = vld [vmem:[%s417 + $0x588] sm:$0xff]
                %510 = vst [vmem:[%s418 + $0x168] sm:$0xff] %v509
                %v511 = vld [vmem:[%s417 + $0x590] sm:$0xff]
                %512 = vst [vmem:[%s418 + $0x170] sm:$0xff] %v511
                %v513 = vld [vmem:[%s417 + $0x598] sm:$0xff]
                %514 = vst [vmem:[%s418 + $0x178] sm:$0xff] %v513
                %v515 = vld [vmem:[%s417 + $0x600] sm:$0xff]
                %516 = vst [vmem:[%s418 + $0x180] sm:$0xff] %v515
                %v517 = vld [vmem:[%s417 + $0x608] sm:$0xff]
                %518 = vst [vmem:[%s418 + $0x188] sm:$0xff] %v517
                %v519 = vld [vmem:[%s417 + $0x610] sm:$0xff]
                %520 = vst [vmem:[%s418 + $0x190] sm:$0xff] %v519
                %v521 = vld [vmem:[%s417 + $0x618] sm:$0xff]
                %522 = vst [vmem:[%s418 + $0x198] sm:$0xff] %v521
                %v523 = vld [vmem:[%s417 + $0x680] sm:$0xff]
                %524 = vst [vmem:[%s418 + $0x1a0] sm:$0xff] %v523
                %v525 = vld [vmem:[%s417 + $0x688] sm:$0xff]
                %526 = vst [vmem:[%s418 + $0x1a8] sm:$0xff] %v525
                %v527 = vld [vmem:[%s417 + $0x690] sm:$0xff]
                %528 = vst [vmem:[%s418 + $0x1b0] sm:$0xff] %v527
                %v529 = vld [vmem:[%s417 + $0x698] sm:$0xff]
                %530 = vst [vmem:[%s418 + $0x1b8] sm:$0xff] %v529
                %v531 = vld [vmem:[%s417 + $0x700] sm:$0xff]
                %532 = vst [vmem:[%s418 + $0x1c0] sm:$0xff] %v531
                %v533 = vld [vmem:[%s417 + $0x708] sm:$0xff]
                %534 = vst [vmem:[%s418 + $0x1c8] sm:$0xff] %v533
                %v535 = vld [vmem:[%s417 + $0x710] sm:$0xff]
                %536 = vst [vmem:[%s418 + $0x1d0] sm:$0xff] %v535
                %v537 = vld [vmem:[%s417 + $0x718] sm:$0xff]
                %538 = vst [vmem:[%s418 + $0x1d8] sm:$0xff] %v537
                %v539 = vld [vmem:[%s417 + $0x780] sm:$0xff]
                %540 = vst [vmem:[%s418 + $0x1e0] sm:$0xff] %v539
                %v541 = vld [vmem:[%s417 + $0x788] sm:$0xff]
                %542 = vst [vmem:[%s418 + $0x1e8] sm:$0xff] %v541
                %v543 = vld [vmem:[%s417 + $0x790] sm:$0xff]
                %544 = vst [vmem:[%s418 + $0x1f0] sm:$0xff] %v543
                %v545 = vld [vmem:[%s417 + $0x798] sm:$0xff]
                %546 = vst [vmem:[%s418 + $0x1f8] sm:$0xff] %v545
              $region68: #{model_forward.3} parent=62 // loop_footer
                %s416 = sadd.s32 1, %s412
              $region69: #{model_forward.3} parent=62 // loop_footer_branch
                %411 = sbr.rel target = $region65
              $region70: #{model_forward.3} parent=62 // loop_exit
                _
            $region63: #{model_forward.3} parent=58 // pred_fallthru
              _
            // Predicated region
            $region71: #{model_forward.3} parent=58 // pred_check
              _
            $region72: #{model_forward.3} parent=58 // pred_check_branch
              %548 = sbr.rel target = $region74
            $region73: #{model_forward.3} parent=58 // pred_region
              _
            $region74: #{model_forward.3} parent=58 // pred_fallthru
              _
          $region59: #{model_forward.3} parent=54 // pred_fallthru
            _
          %549 = vnop
        $region55: #{model_forward.3} parent=23 // pred_fallthru
          _
      $region24: #{model_forward.3} parent=5 // pred_fallthru
        _
      %p550 = scmp.le.s32.totalorder 1, %s11
      %p551 = scmp.lt.s32.totalorder %s11, 5
      %p552 = pnand %p550, %p551
      %p553 = pneg %p552
      // Predicated region
      $region75: #{model_forward.3} parent=5 // pred_check
        _
      $region76: #{model_forward.3} parent=5 // pred_check_branch
        %555 = sbr.rel (%p552) target = $region78
      $region77: #{model_forward.3} parent=5 // pred_region
        %s556 = ssub.s32 %s11, 1
        %s557 = sand.u32 %s73, 1
        %s558 = sand.u32 %s73, 1
        %s559 = smul.addr %s558, 512
        %s560 = scalar_lea.vmem [#allocation3], %s559
        // Predicated region
        $region79: #{model_forward.3} parent=77 // pred_check
          %p561 = pneg %p86
        $region80: #{model_forward.3} parent=77 // pred_check_branch
          %563 = sbr.rel (%p561) target = $region82
        $region81: #{model_forward.3} parent=77 // pred_region
          _
        $region82: #{model_forward.3} parent=77 // pred_fallthru
          _
        %s564 = sand.u32 %s101, 1
        %s565 = sand.u32 %s101, 1
        %s566 = smul.addr %s565, 512
        %s567 = scalar_lea.vmem [#allocation4], %s566
        // Predicated region
        $region83: #{model_forward.3} parent=77 // pred_check
          %p568 = pneg %p114
        $region84: #{model_forward.3} parent=77 // pred_check_branch
          %570 = sbr.rel (%p568) target = $region86
        $region85: #{model_forward.3} parent=77 // pred_region
          _
        $region86: #{model_forward.3} parent=77 // pred_fallthru
          _
        %s571 = smul.u32 4, %s23
        %p572 = scmp.lt.s32.totalorder %s21, 0
        %s573 = scalar_select %p572, %s21, 0
        %p574 = scmp.lt.s32.totalorder %s571, 15
        %s575 = scalar_select %p574, %s571, 15
        %s576 = smul.addr %s573, 16
        %s577 = sadd.s32 %s575, %s576
        %s578 = smul.addr %s577, 8
        %s579 = scalar_lea.vmem %s0, %s578
        %p580 = pneg %p58
        %p581 = pneg %p55
        %s582 = sand.u32 %s73, 1
        %s583 = sand.u32 %s73, 1
        %s584 = smul.addr %s583, 512
        %s585 = scalar_lea.vmem [#allocation3], %s584
        %p586 = pneg %p86
        %p587 = pneg %p83
        %s588 = sand.u32 %s101, 1
        %s589 = sand.u32 %s101, 1
        %s590 = smul.addr %s589, 512
        %s591 = scalar_lea.vmem [#allocation4], %s590
        %p592 = pneg %p114
        %p593 = pneg %p111
        %p594 = scmp.lt.s32.totalorder %s22, 0
        %s595 = scalar_select %p594, %s22, 0
        %s596 = scalar_lea.vmem %s3, %s595
        %p597 = pneg %p140
        %p598 = pneg %p137
        %p599 = scmp.lt.s32.totalorder %s22, 0
        %s600 = scalar_select %p599, %s22, 0
        %s601 = scalar_lea.vmem %s4, %s600
        %p602 = pneg %p166
        %p603 = pneg %p163
        %p604 = pneg %p194
        %p605 = pneg %p191
        %p606 = scmp.lt.s32.totalorder %s21, 0
        %s607 = scalar_select %p606, %s21, 0
        %p608 = scmp.lt.s32.totalorder %s22, 0
        %s609 = scalar_select %p608, %s22, 0
        %s610 = sadd.s32 %s609, %s607
        %s611 = smul.addr %s610, 8
        %s612 = scalar_lea.vmem %s5, %s611
        %s613 = smul.u32 4, %s23
        %p614 = scmp.lt.s32.totalorder %s21, 0
        %s615 = scalar_select %p614, %s21, 0
        %p616 = scmp.lt.s32.totalorder %s613, 15
        %s617 = scalar_select %p616, %s613, 15
        %s618 = smul.addr %s615, 16
        %s619 = sadd.s32 %s617, %s618
        %s620 = smul.addr %s619, 8
        %s621 = scalar_lea.vmem %s0, %s620
        %s622 = smul.u32 4, %s23
        %s623 = smul.u32 16, %s22
        %s624 = smul.u32 4, %s23
        %s625 = smul.u32 16, %s22
        %s626 = smul.u32 4, %s23
        %p627 = scmp.lt.s32.totalorder %s22, 0
        %s628 = scalar_select %p627, %s22, 0
        %s629 = scalar_lea.vmem %s3, %s628
        %p630 = scmp.lt.s32.totalorder %s22, 0
        %s631 = scalar_select %p630, %s22, 0
        %s632 = scalar_lea.vmem %s4, %s631
        %p633 = scmp.lt.s32.totalorder %s21, 0
        %s634 = scalar_select %p633, %s21, 0
        %p635 = scmp.lt.s32.totalorder %s22, 0
        %s636 = scalar_select %p635, %s22, 0
        %s637 = sadd.s32 %s636, %s634
        %s638 = smul.addr %s637, 8
        %s639 = scalar_lea.vmem %s5, %s638
        %p640 = scmp.eq.s32.totalorder %s23, 0
        // Predicated region
        $region87: #{model_forward.3} parent=77 // pred_check
          %p641 = pneg %p640
        $region88: #{model_forward.3} parent=77 // pred_check_branch
          %643 = sbr.rel (%p641) target = $region90
        $region89: #{model_forward.3} parent=77 // pred_region
          %644 = vst [vmem:[#allocation2] sm:$0xff] 0.0
        $region90: #{model_forward.3} parent=77 // pred_fallthru
          _
        %v645 = vld [vmem:[%s560] sm:$0xff]
        %v646 = vld [vmem:[%s560 + $0x8] sm:$0xff]
        %v647 = vld [vmem:[%s560 + $0x10] sm:$0xff]
        %v648 = vld [vmem:[%s560 + $0x18] sm:$0xff]
        %v649 = vld [vmem:[%s560 + $0x20] sm:$0xff]
        %v650 = vld [vmem:[%s560 + $0x28] sm:$0xff]
        %v651 = vld [vmem:[%s560 + $0x30] sm:$0xff]
        %v652 = vld [vmem:[%s560 + $0x38] sm:$0xff]
        %v653 = vld [vmem:[%s560 + $0x40] sm:$0xff]
        %v654 = vld [vmem:[%s560 + $0x48] sm:$0xff]
        %v655 = vld [vmem:[%s560 + $0x50] sm:$0xff]
        %v656 = vld [vmem:[%s560 + $0x58] sm:$0xff]
        %v657 = vld [vmem:[%s560 + $0x60] sm:$0xff]
        %v658 = vld [vmem:[%s560 + $0x68] sm:$0xff]
        %v659 = vld [vmem:[%s560 + $0x70] sm:$0xff]
        %v660 = vld [vmem:[%s560 + $0x78] sm:$0xff]
        %v661 = vld [vmem:[%s560 + $0x80] sm:$0xff]
        %v662 = vld [vmem:[%s560 + $0x88] sm:$0xff]
        %v663 = vld [vmem:[%s560 + $0x90] sm:$0xff]
        %v664 = vld [vmem:[%s560 + $0x98] sm:$0xff]
        %v665 = vld [vmem:[%s560 + $0xa0] sm:$0xff]
        %v666 = vld [vmem:[%s560 + $0xa8] sm:$0xff]
        %v667 = vld [vmem:[%s560 + $0xb0] sm:$0xff]
        %v668 = vld [vmem:[%s560 + $0xb8] sm:$0xff]
        %v669 = vld [vmem:[%s560 + $0xc0] sm:$0xff]
        %v670 = vld [vmem:[%s560 + $0xc8] sm:$0xff]
        %v671 = vld [vmem:[%s560 + $0xd0] sm:$0xff]
        %v672 = vld [vmem:[%s560 + $0xd8] sm:$0xff]
        %v673 = vld [vmem:[%s560 + $0xe0] sm:$0xff]
        %v674 = vld [vmem:[%s560 + $0xe8] sm:$0xff]
        %v675 = vld [vmem:[%s560 + $0xf0] sm:$0xff]
        %v676 = vld [vmem:[%s560 + $0xf8] sm:$0xff]
        %v677 = vld [vmem:[%s560 + $0x100] sm:$0xff]
        %v678 = vld [vmem:[%s560 + $0x108] sm:$0xff]
        %v679 = vld [vmem:[%s560 + $0x110] sm:$0xff]
        %v680 = vld [vmem:[%s560 + $0x118] sm:$0xff]
        %v681 = vld [vmem:[%s560 + $0x120] sm:$0xff]
        %v682 = vld [vmem:[%s560 + $0x128] sm:$0xff]
        %v683 = vld [vmem:[%s560 + $0x130] sm:$0xff]
        %v684 = vld [vmem:[%s560 + $0x138] sm:$0xff]
        %v685 = vld [vmem:[%s560 + $0x140] sm:$0xff]
        %v686 = vld [vmem:[%s560 + $0x148] sm:$0xff]
        %v687 = vld [vmem:[%s560 + $0x150] sm:$0xff]
        %v688 = vld [vmem:[%s560 + $0x158] sm:$0xff]
        %v689 = vld [vmem:[%s560 + $0x160] sm:$0xff]
        %v690 = vld [vmem:[%s560 + $0x168] sm:$0xff]
        %v691 = vld [vmem:[%s560 + $0x170] sm:$0xff]
        %v692 = vld [vmem:[%s560 + $0x178] sm:$0xff]
        %v693 = vld [vmem:[%s560 + $0x180] sm:$0xff]
        %v694 = vld [vmem:[%s560 + $0x188] sm:$0xff]
        %v695 = vld [vmem:[%s560 + $0x190] sm:$0xff]
        %v696 = vld [vmem:[%s560 + $0x198] sm:$0xff]
        %v697 = vld [vmem:[%s560 + $0x1a0] sm:$0xff]
        %v698 = vld [vmem:[%s560 + $0x1a8] sm:$0xff]
        %v699 = vld [vmem:[%s560 + $0x1b0] sm:$0xff]
        %v700 = vld [vmem:[%s560 + $0x1b8] sm:$0xff]
        %v701 = vld [vmem:[%s560 + $0x1c0] sm:$0xff]
        %v702 = vld [vmem:[%s560 + $0x1c8] sm:$0xff]
        %v703 = vld [vmem:[%s560 + $0x1d0] sm:$0xff]
        %v704 = vld [vmem:[%s560 + $0x1d8] sm:$0xff]
        %v705 = vld [vmem:[%s560 + $0x1e0] sm:$0xff]
        %v706 = vld [vmem:[%s560 + $0x1e8] sm:$0xff]
        %v707 = vld [vmem:[%s560 + $0x1f0] sm:$0xff]
        %v708 = vld [vmem:[%s560 + $0x1f8] sm:$0xff]
        %v709 = vld [vmem:[%s567] sm:$0xff]
        %v710 = vld [vmem:[%s567 + $0x8] sm:$0xff]
        %v711 = vld [vmem:[%s567 + $0x10] sm:$0xff]
        %v712 = vld [vmem:[%s567 + $0x18] sm:$0xff]
        %v713 = vld [vmem:[%s567 + $0x20] sm:$0xff]
        %v714 = vld [vmem:[%s567 + $0x28] sm:$0xff]
        %v715 = vld [vmem:[%s567 + $0x30] sm:$0xff]
        %v716 = vld [vmem:[%s567 + $0x38] sm:$0xff]
        %v717 = vld [vmem:[%s567 + $0x40] sm:$0xff]
        %v718 = vld [vmem:[%s567 + $0x48] sm:$0xff]
        %v719 = vld [vmem:[%s567 + $0x50] sm:$0xff]
        %v720 = vld [vmem:[%s567 + $0x58] sm:$0xff]
        %v721 = vld [vmem:[%s567 + $0x60] sm:$0xff]
        %v722 = vld [vmem:[%s567 + $0x68] sm:$0xff]
        %v723 = vld [vmem:[%s567 + $0x70] sm:$0xff]
        %v724 = vld [vmem:[%s567 + $0x78] sm:$0xff]
        %v725 = vld [vmem:[%s567 + $0x80] sm:$0xff]
        %v726 = vld [vmem:[%s567 + $0x88] sm:$0xff]
        %v727 = vld [vmem:[%s567 + $0x90] sm:$0xff]
        %v728 = vld [vmem:[%s567 + $0x98] sm:$0xff]
        %v729 = vld [vmem:[%s567 + $0xa0] sm:$0xff]
        %v730 = vld [vmem:[%s567 + $0xa8] sm:$0xff]
        %v731 = vld [vmem:[%s567 + $0xb0] sm:$0xff]
        %v732 = vld [vmem:[%s567 + $0xb8] sm:$0xff]
        %v733 = vld [vmem:[%s567 + $0xc0] sm:$0xff]
        %v734 = vld [vmem:[%s567 + $0xc8] sm:$0xff]
        %v735 = vld [vmem:[%s567 + $0xd0] sm:$0xff]
        %v736 = vld [vmem:[%s567 + $0xd8] sm:$0xff]
        %v737 = vld [vmem:[%s567 + $0xe0] sm:$0xff]
        %v738 = vld [vmem:[%s567 + $0xe8] sm:$0xff]
        %v739 = vld [vmem:[%s567 + $0xf0] sm:$0xff]
        %v740 = vld [vmem:[%s567 + $0xf8] sm:$0xff]
        %v741 = vld [vmem:[%s567 + $0x100] sm:$0xff]
        %v742 = vld [vmem:[%s567 + $0x108] sm:$0xff]
        %v743 = vld [vmem:[%s567 + $0x110] sm:$0xff]
        %v744 = vld [vmem:[%s567 + $0x118] sm:$0xff]
        %v745 = vld [vmem:[%s567 + $0x120] sm:$0xff]
        %v746 = vld [vmem:[%s567 + $0x128] sm:$0xff]
        %v747 = vld [vmem:[%s567 + $0x130] sm:$0xff]
        %v748 = vld [vmem:[%s567 + $0x138] sm:$0xff]
        %v749 = vld [vmem:[%s567 + $0x140] sm:$0xff]
        %v750 = vld [vmem:[%s567 + $0x148] sm:$0xff]
        %v751 = vld [vmem:[%s567 + $0x150] sm:$0xff]
        %v752 = vld [vmem:[%s567 + $0x158] sm:$0xff]
        %v753 = vld [vmem:[%s567 + $0x160] sm:$0xff]
        %v754 = vld [vmem:[%s567 + $0x168] sm:$0xff]
        %v755 = vld [vmem:[%s567 + $0x170] sm:$0xff]
        %v756 = vld [vmem:[%s567 + $0x178] sm:$0xff]
        %v757 = vld [vmem:[%s567 + $0x180] sm:$0xff]
        %v758 = vld [vmem:[%s567 + $0x188] sm:$0xff]
        %v759 = vld [vmem:[%s567 + $0x190] sm:$0xff]
        %v760 = vld [vmem:[%s567 + $0x198] sm:$0xff]
        %v761 = vld [vmem:[%s567 + $0x1a0] sm:$0xff]
        %v762 = vld [vmem:[%s567 + $0x1a8] sm:$0xff]
        %v763 = vld [vmem:[%s567 + $0x1b0] sm:$0xff]
        %v764 = vld [vmem:[%s567 + $0x1b8] sm:$0xff]
        %v765 = vld [vmem:[%s567 + $0x1c0] sm:$0xff]
        %v766 = vld [vmem:[%s567 + $0x1c8] sm:$0xff]
        %v767 = vld [vmem:[%s567 + $0x1d0] sm:$0xff]
        %v768 = vld [vmem:[%s567 + $0x1d8] sm:$0xff]
        %v769 = vld [vmem:[%s567 + $0x1e0] sm:$0xff]
        %v770 = vld [vmem:[%s567 + $0x1e8] sm:$0xff]
        %v771 = vld [vmem:[%s567 + $0x1f0] sm:$0xff]
        %v772 = vld [vmem:[%s567 + $0x1f8] sm:$0xff]
        %v773 = vadd.f32 %v645, %v709
        %v774 = vadd.f32 %v646, %v710
        %v775 = vadd.f32 %v647, %v711
        %v776 = vadd.f32 %v648, %v712
        %v777 = vadd.f32 %v649, %v713
        %v778 = vadd.f32 %v650, %v714
        %v779 = vadd.f32 %v651, %v715
        %v780 = vadd.f32 %v652, %v716
        %v781 = vadd.f32 %v653, %v717
        %v782 = vadd.f32 %v654, %v718
        %v783 = vadd.f32 %v655, %v719
        %v784 = vadd.f32 %v656, %v720
        %v785 = vadd.f32 %v657, %v721
        %v786 = vadd.f32 %v658, %v722
        %v787 = vadd.f32 %v659, %v723
        %v788 = vadd.f32 %v660, %v724
        %v789 = vadd.f32 %v661, %v725
        %v790 = vadd.f32 %v662, %v726
        %v791 = vadd.f32 %v663, %v727
        %v792 = vadd.f32 %v664, %v728
        %v793 = vadd.f32 %v665, %v729
        %v794 = vadd.f32 %v666, %v730
        %v795 = vadd.f32 %v667, %v731
        %v796 = vadd.f32 %v668, %v732
        %v797 = vadd.f32 %v669, %v733
        %v798 = vadd.f32 %v670, %v734
        %v799 = vadd.f32 %v671, %v735
        %v800 = vadd.f32 %v672, %v736
        %v801 = vadd.f32 %v673, %v737
        %v802 = vadd.f32 %v674, %v738
        %v803 = vadd.f32 %v675, %v739
        %v804 = vadd.f32 %v676, %v740
        %v805 = vadd.f32 %v677, %v741
        %v806 = vadd.f32 %v678, %v742
        %v807 = vadd.f32 %v679, %v743
        %v808 = vadd.f32 %v680, %v744
        %v809 = vadd.f32 %v681, %v745
        %v810 = vadd.f32 %v682, %v746
        %v811 = vadd.f32 %v683, %v747
        %v812 = vadd.f32 %v684, %v748
        %v813 = vadd.f32 %v685, %v749
        %v814 = vadd.f32 %v686, %v750
        %v815 = vadd.f32 %v687, %v751
        %v816 = vadd.f32 %v688, %v752
        %v817 = vadd.f32 %v689, %v753
        %v818 = vadd.f32 %v690, %v754
        %v819 = vadd.f32 %v691, %v755
        %v820 = vadd.f32 %v692, %v756
        %v821 = vadd.f32 %v693, %v757
        %v822 = vadd.f32 %v694, %v758
        %v823 = vadd.f32 %v695, %v759
        %v824 = vadd.f32 %v696, %v760
        %v825 = vadd.f32 %v697, %v761
        %v826 = vadd.f32 %v698, %v762
        %v827 = vadd.f32 %v699, %v763
        %v828 = vadd.f32 %v700, %v764
        %v829 = vadd.f32 %v701, %v765
        %v830 = vadd.f32 %v702, %v766
        %v831 = vadd.f32 %v703, %v767
        %v832 = vadd.f32 %v704, %v768
        %v833 = vadd.f32 %v705, %v769
        %v834 = vadd.f32 %v706, %v770
        %v835 = vadd.f32 %v707, %v771
        %v836 = vadd.f32 %v708, %v772
        %v837 = vld [vmem:[#allocation2] sm:$0xff]
        %v838 = vld [vmem:[%s621] sm:$0xff]
        %v839 = vld [vmem:[%s621 + $0x8] sm:$0xff]
        %v840 = vld [vmem:[%s621 + $0x10] sm:$0xff]
        %v841 = vld [vmem:[%s621 + $0x18] sm:$0xff]
        %842 = vmatprep.subr.mxu0 %v774
        %843 = vmatpush1.xpose.msra.mxu0 %v773
        %844 = vmatprep.subr.mxu0 %v778
        %845 = vmatpush1.xpose.msra.mxu0 %v777
        %846 = vmatprep.subr.mxu0 %v782
        %847 = vmatpush1.xpose.msra.mxu0 %v781
        %848 = vmatprep.subr.mxu0 %v786
        %849 = vmatpush1.xpose.msra.mxu0 %v785
        %850 = vmatprep.subr.mxu0 %v790
        %851 = vmatpush1.xpose.msra.mxu0 %v789
        %852 = vmatprep.subr.mxu0 %v794
        %853 = vmatpush1.xpose.msra.mxu0 %v793
        %854 = vmatprep.subr.mxu0 %v798
        %855 = vmatpush1.xpose.msra.mxu0 %v797
        %856 = vmatprep.subr.mxu0 %v802
        %857 = vmatpush1.xpose.msra.mxu0 %v801
        %858 = vmatprep.subr.mxu0 %v806
        %859 = vmatpush1.xpose.msra.mxu0 %v805
        %860 = vmatprep.subr.mxu0 %v810
        %861 = vmatpush1.xpose.msra.mxu0 %v809
        %862 = vmatprep.subr.mxu0 %v814
        %863 = vmatpush1.xpose.msra.mxu0 %v813
        %864 = vmatprep.subr.mxu0 %v818
        %865 = vmatpush1.xpose.msra.mxu0 %v817
        %866 = vmatprep.subr.mxu0 %v822
        %867 = vmatpush1.xpose.msra.mxu0 %v821
        %868 = vmatprep.subr.mxu0 %v826
        %869 = vmatpush1.xpose.msra.mxu0 %v825
        %870 = vmatprep.subr.mxu0 %v830
        %871 = vmatpush1.xpose.msra.mxu0 %v829
        %872 = vmatprep.subr.mxu0 %v834
        %873 = vmatpush1.xpose.msra.mxu0 %v833
        %874 = vmatprep.subr.mxu0 0.0
        %875 = vmatpush1.xpose.msra.mxu0 0.0
        %876 = vmatprep.subr.mxu0 0.0
        %877 = vmatpush1.xpose.msra.mxu0 0.0
        %878 = vmatprep.subr.mxu0 0.0
        %879 = vmatpush1.xpose.msra.mxu0 0.0
        %880 = vmatprep.subr.mxu0 0.0
        %881 = vmatpush1.xpose.msra.mxu0 0.0
        %882 = vmatprep.subr.mxu0 0.0
        %883 = vmatpush1.xpose.msra.mxu0 0.0
        %884 = vmatprep.subr.mxu0 0.0
        %885 = vmatpush1.xpose.msra.mxu0 0.0
        %886 = vmatprep.subr.mxu0 0.0
        %887 = vmatpush1.xpose.msra.mxu0 0.0
        %888 = vmatprep.subr.mxu0 0.0
        %889 = vmatpush1.xpose.msra.mxu0 0.0
        %890 = vmatprep.subr.mxu0 0.0
        %891 = vmatpush1.xpose.msra.mxu0 0.0
        %892 = vmatprep.subr.mxu0 0.0
        %893 = vmatpush1.xpose.msra.mxu0 0.0
        %894 = vmatprep.subr.mxu0 0.0
        %895 = vmatpush1.xpose.msra.mxu0 0.0
        %896 = vmatprep.subr.mxu0 0.0
        %897 = vmatpush1.xpose.msra.mxu0 0.0
        %898 = vmatprep.subr.mxu0 0.0
        %899 = vmatpush1.xpose.msra.mxu0 0.0
        %900 = vmatprep.subr.mxu0 0.0
        %901 = vmatpush1.xpose.msra.mxu0 0.0
        %902 = vmatprep.subr.mxu0 0.0
        %903 = vmatpush1.xpose.msra.mxu0 0.0
        %904 = vmatprep.subr.mxu0 0.0
        %905 = vmatpush1.xpose.msra.mxu0 0.0
        %906 = vmatprep.mubr.f32.mxu0 %v839
        %907 = vmatmul.mubr.f32.gmra.mrb[0].mxu0 %v838
        %v908 = vpop.f32.mrb[0].mxu0
        %v909 = vadd.f32 0.0, %v908
        %v910 = vpop.f32.mrb[0].mxu0
        %911 = vdwg.mxu0
        %912 = vmatprep.subr.mxu0 %v776
        %913 = vmatpush1.xpose.msra.mxu0 %v775
        %914 = vmatprep.subr.mxu0 %v780
        %915 = vmatpush1.xpose.msra.mxu0 %v779
        %916 = vmatprep.subr.mxu0 %v784
        %917 = vmatpush1.xpose.msra.mxu0 %v783
        %918 = vmatprep.subr.mxu0 %v788
        %919 = vmatpush1.xpose.msra.mxu0 %v787
        %920 = vmatprep.subr.mxu0 %v792
        %921 = vmatpush1.xpose.msra.mxu0 %v791
        %922 = vmatprep.subr.mxu0 %v796
        %923 = vmatpush1.xpose.msra.mxu0 %v795
        %924 = vmatprep.subr.mxu0 %v800
        %925 = vmatpush1.xpose.msra.mxu0 %v799
        %926 = vmatprep.subr.mxu0 %v804
        %927 = vmatpush1.xpose.msra.mxu0 %v803
        %928 = vmatprep.subr.mxu0 %v808
        %929 = vmatpush1.xpose.msra.mxu0 %v807
        %930 = vmatprep.subr.mxu0 %v812
        %931 = vmatpush1.xpose.msra.mxu0 %v811
        %932 = vmatprep.subr.mxu0 %v816
        %933 = vmatpush1.xpose.msra.mxu0 %v815
        %934 = vmatprep.subr.mxu0 %v820
        %935 = vmatpush1.xpose.msra.mxu0 %v819
        %936 = vmatprep.subr.mxu0 %v824
        %937 = vmatpush1.xpose.msra.mxu0 %v823
        %938 = vmatprep.subr.mxu0 %v828
        %939 = vmatpush1.xpose.msra.mxu0 %v827
        %940 = vmatprep.subr.mxu0 %v832
        %941 = vmatpush1.xpose.msra.mxu0 %v831
        %942 = vmatprep.subr.mxu0 %v836
        %943 = vmatpush1.xpose.msra.mxu0 %v835
        %944 = vmatprep.subr.mxu0 0.0
        %945 = vmatpush1.xpose.msra.mxu0 0.0
        %946 = vmatprep.subr.mxu0 0.0
        %947 = vmatpush1.xpose.msra.mxu0 0.0
        %948 = vmatprep.subr.mxu0 0.0
        %949 = vmatpush1.xpose.msra.mxu0 0.0
        %950 = vmatprep.subr.mxu0 0.0
        %951 = vmatpush1.xpose.msra.mxu0 0.0
        %952 = vmatprep.subr.mxu0 0.0
        %953 = vmatpush1.xpose.msra.mxu0 0.0
        %954 = vmatprep.subr.mxu0 0.0
        %955 = vmatpush1.xpose.msra.mxu0 0.0
        %956 = vmatprep.subr.mxu0 0.0
        %957 = vmatpush1.xpose.msra.mxu0 0.0
        %958 = vmatprep.subr.mxu0 0.0
        %959 = vmatpush1.xpose.msra.mxu0 0.0
        %960 = vmatprep.subr.mxu0 0.0
        %961 = vmatpush1.xpose.msra.mxu0 0.0
        %962 = vmatprep.subr.mxu0 0.0
        %963 = vmatpush1.xpose.msra.mxu0 0.0
        %964 = vmatprep.subr.mxu0 0.0
        %965 = vmatpush1.xpose.msra.mxu0 0.0
        %966 = vmatprep.subr.mxu0 0.0
        %967 = vmatpush1.xpose.msra.mxu0 0.0
        %968 = vmatprep.subr.mxu0 0.0
        %969 = vmatpush1.xpose.msra.mxu0 0.0
        %970 = vmatprep.subr.mxu0 0.0
        %971 = vmatpush1.xpose.msra.mxu0 0.0
        %972 = vmatprep.subr.mxu0 0.0
        %973 = vmatpush1.xpose.msra.mxu0 0.0
        %974 = vmatprep.subr.mxu0 0.0
        %975 = vmatpush1.xpose.msra.mxu0 0.0
        %976 = vmatprep.mubr.f32.mxu0 %v841
        %977 = vmatmul.mubr.f32.gmra.mrb[0].mxu0 %v840
        %v978 = vpop.f32.mrb[0].mxu0
        %v979 = vadd.f32 %v909, %v978
        %v980 = vpop.f32.mrb[0].mxu0
        %981 = vdwg.mxu0
        %v982 = vadd.f32 %v837, %v979
        %983 = vst [vmem:[#allocation2] sm:$0xff] %v982
        %p984 = scmp.eq.s32.totalorder %s23, 3
        // Predicated region
        $region91: #{model_forward.3} parent=77 // pred_check
          %p985 = pneg %p984
        $region92: #{model_forward.3} parent=77 // pred_check_branch
          %987 = sbr.rel (%p985) target = $region94
        $region93: #{model_forward.3} parent=77 // pred_region
          %v988 = vld [vmem:[%s629] sm:$0x1]
          %v989 = vld [vmem:[%s632] sm:$0x1]
          %v990 = vadd.f32 %v988, %v989
          %v991 = vld [vmem:[#allocation2] sm:$0xff]
          %v993 = vlaneseq
          %v994 = vshrl.u32 %v993, 7
          %v995 = vsub.s32 0, %v994
          %v996 = vrot.slane %v990, %v995
          %v998 = vadd.f32 %v991, %v996
          %999 = vst [vmem:[%s639] sm:$0xff] %v998
        $region94: #{model_forward.3} parent=77 // pred_fallthru
          _
        %p1000 = scmp.lt.s32.totalorder %s21, 0
        %s1001 = scalar_select %p1000, %s21, 0
        %p1002 = scmp.lt.s32.totalorder %s22, 0
        %s1003 = scalar_select %p1002, %s22, 0
        %s1004 = sadd.s32 %s1003, %s1001
        %s1005 = smul.addr %s1004, 8
        %s1006 = scalar_lea.vmem %s5, %s1005
        // Predicated region
        $region95: #{model_forward.3} parent=77 // pred_check
          %p1007 = pneg %p191
        $region96: #{model_forward.3} parent=77 // pred_check_branch
          %1009 = sbr.rel (%p1007) target = $region98
        $region97: #{model_forward.3} parent=77 // pred_region
          _
        $region98: #{model_forward.3} parent=77 // pred_fallthru
          _
        // Predicated region
        $region99: #{model_forward.3} parent=77 // pred_check
          %p1010 = pneg %p191
        $region100: #{model_forward.3} parent=77 // pred_check_branch
          %1012 = sbr.rel (%p1010) target = $region102
        $region101: #{model_forward.3} parent=77 // pred_region
          %p1013 = scmp.lt.s32.totalorder %s21, 0
          %s1014 = scalar_select %p1013, %s21, 0
          %p1015 = scmp.lt.s32.totalorder %s22, 0
          %s1016 = scalar_select %p1015, %s22, 0
          %s1017 = sadd.s32 %s1016, %s1014
          %s1018 = smul.addr %s1017, 8
          %s1019 = scalar_lea.vmem %s5, %s1018
        $region102: #{model_forward.3} parent=77 // pred_fallthru
          _
      $region78: #{model_forward.3} parent=5 // pred_fallthru
        _
      %p1020 = scmp.le.s32.totalorder 2, %s11
      // Predicated region
      $region103: #{model_forward.3} parent=5 // pred_check
        %p1021 = pneg %p1020
      $region104: #{model_forward.3} parent=5 // pred_check_branch
        %1023 = sbr.rel (%p1021) target = $region106
      $region105: #{model_forward.3} parent=5 // pred_region
        %s1024 = ssub.s32 %s11, 2
      $region106: #{model_forward.3} parent=5 // pred_fallthru
        _
    $region6: #{model_forward.3} parent=1 // loop_footer
      %s15 = sadd.s32 1, %s11
    $region7: #{model_forward.3} parent=1 // loop_footer_branch
      %10 = sbr.rel target = $region3
    $region8: #{model_forward.3} parent=1 // loop_exit
      _

// kernel: model_forward.2
$region0: #{model_forward.2}
  #allocation0 [shape = 'u32[]', space=smem, size = 0x4, offset = 0x4, fixed_abs, tag = 'smem constant byte address 0x4 - core index']
  #allocation1 [shape = 'u32[144,128]{1,0:T(1,128)}', space=vmem, size = 0x12000, scoped, tag = 'internal scratch']
  #allocation2 [shape = 'f32[256,8]{1,0:T(8,128)}', space=vmem, size = 0x20000, scoped, tag = 'scratch operand']
  %s0 = inlined_call_operand.vmem [shape: f32[2,18,18,4], index: 0, kind: input, shape index: {}]
  %s1 = inlined_call_operand.vmem [shape: f32[9,4,8], index: 1, kind: input, shape index: {}]
  %s2 = inlined_call_operand.vmem [shape: f32[9,4,8], index: 2, kind: input, shape index: {}]
  %s3 = inlined_call_operand.vmem [shape: f32[1,8], index: 3, kind: input, shape index: {}]
  %s4 = inlined_call_operand.vmem [shape: f32[1,8], index: 4, kind: input, shape index: {}]
  %s5 = inlined_call_operand.vmem [shape: f32[512,8], index: 5, kind: output, shape index: {}]
  %s6 = sld [smem:[#allocation0]]
  $region53: #{model_forward.2} parent=0
    _
  %s8 = ssub.s32 1, %s6
  %s9 = scalar_select 0, %s8, %s6
  loop: start=0, step=1, limit=4
  $region2: #{model_forward.2} parent=0 // loop_pre_header
    _
  $region3: #{model_forward.2} parent=0 // loop_header
    %s11 = sphi 0, %s15
    %p12 = scmp.ge.s32.totalorder %s11, 4
    %s21 = sphi 0, %s23
    %s24 = sphi 0, %s21
    %s25 = sphi 0, %s24
    %s41 = sphi 0, %s25
    %s45 = sphi 0, %s45
    %s47 = sphi 0, %s45
    %s48 = sphi 0, %s47
    %s62 = sphi 0, %s48
    %s66 = sphi 0, %s66
    %s68 = sphi 0, %s66
    %s69 = sphi 0, %s68
    %s83 = sphi 0, %s69
    %s87 = sphi 0, %s87
    %s89 = sphi 0, %s87
    %s90 = sphi 0, %s89
    %s104 = sphi 0, %s90
    %s108 = sphi 0, %s108
    %s110 = sphi 0, %s108
    %s111 = sphi 0, %s110
    %s125 = sphi 0, %s111
    %s131 = sphi 0, %s133
    %s134 = sphi 0, %s131
    %s135 = sphi 0, %s134
    %s151 = sphi 0, %s135
  $region4: #{model_forward.2} parent=0 // loop_header_branch
    %14 = sbr.rel (%p12) target = $region8
  $region5: #{model_forward.2} parent=0 // loop_body
    %s16 = ssub.s32 %s11, 1
    %s17 = ssub.s32 %s11, 2
    %s18 = sadd.s32 %s11, 1
    %s19 = ssub.s32 %s11, %s18
    %p20 = scmp.eq.s32.totalorder %s19, 0
    %s22 = sadd.s32 %s21, 1
    %s23 = scalar_select %p20, %s21, %s22
    %p26 = pneg %p20
    %p27 = scmp.eq.s32.totalorder %s11, 1
    %p28 = por %p26, %p27
    %p29 = scmp.ne.s32.totalorder %s21, %s24
    %p30 = scmp.eq.s32.totalorder %s11, 0
    %p31 = por %p29, %p30
    %p32 = scmp.ne.s32.totalorder %s21, %s24
    %p33 = scmp.eq.s32.totalorder %s16, 1
    %p34 = por %p32, %p33
    %p35 = scmp.ne.s32.totalorder %s24, %s25
    %p36 = scmp.eq.s32.totalorder %s16, 0
    %p37 = por %p35, %p36
    %p38 = scmp.ne.s32.totalorder %s24, %s25
    %p39 = scmp.eq.s32.totalorder %s17, 1
    %p40 = por %p38, %p39
    %p42 = scmp.ne.s32.totalorder %s25, %s41
    %p43 = scmp.eq.s32.totalorder %s17, 0
    %p44 = por %p42, %p43
    %s46 = sadd.s32 %s45, 1
    %p49 = scmp.eq.s32.totalorder %s11, 1
    %p50 = scmp.ne.s32.totalorder %s45, %s47
    %p51 = scmp.eq.s32.totalorder %s11, 0
    %p52 = por %p50, %p51
    %p53 = scmp.ne.s32.totalorder %s45, %s47
    %p54 = scmp.eq.s32.totalorder %s16, 1
    %p55 = por %p53, %p54
    %p56 = scmp.ne.s32.totalorder %s47, %s48
    %p57 = scmp.eq.s32.totalorder %s16, 0
    %p58 = por %p56, %p57
    %p59 = scmp.ne.s32.totalorder %s47, %s48
    %p60 = scmp.eq.s32.totalorder %s17, 1
    %p61 = por %p59, %p60
    %p63 = scmp.ne.s32.totalorder %s48, %s62
    %p64 = scmp.eq.s32.totalorder %s17, 0
    %p65 = por %p63, %p64
    %s67 = sadd.s32 %s66, 1
    %p70 = scmp.eq.s32.totalorder %s11, 1
    %p71 = scmp.ne.s32.totalorder %s66, %s68
    %p72 = scmp.eq.s32.totalorder %s11, 0
    %p73 = por %p71, %p72
    %p74 = scmp.ne.s32.totalorder %s66, %s68
    %p75 = scmp.eq.s32.totalorder %s16, 1
    %p76 = por %p74, %p75
    %p77 = scmp.ne.s32.totalorder %s68, %s69
    %p78 = scmp.eq.s32.totalorder %s16, 0
    %p79 = por %p77, %p78
    %p80 = scmp.ne.s32.totalorder %s68, %s69
    %p81 = scmp.eq.s32.totalorder %s17, 1
    %p82 = por %p80, %p81
    %p84 = scmp.ne.s32.totalorder %s69, %s83
    %p85 = scmp.eq.s32.totalorder %s17, 0
    %p86 = por %p84, %p85
    %s88 = sadd.s32 %s87, 1
    %p91 = scmp.eq.s32.totalorder %s11, 1
    %p92 = scmp.ne.s32.totalorder %s87, %s89
    %p93 = scmp.eq.s32.totalorder %s11, 0
    %p94 = por %p92, %p93
    %p95 = scmp.ne.s32.totalorder %s87, %s89
    %p96 = scmp.eq.s32.totalorder %s16, 1
    %p97 = por %p95, %p96
    %p98 = scmp.ne.s32.totalorder %s89, %s90
    %p99 = scmp.eq.s32.totalorder %s16, 0
    %p100 = por %p98, %p99
    %p101 = scmp.ne.s32.totalorder %s89, %s90
    %p102 = scmp.eq.s32.totalorder %s17, 1
    %p103 = por %p101, %p102
    %p105 = scmp.ne.s32.totalorder %s90, %s104
    %p106 = scmp.eq.s32.totalorder %s17, 0
    %p107 = por %p105, %p106
    %s109 = sadd.s32 %s108, 1
    %p112 = scmp.eq.s32.totalorder %s11, 1
    %p113 = scmp.ne.s32.totalorder %s108, %s110
    %p114 = scmp.eq.s32.totalorder %s11, 0
    %p115 = por %p113, %p114
    %p116 = scmp.ne.s32.totalorder %s108, %s110
    %p117 = scmp.eq.s32.totalorder %s16, 1
    %p118 = por %p116, %p117
    %p119 = scmp.ne.s32.totalorder %s110, %s111
    %p120 = scmp.eq.s32.totalorder %s16, 0
    %p121 = por %p119, %p120
    %p122 = scmp.ne.s32.totalorder %s110, %s111
    %p123 = scmp.eq.s32.totalorder %s17, 1
    %p124 = por %p122, %p123
    %p126 = scmp.ne.s32.totalorder %s111, %s125
    %p127 = scmp.eq.s32.totalorder %s17, 0
    %p128 = por %p126, %p127
    %s129 = ssub.s32 %s11, %s18
    %p130 = scmp.eq.s32.totalorder %s129, 0
    %s132 = sadd.s32 %s131, 1
    %s133 = scalar_select %p130, %s131, %s132
    %p136 = pneg %p130
    %p137 = scmp.eq.s32.totalorder %s11, 1
    %p138 = por %p136, %p137
    %p139 = scmp.ne.s32.totalorder %s131, %s134
    %p140 = scmp.eq.s32.totalorder %s11, 0
    %p141 = por %p139, %p140
    %p142 = scmp.ne.s32.totalorder %s131, %s134
    %p143 = scmp.eq.s32.totalorder %s16, 1
    %p144 = por %p142, %p143
    %p145 = scmp.ne.s32.totalorder %s134, %s135
    %p146 = scmp.eq.s32.totalorder %s16, 0
    %p147 = por %p145, %p146
    %p148 = scmp.ne.s32.totalorder %s134, %s135
    %p149 = scmp.eq.s32.totalorder %s17, 1
    %p150 = por %p148, %p149
    %p152 = scmp.ne.s32.totalorder %s135, %s151
    %p153 = scmp.eq.s32.totalorder %s17, 0
    %p154 = por %p152, %p153
    %p155 = scmp.le.s32.totalorder 1, %s11
    %p156 = scmp.lt.s32.totalorder %s11, 3
    %p157 = pnand %p155, %p156
    %p158 = pneg %p157
    // Predicated region
    $region9: #{model_forward.2} parent=5 // pred_check
      _
    $region10: #{model_forward.2} parent=5 // pred_check_branch
      %160 = sbr.rel (%p157) target = $region12
    $region11: #{model_forward.2} parent=5 // pred_region
      %s161 = ssub.s32 %s11, 1
      // Predicated region
      $region13: #{model_forward.2} parent=11 // pred_check
        %p162 = pneg %p58
      $region14: #{model_forward.2} parent=11 // pred_check_branch
        %164 = sbr.rel (%p162) target = $region16
      $region15: #{model_forward.2} parent=11 // pred_region
        _
      $region16: #{model_forward.2} parent=11 // pred_fallthru
        _
      // Predicated region
      $region17: #{model_forward.2} parent=11 // pred_check
        %p165 = pneg %p79
      $region18: #{model_forward.2} parent=11 // pred_check_branch
        %167 = sbr.rel (%p165) target = $region20
      $region19: #{model_forward.2} parent=11 // pred_region
        _
      $region20: #{model_forward.2} parent=11 // pred_fallthru
        _
      // Predicated region
      $region21: #{model_forward.2} parent=11 // pred_check
        %p168 = pneg %p100
      $region22: #{model_forward.2} parent=11 // pred_check_branch
        %170 = sbr.rel (%p168) target = $region24
      $region23: #{model_forward.2} parent=11 // pred_region
        _
      $region24: #{model_forward.2} parent=11 // pred_fallthru
        _
      // Predicated region
      $region25: #{model_forward.2} parent=11 // pred_check
        %p171 = pneg %p121
      $region26: #{model_forward.2} parent=11 // pred_check_branch
        %173 = sbr.rel (%p171) target = $region28
      $region27: #{model_forward.2} parent=11 // pred_region
        _
      $region28: #{model_forward.2} parent=11 // pred_fallthru
        _
    $region12: #{model_forward.2} parent=5 // pred_fallthru
      _
    %p174 = scmp.lt.s32.totalorder %s11, 2
    // Predicated region
    $region29: #{model_forward.2} parent=5 // pred_check
      %p175 = pneg %p174
    $region30: #{model_forward.2} parent=5 // pred_check_branch
      %177 = sbr.rel (%p175) target = $region32
    $region31: #{model_forward.2} parent=5 // pred_region
      // Predicated region
      $region33: #{model_forward.2} parent=31 // pred_check
        %p178 = pneg %p31
      $region34: #{model_forward.2} parent=31 // pred_check_branch
        %180 = sbr.rel (%p178) target = $region36
      $region35: #{model_forward.2} parent=31 // pred_region
        %p181 = scmp.lt.s32.totalorder %s11, 1
        %s182 = scalar_select %p181, %s11, 1
        %s183 = smul.addr %s182, 54
        %s184 = smul.addr %s183, 8
        %s185 = scalar_lea.vmem %s0, %s184
      $region36: #{model_forward.2} parent=31 // pred_fallthru
        _
    $region32: #{model_forward.2} parent=5 // pred_fallthru
      _
    %p186 = scmp.le.s32.totalorder 1, %s11
    %p187 = scmp.lt.s32.totalorder %s11, 3
    %p188 = pnand %p186, %p187
    %p189 = pneg %p188
    // Predicated region
    $region37: #{model_forward.2} parent=5 // pred_check
      _
    $region38: #{model_forward.2} parent=5 // pred_check_branch
      %191 = sbr.rel (%p188) target = $region40
    $region39: #{model_forward.2} parent=5 // pred_region
      %s192 = ssub.s32 %s11, 1
      %p193 = scmp.lt.s32.totalorder %s16, 1
      %s194 = scalar_select %p193, %s16, 1
      %s195 = smul.addr %s194, 54
      %s196 = smul.addr %s195, 8
      %s197 = scalar_lea.vmem %s0, %s196
      %p198 = pneg %p37
      %p199 = pneg %p34
      %p200 = pneg %p58
      %p201 = pneg %p55
      %p202 = pneg %p79
      %p203 = pneg %p76
      %p204 = pneg %p100
      %p205 = pneg %p97
      %p206 = pneg %p121
      %p207 = pneg %p118
      %p208 = pneg %p147
      %p209 = pneg %p144
      %s210 = smul.u32 32, %s16
      %p211 = scmp.lt.s32.totalorder %s210, 63
      %s212 = scalar_select %p211, %s210, 63
      %s213 = smul.addr %s212, 8
      %s214 = scalar_lea.vmem %s5, %s213
      %p215 = scmp.lt.s32.totalorder %s16, 1
      %s216 = scalar_select %p215, %s16, 1
      %s217 = smul.addr %s216, 54
      %s218 = smul.addr %s217, 8
      %s219 = scalar_lea.vmem %s0, %s218
      %s220 = smul.u32 32, %s16
      %p221 = scmp.lt.s32.totalorder %s220, 63
      %s222 = scalar_select %p221, %s220, 63
      %s223 = smul.addr %s222, 8
      %s224 = scalar_lea.vmem %s5, %s223
      %s225 = smul.u32 32, %s16
      %vm226 = vcmask 64512
      %227 = vst.msk [vmem:[#allocation2] sm:$0xff] %vm226, 0.0
      %228 = vst.msk [vmem:[#allocation2 + $0x8] sm:$0xff] %vm226, 0.0
      %229 = vst.msk [vmem:[#allocation2 + $0x10] sm:$0xff] %vm226, 0.0
      %230 = vst.msk [vmem:[#allocation2 + $0x18] sm:$0xff] %vm226, 0.0
      %231 = vst.msk [vmem:[#allocation2 + $0x20] sm:$0xff] %vm226, 0.0
      %232 = vst.msk [vmem:[#allocation2 + $0x28] sm:$0xff] %vm226, 0.0
      %233 = vst.msk [vmem:[#allocation2 + $0x30] sm:$0xff] %vm226, 0.0
      %234 = vst.msk [vmem:[#allocation2 + $0x38] sm:$0xff] %vm226, 0.0
      %235 = vst.msk [vmem:[#allocation2 + $0x40] sm:$0xff] %vm226, 0.0
      %236 = vst.msk [vmem:[#allocation2 + $0x48] sm:$0xff] %vm226, 0.0
      %237 = vst.msk [vmem:[#allocation2 + $0x50] sm:$0xff] %vm226, 0.0
      %238 = vst.msk [vmem:[#allocation2 + $0x58] sm:$0xff] %vm226, 0.0
      %239 = vst.msk [vmem:[#allocation2 + $0x60] sm:$0xff] %vm226, 0.0
      %240 = vst.msk [vmem:[#allocation2 + $0x68] sm:$0xff] %vm226, 0.0
      %241 = vst.msk [vmem:[#allocation2 + $0x70] sm:$0xff] %vm226, 0.0
      %242 = vst.msk [vmem:[#allocation2 + $0x78] sm:$0xff] %vm226, 0.0
      %243 = vst.msk [vmem:[#allocation2 + $0x80] sm:$0xff] %vm226, 0.0
      %244 = vst.msk [vmem:[#allocation2 + $0x88] sm:$0xff] %vm226, 0.0
      %245 = vst.msk [vmem:[#allocation2 + $0x90] sm:$0xff] %vm226, 0.0
      %246 = vst.msk [vmem:[#allocation2 + $0x98] sm:$0xff] %vm226, 0.0
      %247 = vst.msk [vmem:[#allocation2 + $0xa0] sm:$0xff] %vm226, 0.0
      %248 = vst.msk [vmem:[#allocation2 + $0xa8] sm:$0xff] %vm226, 0.0
      %249 = vst.msk [vmem:[#allocation2 + $0xb0] sm:$0xff] %vm226, 0.0
      %250 = vst.msk [vmem:[#allocation2 + $0xb8] sm:$0xff] %vm226, 0.0
      %251 = vst.msk [vmem:[#allocation2 + $0xc0] sm:$0xff] %vm226, 0.0
      %252 = vst.msk [vmem:[#allocation2 + $0xc8] sm:$0xff] %vm226, 0.0
      %253 = vst.msk [vmem:[#allocation2 + $0xd0] sm:$0xff] %vm226, 0.0
      %254 = vst.msk [vmem:[#allocation2 + $0xd8] sm:$0xff] %vm226, 0.0
      %255 = vst.msk [vmem:[#allocation2 + $0xe0] sm:$0xff] %vm226, 0.0
      %256 = vst.msk [vmem:[#allocation2 + $0xe8] sm:$0xff] %vm226, 0.0
      %257 = vst.msk [vmem:[#allocation2 + $0xf0] sm:$0xff] %vm226, 0.0
      %258 = vst.msk [vmem:[#allocation2 + $0xf8] sm:$0xff] %vm226, 0.0
      %v259 = vld [vmem:[%s1] sm:$0xf]
      %v260 = vld [vmem:[%s1 + $0x4] sm:$0xf]
      %v261 = vld [vmem:[%s1 + $0x8] sm:$0xf]
      %v262 = vld [vmem:[%s1 + $0xc] sm:$0xf]
      %v263 = vld [vmem:[%s1 + $0x10] sm:$0xf]
      %v264 = vld [vmem:[%s1 + $0x14] sm:$0xf]
      %v265 = vld [vmem:[%s1 + $0x18] sm:$0xf]
      %v266 = vld [vmem:[%s1 + $0x1c] sm:$0xf]
      %v267 = vld [vmem:[%s1 + $0x20] sm:$0xf]
      %v268 = vld [vmem:[%s2] sm:$0xf]
      %v269 = vld [vmem:[%s2 + $0x4] sm:$0xf]
      %v270 = vld [vmem:[%s2 + $0x8] sm:$0xf]
      %v271 = vld [vmem:[%s2 + $0xc] sm:$0xf]
      %v272 = vld [vmem:[%s2 + $0x10] sm:$0xf]
      %v273 = vld [vmem:[%s2 + $0x14] sm:$0xf]
      %v274 = vld [vmem:[%s2 + $0x18] sm:$0xf]
      %v275 = vld [vmem:[%s2 + $0x1c] sm:$0xf]
      %v276 = vld [vmem:[%s2 + $0x20] sm:$0xf]
      %v277 = vadd.f32 %v259, %v268
      %v278 = vadd.f32 %v260, %v269
      %v279 = vadd.f32 %v261, %v270
      %v280 = vadd.f32 %v262, %v271
      %v281 = vadd.f32 %v263, %v272
      %v282 = vadd.f32 %v264, %v273
      %v283 = vadd.f32 %v265, %v274
      %v284 = vadd.f32 %v266, %v275
      %v285 = vadd.f32 %v267, %v276
      %v286 = vld [vmem:[%s219] sm:$0xff]
      %v287 = vld [vmem:[%s219 + $0x8] sm:$0xff]
      %v288 = vld [vmem:[%s219 + $0x18] sm:$0xff]
      %v289 = vld [vmem:[%s219 + $0x20] sm:$0xff]
      %v290 = vld [vmem:[%s219 + $0x30] sm:$0xff]
      %v291 = vld [vmem:[%s219 + $0x38] sm:$0xff]
      %v292 = vld [vmem:[%s219 + $0x48] sm:$0xff]
      %v293 = vld [vmem:[%s219 + $0x50] sm:$0xff]
      %v294 = vld [vmem:[%s219 + $0x60] sm:$0xff]
      %v295 = vld [vmem:[%s219 + $0x68] sm:$0xff]
      %v296 = vld [vmem:[%s219 + $0x78] sm:$0xff]
      %v297 = vld [vmem:[%s219 + $0x80] sm:$0xff]
      %v298 = vld [vmem:[%s219 + $0x90] sm:$0xff]
      %v299 = vld [vmem:[%s219 + $0x98] sm:$0xff]
      %v300 = vld [vmem:[%s219 + $0xa8] sm:$0xff]
      %v301 = vld [vmem:[%s219 + $0xb0] sm:$0xff]
      %v302 = vld [vmem:[%s219 + $0xc0] sm:$0xff]
      %v303 = vld [vmem:[%s219 + $0xc8] sm:$0xff]
      %v304 = vld [vmem:[%s219 + $0xd8] sm:$0xff]
      %v305 = vld [vmem:[%s219 + $0xe0] sm:$0xff]
      %v306 = vld [vmem:[%s219 + $0xf0] sm:$0xff]
      %v307 = vld [vmem:[%s219 + $0xf8] sm:$0xff]
      %v308 = vld [vmem:[%s219 + $0x108] sm:$0xff]
      %v309 = vld [vmem:[%s219 + $0x110] sm:$0xff]
      %v310 = vld [vmem:[%s219 + $0x120] sm:$0xff]
      %v311 = vld [vmem:[%s219 + $0x128] sm:$0xff]
      %v312 = vld [vmem:[%s219 + $0x138] sm:$0xff]
      %v313 = vld [vmem:[%s219 + $0x140] sm:$0xff]
      %v314 = vld [vmem:[%s219 + $0x150] sm:$0xff]
      %v315 = vld [vmem:[%s219 + $0x158] sm:$0xff]
      %v316 = vld [vmem:[%s219 + $0x168] sm:$0xff]
      %v317 = vld [vmem:[%s219 + $0x170] sm:$0xff]
      %v318 = vld [vmem:[#allocation2] sm:$0xff]
      %v319 = vld [vmem:[#allocation2 + $0x8] sm:$0xff]
      %v320 = vld [vmem:[#allocation2 + $0x10] sm:$0xff]
      %v321 = vld [vmem:[#allocation2 + $0x18] sm:$0xff]
      %v322 = vld [vmem:[#allocation2 + $0x20] sm:$0xff]
      %v323 = vld [vmem:[#allocation2 + $0x28] sm:$0xff]
      %v324 = vld [vmem:[#allocation2 + $0x30] sm:$0xff]
      %v325 = vld [vmem:[#allocation2 + $0x38] sm:$0xff]
      %v326 = vld [vmem:[#allocation2 + $0x40] sm:$0xff]
      %v327 = vld [vmem:[#allocation2 + $0x48] sm:$0xff]
      %v328 = vld [vmem:[#allocation2 + $0x50] sm:$0xff]
      %v329 = vld [vmem:[#allocation2 + $0x58] sm:$0xff]
      %v330 = vld [vmem:[#allocation2 + $0x60] sm:$0xff]
      %v331 = vld [vmem:[#allocation2 + $0x68] sm:$0xff]
      %v332 = vld [vmem:[#allocation2 + $0x70] sm:$0xff]
      %v333 = vld [vmem:[#allocation2 + $0x78] sm:$0xff]
      %v334 = vld [vmem:[#allocation2 + $0x80] sm:$0xff]
      %v335 = vld [vmem:[#allocation2 + $0x88] sm:$0xff]
      %v336 = vld [vmem:[#allocation2 + $0x90] sm:$0xff]
      %v337 = vld [vmem:[#allocation2 + $0x98] sm:$0xff]
      %v338 = vld [vmem:[#allocation2 + $0xa0] sm:$0xff]
      %v339 = vld [vmem:[#allocation2 + $0xa8] sm:$0xff]
      %v340 = vld [vmem:[#allocation2 + $0xb0] sm:$0xff]
      %v341 = vld [vmem:[#allocation2 + $0xb8] sm:$0xff]
      %v342 = vld [vmem:[#allocation2 + $0xc0] sm:$0xff]
      %v343 = vld [vmem:[#allocation2 + $0xc8] sm:$0xff]
      %v344 = vld [vmem:[#allocation2 + $0xd0] sm:$0xff]
      %v345 = vld [vmem:[#allocation2 + $0xd8] sm:$0xff]
      %v346 = vld [vmem:[#allocation2 + $0xe0] sm:$0xff]
      %v347 = vld [vmem:[#allocation2 + $0xe8] sm:$0xff]
      %v348 = vld [vmem:[#allocation2 + $0xf0] sm:$0xff]
      %v349 = vld [vmem:[#allocation2 + $0xf8] sm:$0xff]
      %vm350 = vcmask 31744
      %v352 = vsel %vm350, %v286, 0
      %v355 = vsel %vm350, %v287, 0
      %v358 = vsel %vm350, %v288, 0
      %v361 = vsel %vm350, %v289, 0
      %v364 = vsel %vm350, %v290, 0
      %v367 = vsel %vm350, %v291, 0
      %v370 = vsel %vm350, %v292, 0
      %v373 = vsel %vm350, %v293, 0
      %v376 = vsel %vm350, %v294, 0
      %v379 = vsel %vm350, %v295, 0
      %v382 = vsel %vm350, %v296, 0
      %v385 = vsel %vm350, %v297, 0
      %v388 = vsel %vm350, %v298, 0
      %v391 = vsel %vm350, %v299, 0
      %v394 = vsel %vm350, %v300, 0
      %v397 = vsel %vm350, %v301, 0
      %v400 = vsel %vm350, %v302, 0
      %v403 = vsel %vm350, %v303, 0
      %v406 = vsel %vm350, %v304, 0
      %v409 = vsel %vm350, %v305, 0
      %v412 = vsel %vm350, %v306, 0
      %v415 = vsel %vm350, %v307, 0
      %v418 = vsel %vm350, %v308, 0
      %v421 = vsel %vm350, %v309, 0
      %v424 = vsel %vm350, %v310, 0
      %v427 = vsel %vm350, %v311, 0
      %v430 = vsel %vm350, %v312, 0
      %v433 = vsel %vm350, %v313, 0
      %v436 = vsel %vm350, %v314, 0
      %v439 = vsel %vm350, %v315, 0
      %v442 = vsel %vm350, %v316, 0
      %v445 = vsel %vm350, %v317, 0
      %vm447 = vcmask 1043456
      %v449 = vsel %vm447, %v277, 0
      %451 = vmatprep.subr.mxu0 0.0
      %452 = vmatpush1.msra.mxu0 %v449
      %453 = vmatprep.subr.mxu0 0.0
      %454 = vmatpush1.msra.mxu0 0.0
      %455 = vmatprep.subr.mxu0 0.0
      %456 = vmatpush1.msra.mxu0 0.0
      %457 = vmatprep.subr.mxu0 0.0
      %458 = vmatpush1.msra.mxu0 0.0
      %459 = vmatprep.subr.mxu0 0.0
      %460 = vmatpush1.msra.mxu0 0.0
      %461 = vmatprep.subr.mxu0 0.0
      %462 = vmatpush1.msra.mxu0 0.0
      %463 = vmatprep.subr.mxu0 0.0
      %464 = vmatpush1.msra.mxu0 0.0
      %465 = vmatprep.subr.mxu0 0.0
      %466 = vmatpush1.msra.mxu0 0.0
      %467 = vmatprep.subr.mxu0 0.0
      %468 = vmatpush1.msra.mxu0 0.0
      %469 = vmatprep.subr.mxu0 0.0
      %470 = vmatpush1.msra.mxu0 0.0
      %471 = vmatprep.subr.mxu0 0.0
      %472 = vmatpush1.msra.mxu0 0.0
      %473 = vmatprep.subr.mxu0 0.0
      %474 = vmatpush1.msra.mxu0 0.0
      %475 = vmatprep.subr.mxu0 0.0
      %476 = vmatpush1.msra.mxu0 0.0
      %477 = vmatprep.subr.mxu0 0.0
      %478 = vmatpush1.msra.mxu0 0.0
      %479 = vmatprep.subr.mxu0 0.0
      %480 = vmatpush1.msra.mxu0 0.0
      %481 = vmatprep.subr.mxu0 0.0
      %482 = vmatpush1.msra.mxu0 0.0
      %483 = vmatprep.subr.mxu0 0.0
      %484 = vmatpush1.msra.mxu0 0.0
      %485 = vmatprep.subr.mxu0 0.0
      %486 = vmatpush1.msra.mxu0 0.0
      %487 = vmatprep.subr.mxu0 0.0
      %488 = vmatpush1.msra.mxu0 0.0
      %489 = vmatprep.subr.mxu0 0.0
      %490 = vmatpush1.msra.mxu0 0.0
      %491 = vmatprep.subr.mxu0 0.0
      %492 = vmatpush1.msra.mxu0 0.0
      %493 = vmatprep.subr.mxu0 0.0
      %494 = vmatpush1.msra.mxu0 0.0
      %495 = vmatprep.subr.mxu0 0.0
      %496 = vmatpush1.msra.mxu0 0.0
      %497 = vmatprep.subr.mxu0 0.0
      %498 = vmatpush1.msra.mxu0 0.0
      %499 = vmatprep.subr.mxu0 0.0
      %500 = vmatpush1.msra.mxu0 0.0
      %501 = vmatprep.subr.mxu0 0.0
      %502 = vmatpush1.msra.mxu0 0.0
      %503 = vmatprep.subr.mxu0 0.0
      %504 = vmatpush1.msra.mxu0 0.0
      %505 = vmatprep.subr.mxu0 0.0
      %506 = vmatpush1.msra.mxu0 0.0
      %507 = vmatprep.subr.mxu0 0.0
      %508 = vmatpush1.msra.mxu0 0.0
      %509 = vmatprep.subr.mxu0 0.0
      %510 = vmatpush1.msra.mxu0 0.0
      %511 = vmatprep.subr.mxu0 0.0
      %512 = vmatpush1.msra.mxu0 0.0
      %513 = vmatprep.subr.mxu0 0.0
      %514 = vmatpush1.msra.mxu0 0.0
      %515 = vmatprep.mubr.f32.mxu0 0.0
      %516 = vmatmul.mubr.f32.gmra.mrb[0].mxu0 %v352
      %v517 = vpop.f32.mrb[0].mxu0
      %v518 = vadd.f32 0.0, %v517
      %v519 = vpop.f32.mrb[0].mxu0
      %520 = vmatprep.mubr.f32.mxu0 0.0
      %521 = vmatmul.mubr.f32.gmra.mrb[0].mxu0 %v355
      %v522 = vpop.f32.mrb[0].mxu0
      %v523 = vadd.f32 0.0, %v522
      %v524 = vpop.f32.mrb[0].mxu0
      %525 = vmatprep.mubr.f32.mxu0 0.0
      %526 = vmatmul.mubr.f32.gmra.mrb[0].mxu0 %v358
      %v527 = vpop.f32.mrb[0].mxu0
      %v528 = vadd.f32 0.0, %v527
      %v529 = vpop.f32.mrb[0].mxu0
      %530 = vmatprep.mubr.f32.mxu0 0.0
      %531 = vmatmul.mubr.f32.gmra.mrb[0].mxu0 %v361
      %v532 = vpop.f32.mrb[0].mxu0
      %v533 = vadd.f32 0.0, %v532
      %v534 = vpop.f32.mrb[0].mxu0
      %535 = vmatprep.mubr.f32.mxu0 0.0
      %536 = vmatmul.mubr.f32.gmra.mrb[0].mxu0 %v364
      %v537 = vpop.f32.mrb[0].mxu0
      %v538 = vadd.f32 0.0, %v537
      %v539 = vpop.f32.mrb[0].mxu0
      %540 = vmatprep.mubr.f32.mxu0 0.0
      %541 = vmatmul.mubr.f32.gmra.mrb[0].mxu0 %v367
      %v542 = vpop.f32.mrb[0].mxu0
      %v543 = vadd.f32 0.0, %v542
      %v544 = vpop.f32.mrb[0].mxu0
      %545 = vmatprep.mubr.f32.mxu0 0.0
      %546 = vmatmul.mubr.f32.gmra.mrb[0].mxu0 %v370
      %v547 = vpop.f32.mrb[0].mxu0
      %v548 = vadd.f32 0.0, %v547
      %v549 = vpop.f32.mrb[0].mxu0
      %550 = vmatprep.mubr.f32.mxu0 0.0
      %551 = vmatmul.mubr.f32.gmra.mrb[0].mxu0 %v373
      %v552 = vpop.f32.mrb[0].mxu0
      %v553 = vadd.f32 0.0, %v552
      %v554 = vpop.f32.mrb[0].mxu0
      %555 = vmatprep.mubr.f32.mxu0 0.0
      %556 = vmatmul.mubr.f32.gmra.mrb[0].mxu0 %v376
      %v557 = vpop.f32.mrb[0].mxu0
      %v558 = vadd.f32 0.0, %v557
      %v559 = vpop.f32.mrb[0].mxu0
      %560 = vmatprep.mubr.f32.mxu0 0.0
      %561 = vmatmul.mubr.f32.gmra.mrb[0].mxu0 %v379
      %v562 = vpop.f32.mrb[0].mxu0
      %v563 = vadd.f32 0.0, %v562
      %v564 = vpop.f32.mrb[0].mxu0
      %565 = vmatprep.mubr.f32.mxu0 0.0
      %566 = vmatmul.mubr.f32.gmra.mrb[0].mxu0 %v382
      %v567 = vpop.f32.mrb[0].mxu0
      %v568 = vadd.f32 0.0, %v567
      %v569 = vpop.f32.mrb[0].mxu0
      %570 = vmatprep.mubr.f32.mxu0 0.0
      %571 = vmatmul.mubr.f32.gmra.mrb[0].mxu0 %v385
      %v572 = vpop.f32.mrb[0].mxu0
      %v573 = vadd.f32 0.0, %v572
      %v574 = vpop.f32.mrb[0].mxu0
      %575 = vmatprep.mubr.f32.mxu0 0.0
      %576 = vmatmul.mubr.f32.gmra.mrb[0].mxu0 %v388
      %v577 = vpop.f32.mrb[0].mxu0
      %v578 = vadd.f32 0.0, %v577
      %v579 = vpop.f32.mrb[0].mxu0
      %580 = vmatprep.mubr.f32.mxu0 0.0
      %581 = vmatmul.mubr.f32.gmra.mrb[0].mxu0 %v391
      %v582 = vpop.f32.mrb[0].mxu0
      %v583 = vadd.f32 0.0, %v582
      %v584 = vpop.f32.mrb[0].mxu0
      %585 = vmatprep.mubr.f32.mxu0 0.0
      %586 = vmatmul.mubr.f32.gmra.mrb[0].mxu0 %v394
      %v587 = vpop.f32.mrb[0].mxu0
      %v588 = vadd.f32 0.0, %v587
      %v589 = vpop.f32.mrb[0].mxu0
      %590 = vmatprep.mubr.f32.mxu0 0.0
      %591 = vmatmul.mubr.f32.gmra.mrb[0].mxu0 %v397
      %v592 = vpop.f32.mrb[0].mxu0
      %v593 = vadd.f32 0.0, %v592
      %v594 = vpop.f32.mrb[0].mxu0
      %595 = vmatprep.mubr.f32.mxu0 0.0
      %596 = vmatmul.mubr.f32.gmra.mrb[0].mxu0 %v400
      %v597 = vpop.f32.mrb[0].mxu0
      %v598 = vadd.f32 0.0, %v597
      %v599 = vpop.f32.mrb[0].mxu0
      %600 = vmatprep.mubr.f32.mxu0 0.0
      %601 = vmatmul.mubr.f32.gmra.mrb[0].mxu0 %v403
      %v602 = vpop.f32.mrb[0].mxu0
      %v603 = vadd.f32 0.0, %v602
      %v604 = vpop.f32.mrb[0].mxu0
      %605 = vmatprep.mubr.f32.mxu0 0.0
      %606 = vmatmul.mubr.f32.gmra.mrb[0].mxu0 %v406
      %v607 = vpop.f32.mrb[0].mxu0
      %v608 = vadd.f32 0.0, %v607
      %v609 = vpop.f32.mrb[0].mxu0
      %610 = vmatprep.mubr.f32.mxu0 0.0
      %611 = vmatmul.mubr.f32.gmra.mrb[0].mxu0 %v409
      %v612 = vpop.f32.mrb[0].mxu0
      %v613 = vadd.f32 0.0, %v612
      %v614 = vpop.f32.mrb[0].mxu0
      %615 = vmatprep.mubr.f32.mxu0 0.0
      %616 = vmatmul.mubr.f32.gmra.mrb[0].mxu0 %v412
      %v617 = vpop.f32.mrb[0].mxu0
      %v618 = vadd.f32 0.0, %v617
      %v619 = vpop.f32.mrb[0].mxu0
      %620 = vmatprep.mubr.f32.mxu0 0.0
      %621 = vmatmul.mubr.f32.gmra.mrb[0].mxu0 %v415
      %v622 = vpop.f32.mrb[0].mxu0
      %v623 = vadd.f32 0.0, %v622
      %v624 = vpop.f32.mrb[0].mxu0
      %625 = vmatprep.mubr.f32.mxu0 0.0
      %626 = vmatmul.mubr.f32.gmra.mrb[0].mxu0 %v418
      %v627 = vpop.f32.mrb[0].mxu0
      %v628 = vadd.f32 0.0, %v627
      %v629 = vpop.f32.mrb[0].mxu0
      %630 = vmatprep.mubr.f32.mxu0 0.0
      %631 = vmatmul.mubr.f32.gmra.mrb[0].mxu0 %v421
      %v632 = vpop.f32.mrb[0].mxu0
      %v633 = vadd.f32 0.0, %v632
      %v634 = vpop.f32.mrb[0].mxu0
      %635 = vmatprep.mubr.f32.mxu0 0.0
      %636 = vmatmul.mubr.f32.gmra.mrb[0].mxu0 %v424
      %v637 = vpop.f32.mrb[0].mxu0
      %v638 = vadd.f32 0.0, %v637
      %v639 = vpop.f32.mrb[0].mxu0
      %640 = vmatprep.mubr.f32.mxu0 0.0
      %641 = vmatmul.mubr.f32.gmra.mrb[0].mxu0 %v427
      %v642 = vpop.f32.mrb[0].mxu0
      %v643 = vadd.f32 0.0, %v642
      %v644 = vpop.f32.mrb[0].mxu0
      %645 = vmatprep.mubr.f32.mxu0 0.0
      %646 = vmatmul.mubr.f32.gmra.mrb[0].mxu0 %v430
      %v647 = vpop.f32.mrb[0].mxu0
      %v648 = vadd.f32 0.0, %v647
      %v649 = vpop.f32.mrb[0].mxu0
      %650 = vmatprep.mubr.f32.mxu0 0.0
      %651 = vmatmul.mubr.f32.gmra.mrb[0].mxu0 %v433
      %v652 = vpop.f32.mrb[0].mxu0
      %v653 = vadd.f32 0.0, %v652
      %v654 = vpop.f32.mrb[0].mxu0
      %655 = vmatprep.mubr.f32.mxu0 0.0
      %656 = vmatmul.mubr.f32.gmra.mrb[0].mxu0 %v436
      %v657 = vpop.f32.mrb[0].mxu0
      %v658 = vadd.f32 0.0, %v657
      %v659 = vpop.f32.mrb[0].mxu0
      %660 = vmatprep.mubr.f32.mxu0 0.0
      %661 = vmatmul.mubr.f32.gmra.mrb[0].mxu0 %v439
      %v662 = vpop.f32.mrb[0].mxu0
      %v663 = vadd.f32 0.0, %v662
      %v664 = vpop.f32.mrb[0].mxu0
      %665 = vmatprep.mubr.f32.mxu0 0.0
      %666 = vmatmul.mubr.f32.gmra.mrb[0].mxu0 %v442
      %v667 = vpop.f32.mrb[0].mxu0
      %v668 = vadd.f32 0.0, %v667
      %v669 = vpop.f32.mrb[0].mxu0
      %670 = vmatprep.mubr.f32.mxu0 0.0
      %671 = vmatmul.mubr.f32.gmra.mrb[0].mxu0 %v445
      %v672 = vpop.f32.mrb[0].mxu0
      %v673 = vadd.f32 0.0, %v672
      %v674 = vpop.f32.mrb[0].mxu0
      %675 = vdwg.mxu0
      %v676 = vadd.f32 %v318, %v518
      %v677 = vadd.f32 %v319, %v523
      %v678 = vadd.f32 %v320, %v528
      %v679 = vadd.f32 %v321, %v533
      %v680 = vadd.f32 %v322, %v538
      %v681 = vadd.f32 %v323, %v543
      %v682 = vadd.f32 %v324, %v548
      %v683 = vadd.f32 %v325, %v553
      %v684 = vadd.f32 %v326, %v558
      %v685 = vadd.f32 %v327, %v563
      %v686 = vadd.f32 %v328, %v568
      %v687 = vadd.f32 %v329, %v573
      %v688 = vadd.f32 %v330, %v578
      %v689 = vadd.f32 %v331, %v583
      %v690 = vadd.f32 %v332, %v588
      %v691 = vadd.f32 %v333, %v593
      %v692 = vadd.f32 %v334, %v598
      %v693 = vadd.f32 %v335, %v603
      %v694 = vadd.f32 %v336, %v608
      %v695 = vadd.f32 %v337, %v613
      %v696 = vadd.f32 %v338, %v618
      %v697 = vadd.f32 %v339, %v623
      %v698 = vadd.f32 %v340, %v628
      %v699 = vadd.f32 %v341, %v633
      %v700 = vadd.f32 %v342, %v638
      %v701 = vadd.f32 %v343, %v643
      %v702 = vadd.f32 %v344, %v648
      %v703 = vadd.f32 %v345, %v653
      %v704 = vadd.f32 %v346, %v658
      %v705 = vadd.f32 %v347, %v663
      %v706 = vadd.f32 %v348, %v668
      %v707 = vadd.f32 %v349, %v673
      %708 = vst.msk [vmem:[#allocation2] sm:$0xff] %vm226, %v676
      %709 = vst.msk [vmem:[#allocation2 + $0x8] sm:$0xff] %vm226, %v677
      %710 = vst.msk [vmem:[#allocation2 + $0x10] sm:$0xff] %vm226, %v678
      %711 = vst.msk [vmem:[#allocation2 + $0x18] sm:$0xff] %vm226, %v679
      %712 = vst.msk [vmem:[#allocation2 + $0x20] sm:$0xff] %vm226, %v680
      %713 = vst.msk [vmem:[#allocation2 + $0x28] sm:$0xff] %vm226, %v681
      %714 = vst.msk [vmem:[#allocation2 + $0x30] sm:$0xff] %vm226, %v682
      %715 = vst.msk [vmem:[#allocation2 + $0x38] sm:$0xff] %vm226, %v683
      %716 = vst.msk [vmem:[#allocation2 + $0x40] sm:$0xff] %vm226, %v684
      %717 = vst.msk [vmem:[#allocation2 + $0x48] sm:$0xff] %vm226, %v685
      %718 = vst.msk [vmem:[#allocation2 + $0x50] sm:$0xff] %vm226, %v686
      %719 = vst.msk [vmem:[#allocation2 + $0x58] sm:$0xff] %vm226, %v687
      %720 = vst.msk [vmem:[#allocation2 + $0x60] sm:$0xff] %vm226, %v688
      %721 = vst.msk [vmem:[#allocation2 + $0x68] sm:$0xff] %vm226, %v689
      %722 = vst.msk [vmem:[#allocation2 + $0x70] sm:$0xff] %vm226, %v690
      %723 = vst.msk [vmem:[#allocation2 + $0x78] sm:$0xff] %vm226, %v691
      %724 = vst.msk [vmem:[#allocation2 + $0x80] sm:$0xff] %vm226, %v692
      %725 = vst.msk [vmem:[#allocation2 + $0x88] sm:$0xff] %vm226, %v693
      %726 = vst.msk [vmem:[#allocation2 + $0x90] sm:$0xff] %vm226, %v694
      %727 = vst.msk [vmem:[#allocation2 + $0x98] sm:$0xff] %vm226, %v695
      %728 = vst.msk [vmem:[#allocation2 + $0xa0] sm:$0xff] %vm226, %v696
      %729 = vst.msk [vmem:[#allocation2 + $0xa8] sm:$0xff] %vm226, %v697
      %730 = vst.msk [vmem:[#allocation2 + $0xb0] sm:$0xff] %vm226, %v698
      %731 = vst.msk [vmem:[#allocation2 + $0xb8] sm:$0xff] %vm226, %v699
      %732 = vst.msk [vmem:[#allocation2 + $0xc0] sm:$0xff] %vm226, %v700
      %733 = vst.msk [vmem:[#allocation2 + $0xc8] sm:$0xff] %vm226, %v701
      %734 = vst.msk [vmem:[#allocation2 + $0xd0] sm:$0xff] %vm226, %v702
      %735 = vst.msk [vmem:[#allocation2 + $0xd8] sm:$0xff] %vm226, %v703
      %736 = vst.msk [vmem:[#allocation2 + $0xe0] sm:$0xff] %vm226, %v704
      %737 = vst.msk [vmem:[#allocation2 + $0xe8] sm:$0xff] %vm226, %v705
      %738 = vst.msk [vmem:[#allocation2 + $0xf0] sm:$0xff] %vm226, %v706
      %739 = vst.msk [vmem:[#allocation2 + $0xf8] sm:$0xff] %vm226, %v707
      %v740 = vld [vmem:[%s219 + $0x1] sm:$0xff]
      %v741 = vld [vmem:[%s219 + $0x9] sm:$0xff]
      %v742 = vld [vmem:[%s219 + $0x19] sm:$0xff]
      %v743 = vld [vmem:[%s219 + $0x21] sm:$0xff]
      %v744 = vld [vmem:[%s219 + $0x31] sm:$0xff]
      %v745 = vld [vmem:[%s219 + $0x39] sm:$0xff]
      %v746 = vld [vmem:[%s219 + $0x49] sm:$0xff]
      %v747 = vld [vmem:[%s219 + $0x51] sm:$0xff]
      %v748 = vld [vmem:[%s219 + $0x61] sm:$0xff]
      %v749 = vld [vmem:[%s219 + $0x69] sm:$0xff]
      %v750 = vld [vmem:[%s219 + $0x79] sm:$0xff]
      %v751 = vld [vmem:[%s219 + $0x81] sm:$0xff]
      %v752 = vld [vmem:[%s219 + $0x91] sm:$0xff]
      %v753 = vld [vmem:[%s219 + $0x99] sm:$0xff]
      %v754 = vld [vmem:[%s219 + $0xa9] sm:$0xff]
      %v755 = vld [vmem:[%s219 + $0xb1] sm:$0xff]
      %v756 = vld [vmem:[%s219 + $0xc1] sm:$0xff]
      %v757 = vld [vmem:[%s219 + $0xc9] sm:$0xff]
      %v758 = vld [vmem:[%s219 + $0xd9] sm:$0xff]
      %v759 = vld [vmem:[%s219 + $0xe1] sm:$0xff]
      %v760 = vld [vmem:[%s219 + $0xf1] sm:$0xff]
      %v761 = vld [vmem:[%s219 + $0xf9] sm:$0xff]
      %v762 = vld [vmem:[%s219 + $0x109] sm:$0xff]
      %v763 = vld [vmem:[%s219 + $0x111] sm:$0xff]
      %v764 = vld [vmem:[%s219 + $0x121] sm:$0xff]
      %v765 = vld [vmem:[%s219 + $0x129] sm:$0xff]
      %v766 = vld [vmem:[%s219 + $0x139] sm:$0xff]
      %v767 = vld [vmem:[%s219 + $0x141] sm:$0xff]
      %v768 = vld [vmem:[%s219 + $0x151] sm:$0xff]
      %v769 = vld [vmem:[%s219 + $0x159] sm:$0xff]
      %v770 = vld [vmem:[%s219 + $0x169] sm:$0xff]
      %v771 = vld [vmem:[%s219 + $0x171] sm:$0xff]
      %v772 = vld [vmem:[#allocation2] sm:$0xff]
      %v773 = vld [vmem:[#allocation2 + $0x8] sm:$0xff]
      %v774 = vld [vmem:[#allocation2 + $0x10] sm:$0xff]
      %v775 = vld [vmem:[#allocation2 + $0x18] sm:$0xff]
      %v776 = vld [vmem:[#allocation2 + $0x20] sm:$0xff]
      %v777 = vld [vmem:[#allocation2 + $0x28] sm:$0xff]
      %v778 = vld [vmem:[#allocation2 + $0x30] sm:$0xff]
      %v779 = vld [vmem:[#allocation2 + $0x38] sm:$0xff]
      %v780 = vld [vmem:[#allocation2 + $0x40] sm:$0xff]
      %v781 = vld [vmem:[#allocation2 + $0x48] sm:$0xff]
      %v782 = vld [vmem:[#allocation2 + $0x50] sm:$0xff]
      %v783 = vld [vmem:[#allocation2 + $0x58] sm:$0xff]
      %v784 = vld [vmem:[#allocation2 + $0x60] sm:$0xff]
      %v785 = vld [vmem:[#allocation2 + $0x68] sm:$0xff]
      %v786 = vld [vmem:[#allocation2 + $0x70] sm:$0xff]
      %v787 = vld [vmem:[#allocation2 + $0x78] sm:$0xff]
      %v788 = vld [vmem:[#allocation2 + $0x80] sm:$0xff]
      %v789 = vld [vmem:[#allocation2 + $0x88] sm:$0xff]
      %v790 = vld [vmem:[#allocation2 + $0x90] sm:$0xff]
      %v791 = vld [vmem:[#allocation2 + $0x98] sm:$0xff]
      %v792 = vld [vmem:[#allocation2 + $0xa0] sm:$0xff]
      %v793 = vld [vmem:[#allocation2 + $0xa8] sm:$0xff]
      %v794 = vld [vmem:[#allocation2 + $0xb0] sm:$0xff]
      %v795 = vld [vmem:[#allocation2 + $0xb8] sm:$0xff]
      %v796 = vld [vmem:[#allocation2 + $0xc0] sm:$0xff]
      %v797 = vld [vmem:[#allocation2 + $0xc8] sm:$0xff]
      %v798 = vld [vmem:[#allocation2 + $0xd0] sm:$0xff]
      %v799 = vld [vmem:[#allocation2 + $0xd8] sm:$0xff]
      %v800 = vld [vmem:[#allocation2 + $0xe0] sm:$0xff]
      %v801 = vld [vmem:[#allocation2 + $0xe8] sm:$0xff]
      %v802 = vld [vmem:[#allocation2 + $0xf0] sm:$0xff]
      %v803 = vld [vmem:[#allocation2 + $0xf8] sm:$0xff]
      %v805 = vsel %vm350, %v740, 0
      %v808 = vsel %vm350, %v741, 0
      %v811 = vsel %vm350, %v742, 0
      %v814 = vsel %vm350, %v743, 0
      %v817 = vsel %vm350, %v744, 0
      %v820 = vsel %vm350, %v745, 0
      %v823 = vsel %vm350, %v746, 0
      %v826 = vsel %vm350, %v747, 0
      %v829 = vsel %vm350, %v748, 0
      %v832 = vsel %vm350, %v749, 0
      %v835 = vsel %vm350, %v750, 0
      %v838 = vsel %vm350, %v751, 0
      %v841 = vsel %vm350, %v752, 0
      %v844 = vsel %vm350, %v753, 0
      %v847 = vsel %vm350, %v754, 0
      %v850 = vsel %vm350, %v755, 0
      %v853 = vsel %vm350, %v756, 0
      %v856 = vsel %vm350, %v757, 0
      %v859 = vsel %vm350, %v758, 0
      %v862 = vsel %vm350, %v759, 0
      %v865 = vsel %vm350, %v760, 0
      %v868 = vsel %vm350, %v761, 0
      %v871 = vsel %vm350, %v762, 0
      %v874 = vsel %vm350, %v763, 0
      %v877 = vsel %vm350, %v764, 0
      %v880 = vsel %vm350, %v765, 0
      %v883 = vsel %vm350, %v766, 0
      %v886 = vsel %vm350, %v767, 0
      %v889 = vsel %vm350, %v768, 0
      %v892 = vsel %vm350, %v769, 0
      %v895 = vsel %vm350, %v770, 0
      %v898 = vsel %vm350, %v771, 0
      %v901 = vsel %vm447, %v278, 0
      %903 = vmatprep.subr.mxu0 0.0
      %904 = vmatpush1.msra.mxu0 %v901
      %905 = vmatprep.subr.mxu0 0.0
      %906 = vmatpush1.msra.mxu0 0.0
      %907 = vmatprep.subr.mxu0 0.0
      %908 = vmatpush1.msra.mxu0 0.0
      %909 = vmatprep.subr.mxu0 0.0
      %910 = vmatpush1.msra.mxu0 0.0
      %911 = vmatprep.subr.mxu0 0.0
      %912 = vmatpush1.msra.mxu0 0.0
      %913 = vmatprep.subr.mxu0 0.0
      %914 = vmatpush1.msra.mxu0 0.0
      %915 = vmatprep.subr.mxu0 0.0
      %916 = vmatpush1.msra.mxu0 0.0
      %917 = vmatprep.subr.mxu0 0.0
      %918 = vmatpush1.msra.mxu0 0.0
      %919 = vmatprep.subr.mxu0 0.0
      %920 = vmatpush1.msra.mxu0 0.0
      %921 = vmatprep.subr.mxu0 0.0
      %922 = vmatpush1.msra.mxu0 0.0
      %923 = vmatprep.subr.mxu0 0.0
      %924 = vmatpush1.msra.mxu0 0.0
      %925 = vmatprep.subr.mxu0 0.0
      %926 = vmatpush1.msra.mxu0 0.0
      %927 = vmatprep.subr.mxu0 0.0
      %928 = vmatpush1.msra.mxu0 0.0
      %929 = vmatprep.subr.mxu0 0.0
      %930 = vmatpush1.msra.mxu0 0.0
      %931 = vmatprep.subr.mxu0 0.0
      %932 = vmatpush1.msra.mxu0 0.0
      %933 = vmatprep.subr.mxu0 0.0
      %934 = vmatpush1.msra.mxu0 0.0
      %935 = vmatprep.subr.mxu0 0.0
      %936 = vmatpush1.msra.mxu0 0.0
      %937 = vmatprep.subr.mxu0 0.0
      %938 = vmatpush1.msra.mxu0 0.0
      %939 = vmatprep.subr.mxu0 0.0
      %940 = vmatpush1.msra.mxu0 0.0
      %941 = vmatprep.subr.mxu0 0.0
      %942 = vmatpush1.msra.mxu0 0.0
      %943 = vmatprep.subr.mxu0 0.0
      %944 = vmatpush1.msra.mxu0 0.0
      %945 = vmatprep.subr.mxu0 0.0
      %946 = vmatpush1.msra.mxu0 0.0
      %947 = vmatprep.subr.mxu0 0.0
      %948 = vmatpush1.msra.mxu0 0.0
      %949 = vmatprep.subr.mxu0 0.0
      %950 = vmatpush1.msra.mxu0 0.0
      %951 = vmatprep.subr.mxu0 0.0
      %952 = vmatpush1.msra.mxu0 0.0
      %953 = vmatprep.subr.mxu0 0.0
      %954 = vmatpush1.msra.mxu0 0.0
      %955 = vmatprep.subr.mxu0 0.0
      %956 = vmatpush1.msra.mxu0 0.0
      %957 = vmatprep.subr.mxu0 0.0
      %958 = vmatpush1.msra.mxu0 0.0
      %959 = vmatprep.subr.mxu0 0.0
      %960 = vmatpush1.msra.mxu0 0.0
      %961 = vmatprep.subr.mxu0 0.0
      %962 = vmatpush1.msra.mxu0 0.0
      %963 = vmatprep.subr.mxu0 0.0
      %964 = vmatpush1.msra.mxu0 0.0
      %965 = vmatprep.subr.mxu0 0.0
      %966 = vmatpush1.msra.mxu0 0.0
      %967 = vmatprep.mubr.f32.mxu0 0.0
      %968 = vmatmul.mubr.f32.gmra.mrb[0].mxu0 %v805
      %v969 = vpop.f32.mrb[0].mxu0
      %v970 = vadd.f32 0.0, %v969
      %v971 = vpop.f32.mrb[0].mxu0
      %972 = vmatprep.mubr.f32.mxu0 0.0
      %973 = vmatmul.mubr.f32.gmra.mrb[0].mxu0 %v808
      %v974 = vpop.f32.mrb[0].mxu0
      %v975 = vadd.f32 0.0, %v974
      %v976 = vpop.f32.mrb[0].mxu0
      %977 = vmatprep.mubr.f32.mxu0 0.0
      %978 = vmatmul.mubr.f32.gmra.mrb[0].mxu0 %v811
      %v979 = vpop.f32.mrb[0].mxu0
      %v980 = vadd.f32 0.0, %v979
      %v981 = vpop.f32.mrb[0].mxu0
      %982 = vmatprep.mubr.f32.mxu0 0.0
      %983 = vmatmul.mubr.f32.gmra.mrb[0].mxu0 %v814
      %v984 = vpop.f32.mrb[0].mxu0
      %v985 = vadd.f32 0.0, %v984
      %v986 = vpop.f32.mrb[0].mxu0
      %987 = vmatprep.mubr.f32.mxu0 0.0
      %988 = vmatmul.mubr.f32.gmra.mrb[0].mxu0 %v817
      %v989 = vpop.f32.mrb[0].mxu0
      %v990 = vadd.f32 0.0, %v989
      %v991 = vpop.f32.mrb[0].mxu0
      %992 = vmatprep.mubr.f32.mxu0 0.0
      %993 = vmatmul.mubr.f32.gmra.mrb[0].mxu0 %v820
      %v994 = vpop.f32.mrb[0].mxu0
      %v995 = vadd.f32 0.0, %v994
      %v996 = vpop.f32.mrb[0].mxu0
      %997 = vmatprep.mubr.f32.mxu0 0.0
      %998 = vmatmul.mubr.f32.gmra.mrb[0].mxu0 %v823
      %v999 = vpop.f32.mrb[0].mxu0
      %v1000 = vadd.f32 0.0, %v999
      %v1001 = vpop.f32.mrb[0].mxu0
      %1002 = vmatprep.mubr.f32.mxu0 0.0
      %1003 = vmatmul.mubr.f32.gmra.mrb[0].mxu0 %v826
      %v1004 = vpop.f32.mrb[0].mxu0
      %v1005 = vadd.f32 0.0, %v1004
      %v1006 = vpop.f32.mrb[0].mxu0
      %1007 = vmatprep.mubr.f32.mxu0 0.0
      %1008 = vmatmul.mubr.f32.gmra.mrb[0].mxu0 %v829
      %v1009 = vpop.f32.mrb[0].mxu0
      %v1010 = vadd.f32 0.0, %v1009
      %v1011 = vpop.f32.mrb[0].mxu0
      %1012 = vmatprep.mubr.f32.mxu0 0.0
      %1013 = vmatmul.mubr.f32.gmra.mrb[0].mxu0 %v832
      %v1014 = vpop.f32.mrb[0].mxu0
      %v1015 = vadd.f32 0.0, %v1014
      %v1016 = vpop.f32.mrb[0].mxu0
      %1017 = vmatprep.mubr.f32.mxu0 0.0
      %1018 = vmatmul.mubr.f32.gmra.mrb[0].mxu0 %v835
      %v1019 = vpop.f32.mrb[0].mxu0
      %v1020 = vadd.f32 0.0, %v1019
      %v1021 = vpop.f32.mrb[0].mxu0
      %1022 = vmatprep.mubr.f32.mxu0 0.0
      %1023 = vmatmul.mubr.f32.gmra.mrb[0].mxu0 %v838
      %v1024 = vpop.f32.mrb[0].mxu0
      %v1025 = vadd.f32 0.0, %v1024
      %v1026 = vpop.f32.mrb[0].mxu0
      %1027 = vmatprep.mubr.f32.mxu0 0.0
      %1028 = vmatmul.mubr.f32.gmra.mrb[0].mxu0 %v841
      %v1029 = vpop.f32.mrb[0].mxu0
      %v1030 = vadd.f32 0.0, %v1029
      %v1031 = vpop.f32.mrb[0].mxu0
      %1032 = vmatprep.mubr.f32.mxu0 0.0
      %1033 = vmatmul.mubr.f32.gmra.mrb[0].mxu0 %v844
      %v1034 = vpop.f32.mrb[0].mxu0
      %v1035 = vadd.f32 0.0, %v1034
      %v1036 = vpop.f32.mrb[0].mxu0
      %1037 = vmatprep.mubr.f32.mxu0 0.0
      %1038 = vmatmul.mubr.f32.gmra.mrb[0].mxu0 %v847
      %v1039 = vpop.f32.mrb[0].mxu0
      %v1040 = vadd.f32 0.0, %v1039
      %v1041 = vpop.f32.mrb[0].mxu0
      %1042 = vmatprep.mubr.f32.mxu0 0.0
      %1043 = vmatmul.mubr.f32.gmra.mrb[0].mxu0 %v850
      %v1044 = vpop.f32.mrb[0].mxu0
      %v1045 = vadd.f32 0.0, %v1044
      %v1046 = vpop.f32.mrb[0].mxu0
      %1047 = vmatprep.mubr.f32.mxu0 0.0
      %1048 = vmatmul.mubr.f32.gmra.mrb[0].mxu0 %v853
      %v1049 = vpop.f32.mrb[0].mxu0
      %v1050 = vadd.f32 0.0, %v1049
      %v1051 = vpop.f32.mrb[0].mxu0
      %1052 = vmatprep.mubr.f32.mxu0 0.0
      %1053 = vmatmul.mubr.f32.gmra.mrb[0].mxu0 %v856
      %v1054 = vpop.f32.mrb[0].mxu0
      %v1055 = vadd.f32 0.0, %v1054
      %v1056 = vpop.f32.mrb[0].mxu0
      %1057 = vmatprep.mubr.f32.mxu0 0.0
      %1058 = vmatmul.mubr.f32.gmra.mrb[0].mxu0 %v859
      %v1059 = vpop.f32.mrb[0].mxu0
      %v1060 = vadd.f32 0.0, %v1059
      %v1061 = vpop.f32.mrb[0].mxu0
      %1062 = vmatprep.mubr.f32.mxu0 0.0
      %1063 = vmatmul.mubr.f32.gmra.mrb[0].mxu0 %v862
      %v1064 = vpop.f32.mrb[0].mxu0
      %v1065 = vadd.f32 0.0, %v1064
      %v1066 = vpop.f32.mrb[0].mxu0
      %1067 = vmatprep.mubr.f32.mxu0 0.0
      %1068 = vmatmul.mubr.f32.gmra.mrb[0].mxu0 %v865
      %v1069 = vpop.f32.mrb[0].mxu0
      %v1070 = vadd.f32 0.0, %v1069
      %v1071 = vpop.f32.mrb[0].mxu0
      %1072 = vmatprep.mubr.f32.mxu0 0.0
      %1073 = vmatmul.mubr.f32.gmra.mrb[0].mxu0 %v868
      %v1074 = vpop.f32.mrb[0].mxu0
      %v1075 = vadd.f32 0.0, %v1074
      %v1076 = vpop.f32.mrb[0].mxu0
      %1077 = vmatprep.mubr.f32.mxu0 0.0
      %1078 = vmatmul.mubr.f32.gmra.mrb[0].mxu0 %v871
      %v1079 = vpop.f32.mrb[0].mxu0
      %v1080 = vadd.f32 0.0, %v1079
      %v1081 = vpop.f32.mrb[0].mxu0
      %1082 = vmatprep.mubr.f32.mxu0 0.0
      %1083 = vmatmul.mubr.f32.gmra.mrb[0].mxu0 %v874
      %v1084 = vpop.f32.mrb[0].mxu0
      %v1085 = vadd.f32 0.0, %v1084
      %v1086 = vpop.f32.mrb[0].mxu0
      %1087 = vmatprep.mubr.f32.mxu0 0.0
      %1088 = vmatmul.mubr.f32.gmra.mrb[0].mxu0 %v877
      %v1089 = vpop.f32.mrb[0].mxu0
      %v1090 = vadd.f32 0.0, %v1089
      %v1091 = vpop.f32.mrb[0].mxu0
      %1092 = vmatprep.mubr.f32.mxu0 0.0
      %1093 = vmatmul.mubr.f32.gmra.mrb[0].mxu0 %v880
      %v1094 = vpop.f32.mrb[0].mxu0
      %v1095 = vadd.f32 0.0, %v1094
      %v1096 = vpop.f32.mrb[0].mxu0
      %1097 = vmatprep.mubr.f32.mxu0 0.0
      %1098 = vmatmul.mubr.f32.gmra.mrb[0].mxu0 %v883
      %v1099 = vpop.f32.mrb[0].mxu0
      %v1100 = vadd.f32 0.0, %v1099
      %v1101 = vpop.f32.mrb[0].mxu0
      %1102 = vmatprep.mubr.f32.mxu0 0.0
      %1103 = vmatmul.mubr.f32.gmra.mrb[0].mxu0 %v886
      %v1104 = vpop.f32.mrb[0].mxu0
      %v1105 = vadd.f32 0.0, %v1104
      %v1106 = vpop.f32.mrb[0].mxu0
      %1107 = vmatprep.mubr.f32.mxu0 0.0
      %1108 = vmatmul.mubr.f32.gmra.mrb[0].mxu0 %v889
      %v1109 = vpop.f32.mrb[0].mxu0
      %v1110 = vadd.f32 0.0, %v1109
      %v1111 = vpop.f32.mrb[0].mxu0
      %1112 = vmatprep.mubr.f32.mxu0 0.0
      %1113 = vmatmul.mubr.f32.gmra.mrb[0].mxu0 %v892
      %v1114 = vpop.f32.mrb[0].mxu0
      %v1115 = vadd.f32 0.0, %v1114
      %v1116 = vpop.f32.mrb[0].mxu0
      %1117 = vmatprep.mubr.f32.mxu0 0.0
      %1118 = vmatmul.mubr.f32.gmra.mrb[0].mxu0 %v895
      %v1119 = vpop.f32.mrb[0].mxu0
      %v1120 = vadd.f32 0.0, %v1119
      %v1121 = vpop.f32.mrb[0].mxu0
      %1122 = vmatprep.mubr.f32.mxu0 0.0
      %1123 = vmatmul.mubr.f32.gmra.mrb[0].mxu0 %v898
      %v1124 = vpop.f32.mrb[0].mxu0
      %v1125 = vadd.f32 0.0, %v1124
      %v1126 = vpop.f32.mrb[0].mxu0
      %1127 = vdwg.mxu0
      %v1128 = vadd.f32 %v772, %v970
      %v1129 = vadd.f32 %v773, %v975
      %v1130 = vadd.f32 %v774, %v980
      %v1131 = vadd.f32 %v775, %v985
      %v1132 = vadd.f32 %v776, %v990
      %v1133 = vadd.f32 %v777, %v995
      %v1134 = vadd.f32 %v778, %v1000
      %v1135 = vadd.f32 %v779, %v1005
      %v1136 = vadd.f32 %v780, %v1010
      %v1137 = vadd.f32 %v781, %v1015
      %v1138 = vadd.f32 %v782, %v1020
      %v1139 = vadd.f32 %v783, %v1025
      %v1140 = vadd.f32 %v784, %v1030
      %v1141 = vadd.f32 %v785, %v1035
      %v1142 = vadd.f32 %v786, %v1040
      %v1143 = vadd.f32 %v787, %v1045
      %v1144 = vadd.f32 %v788, %v1050
      %v1145 = vadd.f32 %v789, %v1055
      %v1146 = vadd.f32 %v790, %v1060
      %v1147 = vadd.f32 %v791, %v1065
      %v1148 = vadd.f32 %v792, %v1070
      %v1149 = vadd.f32 %v793, %v1075
      %v1150 = vadd.f32 %v794, %v1080
      %v1151 = vadd.f32 %v795, %v1085
      %v1152 = vadd.f32 %v796, %v1090
      %v1153 = vadd.f32 %v797, %v1095
      %v1154 = vadd.f32 %v798, %v1100
      %v1155 = vadd.f32 %v799, %v1105
      %v1156 = vadd.f32 %v800, %v1110
      %v1157 = vadd.f32 %v801, %v1115
      %v1158 = vadd.f32 %v802, %v1120
      %v1159 = vadd.f32 %v803, %v1125
      %1160 = vst.msk [vmem:[#allocation2] sm:$0xff] %vm226, %v1128
      %1161 = vst.msk [vmem:[#allocation2 + $0x8] sm:$0xff] %vm226, %v1129
      %1162 = vst.msk [vmem:[#allocation2 + $0x10] sm:$0xff] %vm226, %v1130
      %1163 = vst.msk [vmem:[#allocation2 + $0x18] sm:$0xff] %vm226, %v1131
      %1164 = vst.msk [vmem:[#allocation2 + $0x20] sm:$0xff] %vm226, %v1132
      %1165 = vst.msk [vmem:[#allocation2 + $0x28] sm:$0xff] %vm226, %v1133
      %1166 = vst.msk [vmem:[#allocation2 + $0x30] sm:$0xff] %vm226, %v1134
      %1167 = vst.msk [vmem:[#allocation2 + $0x38] sm:$0xff] %vm226, %v1135
      %1168 = vst.msk [vmem:[#allocation2 + $0x40] sm:$0xff] %vm226, %v1136
      %1169 = vst.msk [vmem:[#allocation2 + $0x48] sm:$0xff] %vm226, %v1137
      %1170 = vst.msk [vmem:[#allocation2 + $0x50] sm:$0xff] %vm226, %v1138
      %1171 = vst.msk [vmem:[#allocation2 + $0x58] sm:$0xff] %vm226, %v1139
      %1172 = vst.msk [vmem:[#allocation2 + $0x60] sm:$0xff] %vm226, %v1140
      %1173 = vst.msk [vmem:[#allocation2 + $0x68] sm:$0xff] %vm226, %v1141
      %1174 = vst.msk [vmem:[#allocation2 + $0x70] sm:$0xff] %vm226, %v1142
      %1175 = vst.msk [vmem:[#allocation2 + $0x78] sm:$0xff] %vm226, %v1143
      %1176 = vst.msk [vmem:[#allocation2 + $0x80] sm:$0xff] %vm226, %v1144
      %1177 = vst.msk [vmem:[#allocation2 + $0x88] sm:$0xff] %vm226, %v1145
      %1178 = vst.msk [vmem:[#allocation2 + $0x90] sm:$0xff] %vm226, %v1146
      %1179 = vst.msk [vmem:[#allocation2 + $0x98] sm:$0xff] %vm226, %v1147
      %1180 = vst.msk [vmem:[#allocation2 + $0xa0] sm:$0xff] %vm226, %v1148
      %1181 = vst.msk [vmem:[#allocation2 + $0xa8] sm:$0xff] %vm226, %v1149
      %1182 = vst.msk [vmem:[#allocation2 + $0xb0] sm:$0xff] %vm226, %v1150
      %1183 = vst.msk [vmem:[#allocation2 + $0xb8] sm:$0xff] %vm226, %v1151
      %1184 = vst.msk [vmem:[#allocation2 + $0xc0] sm:$0xff] %vm226, %v1152
      %1185 = vst.msk [vmem:[#allocation2 + $0xc8] sm:$0xff] %vm226, %v1153
      %1186 = vst.msk [vmem:[#allocation2 + $0xd0] sm:$0xff] %vm226, %v1154
      %1187 = vst.msk [vmem:[#allocation2 + $0xd8] sm:$0xff] %vm226, %v1155
      %1188 = vst.msk [vmem:[#allocation2 + $0xe0] sm:$0xff] %vm226, %v1156
      %1189 = vst.msk [vmem:[#allocation2 + $0xe8] sm:$0xff] %vm226, %v1157
      %1190 = vst.msk [vmem:[#allocation2 + $0xf0] sm:$0xff] %vm226, %v1158
      %1191 = vst.msk [vmem:[#allocation2 + $0xf8] sm:$0xff] %vm226, %v1159
      %v1192 = vld [vmem:[%s219 + $0x2] sm:$0xff]
      %v1193 = vld [vmem:[%s219 + $0xa] sm:$0xff]
      %v1194 = vld [vmem:[%s219 + $0x1a] sm:$0xff]
      %v1195 = vld [vmem:[%s219 + $0x22] sm:$0xff]
      %v1196 = vld [vmem:[%s219 + $0x32] sm:$0xff]
      %v1197 = vld [vmem:[%s219 + $0x3a] sm:$0xff]
      %v1198 = vld [vmem:[%s219 + $0x4a] sm:$0xff]
      %v1199 = vld [vmem:[%s219 + $0x52] sm:$0xff]
      %v1200 = vld [vmem:[%s219 + $0x62] sm:$0xff]
      %v1201 = vld [vmem:[%s219 + $0x6a] sm:$0xff]
      %v1202 = vld [vmem:[%s219 + $0x7a] sm:$0xff]
      %v1203 = vld [vmem:[%s219 + $0x82] sm:$0xff]
      %v1204 = vld [vmem:[%s219 + $0x92] sm:$0xff]
      %v1205 = vld [vmem:[%s219 + $0x9a] sm:$0xff]
      %v1206 = vld [vmem:[%s219 + $0xaa] sm:$0xff]
      %v1207 = vld [vmem:[%s219 + $0xb2] sm:$0xff]
      %v1208 = vld [vmem:[%s219 + $0xc2] sm:$0xff]
      %v1209 = vld [vmem:[%s219 + $0xca] sm:$0xff]
      %v1210 = vld [vmem:[%s219 + $0xda] sm:$0xff]
      %v1211 = vld [vmem:[%s219 + $0xe2] sm:$0xff]
      %v1212 = vld [vmem:[%s219 + $0xf2] sm:$0xff]
      %v1213 = vld [vmem:[%s219 + $0xfa] sm:$0xff]
      %v1214 = vld [vmem:[%s219 + $0x10a] sm:$0xff]
      %v1215 = vld [vmem:[%s219 + $0x112] sm:$0xff]
      %v1216 = vld [vmem:[%s219 + $0x122] sm:$0xff]
      %v1217 = vld [vmem:[%s219 + $0x12a] sm:$0xff]
      %v1218 = vld [vmem:[%s219 + $0x13a] sm:$0xff]
      %v1219 = vld [vmem:[%s219 + $0x142] sm:$0xff]
      %v1220 = vld [vmem:[%s219 + $0x152] sm:$0xff]
      %v1221 = vld [vmem:[%s219 + $0x15a] sm:$0xff]
      %v1222 = vld [vmem:[%s219 + $0x16a] sm:$0xff]
      %v1223 = vld [vmem:[%s219 + $0x172] sm:$0xff]
      %v1224 = vld [vmem:[#allocation2] sm:$0xff]
      %v1225 = vld [vmem:[#allocation2 + $0x8] sm:$0xff]
      %v1226 = vld [vmem:[#allocation2 + $0x10] sm:$0xff]
      %v1227 = vld [vmem:[#allocation2 + $0x18] sm:$0xff]
      %v1228 = vld [vmem:[#allocation2 + $0x20] sm:$0xff]
      %v1229 = vld [vmem:[#allocation2 + $0x28] sm:$0xff]
      %v1230 = vld [vmem:[#allocation2 + $0x30] sm:$0xff]
      %v1231 = vld [vmem:[#allocation2 + $0x38] sm:$0xff]
      %v1232 = vld [vmem:[#allocation2 + $0x40] sm:$0xff]
      %v1233 = vld [vmem:[#allocation2 + $0x48] sm:$0xff]
      %v1234 = vld [vmem:[#allocation2 + $0x50] sm:$0xff]
      %v1235 = vld [vmem:[#allocation2 + $0x58] sm:$0xff]
      %v1236 = vld [vmem:[#allocation2 + $0x60] sm:$0xff]
      %v1237 = vld [vmem:[#allocation2 + $0x68] sm:$0xff]
      %v1238 = vld [vmem:[#allocation2 + $0x70] sm:$0xff]
      %v1239 = vld [vmem:[#allocation2 + $0x78] sm:$0xff]
      %v1240 = vld [vmem:[#allocation2 + $0x80] sm:$0xff]
      %v1241 = vld [vmem:[#allocation2 + $0x88] sm:$0xff]
      %v1242 = vld [vmem:[#allocation2 + $0x90] sm:$0xff]
      %v1243 = vld [vmem:[#allocation2 + $0x98] sm:$0xff]
      %v1244 = vld [vmem:[#allocation2 + $0xa0] sm:$0xff]
      %v1245 = vld [vmem:[#allocation2 + $0xa8] sm:$0xff]
      %v1246 = vld [vmem:[#allocation2 + $0xb0] sm:$0xff]
      %v1247 = vld [vmem:[#allocation2 + $0xb8] sm:$0xff]
      %v1248 = vld [vmem:[#allocation2 + $0xc0] sm:$0xff]
      %v1249 = vld [vmem:[#allocation2 + $0xc8] sm:$0xff]
      %v1250 = vld [vmem:[#allocation2 + $0xd0] sm:$0xff]
      %v1251 = vld [vmem:[#allocation2 + $0xd8] sm:$0xff]
      %v1252 = vld [vmem:[#allocation2 + $0xe0] sm:$0xff]
      %v1253 = vld [vmem:[#allocation2 + $0xe8] sm:$0xff]
      %v1254 = vld [vmem:[#allocation2 + $0xf0] sm:$0xff]
      %v1255 = vld [vmem:[#allocation2 + $0xf8] sm:$0xff]
      %v1257 = vsel %vm350, %v1192, 0
      %v1260 = vsel %vm350, %v1193, 0
      %v1263 = vsel %vm350, %v1194, 0
      %v1266 = vsel %vm350, %v1195, 0
      %v1269 = vsel %vm350, %v1196, 0
      %v1272 = vsel %vm350, %v1197, 0
      %v1275 = vsel %vm350, %v1198, 0
      %v1278 = vsel %vm350, %v1199, 0
      %v1281 = vsel %vm350, %v1200, 0
      %v1284 = vsel %vm350, %v1201, 0
      %v1287 = vsel %vm350, %v1202, 0
      %v1290 = vsel %vm350, %v1203, 0
      %v1293 = vsel %vm350, %v1204, 0
      %v1296 = vsel %vm350, %v1205, 0
      %v1299 = vsel %vm350, %v1206, 0
      %v1302 = vsel %vm350, %v1207, 0
      %v1305 = vsel %vm350, %v1208, 0
      %v1308 = vsel %vm350, %v1209, 0
      %v1311 = vsel %vm350, %v1210, 0
      %v1314 = vsel %vm350, %v1211, 0
      %v1317 = vsel %vm350, %v1212, 0
      %v1320 = vsel %vm350, %v1213, 0
      %v1323 = vsel %vm350, %v1214, 0
      %v1326 = vsel %vm350, %v1215, 0
      %v1329 = vsel %vm350, %v1216, 0
      %v1332 = vsel %vm350, %v1217, 0
      %v1335 = vsel %vm350, %v1218, 0
      %v1338 = vsel %vm350, %v1219, 0
      %v1341 = vsel %vm350, %v1220, 0
      %v1344 = vsel %vm350, %v1221, 0
      %v1347 = vsel %vm350, %v1222, 0
      %v1350 = vsel %vm350, %v1223, 0
      %v1353 = vsel %vm447, %v279, 0
      %1355 = vmatprep.subr.mxu0 0.0
      %1356 = vmatpush1.msra.mxu0 %v1353
      %1357 = vmatprep.subr.mxu0 0.0
      %1358 = vmatpush1.msra.mxu0 0.0
      %1359 = vmatprep.subr.mxu0 0.0
      %1360 = vmatpush1.msra.mxu0 0.0
      %1361 = vmatprep.subr.mxu0 0.0
      %1362 = vmatpush1.msra.mxu0 0.0
      %1363 = vmatprep.subr.mxu0 0.0
      %1364 = vmatpush1.msra.mxu0 0.0
      %1365 = vmatprep.subr.mxu0 0.0
      %1366 = vmatpush1.msra.mxu0 0.0
      %1367 = vmatprep.subr.mxu0 0.0
      %1368 = vmatpush1.msra.mxu0 0.0
      %1369 = vmatprep.subr.mxu0 0.0
      %1370 = vmatpush1.msra.mxu0 0.0
      %1371 = vmatprep.subr.mxu0 0.0
      %1372 = vmatpush1.msra.mxu0 0.0
      %1373 = vmatprep.subr.mxu0 0.0
      %1374 = vmatpush1.msra.mxu0 0.0
      %1375 = vmatprep.subr.mxu0 0.0
      %1376 = vmatpush1.msra.mxu0 0.0
      %1377 = vmatprep.subr.mxu0 0.0
      %1378 = vmatpush1.msra.mxu0 0.0
      %1379 = vmatprep.subr.mxu0 0.0
      %1380 = vmatpush1.msra.mxu0 0.0
      %1381 = vmatprep.subr.mxu0 0.0
      %1382 = vmatpush1.msra.mxu0 0.0
      %1383 = vmatprep.subr.mxu0 0.0
      %1384 = vmatpush1.msra.mxu0 0.0
      %1385 = vmatprep.subr.mxu0 0.0
      %1386 = vmatpush1.msra.mxu0 0.0
      %1387 = vmatprep.subr.mxu0 0.0
      %1388 = vmatpush1.msra.mxu0 0.0
      %1389 = vmatprep.subr.mxu0 0.0
      %1390 = vmatpush1.msra.mxu0 0.0
      %1391 = vmatprep.subr.mxu0 0.0
      %1392 = vmatpush1.msra.mxu0 0.0
      %1393 = vmatprep.subr.mxu0 0.0
      %1394 = vmatpush1.msra.mxu0 0.0
      %1395 = vmatprep.subr.mxu0 0.0
      %1396 = vmatpush1.msra.mxu0 0.0
      %1397 = vmatprep.subr.mxu0 0.0
      %1398 = vmatpush1.msra.mxu0 0.0
      %1399 = vmatprep.subr.mxu0 0.0
      %1400 = vmatpush1.msra.mxu0 0.0
      %1401 = vmatprep.subr.mxu0 0.0
      %1402 = vmatpush1.msra.mxu0 0.0
      %1403 = vmatprep.subr.mxu0 0.0
      %1404 = vmatpush1.msra.mxu0 0.0
      %1405 = vmatprep.subr.mxu0 0.0
      %1406 = vmatpush1.msra.mxu0 0.0
      %1407 = vmatprep.subr.mxu0 0.0
      %1408 = vmatpush1.msra.mxu0 0.0
      %1409 = vmatprep.subr.mxu0 0.0
      %1410 = vmatpush1.msra.mxu0 0.0
      %1411 = vmatprep.subr.mxu0 0.0
      %1412 = vmatpush1.msra.mxu0 0.0
      %1413 = vmatprep.subr.mxu0 0.0
      %1414 = vmatpush1.msra.mxu0 0.0
      %1415 = vmatprep.subr.mxu0 0.0
      %1416 = vmatpush1.msra.mxu0 0.0
      %1417 = vmatprep.subr.mxu0 0.0
      %1418 = vmatpush1.msra.mxu0 0.0
      %1419 = vmatprep.mubr.f32.mxu0 0.0
      %1420 = vmatmul.mubr.f32.gmra.mrb[0].mxu0 %v1257
      %v1421 = vpop.f32.mrb[0].mxu0
      %v1422 = vadd.f32 0.0, %v1421
      %v1423 = vpop.f32.mrb[0].mxu0
      %1424 = vmatprep.mubr.f32.mxu0 0.0
      %1425 = vmatmul.mubr.f32.gmra.mrb[0].mxu0 %v1260
      %v1426 = vpop.f32.mrb[0].mxu0
      %v1427 = vadd.f32 0.0, %v1426
      %v1428 = vpop.f32.mrb[0].mxu0
      %1429 = vmatprep.mubr.f32.mxu0 0.0
      %1430 = vmatmul.mubr.f32.gmra.mrb[0].mxu0 %v1263
      %v1431 = vpop.f32.mrb[0].mxu0
      %v1432 = vadd.f32 0.0, %v1431
      %v1433 = vpop.f32.mrb[0].mxu0
      %1434 = vmatprep.mubr.f32.mxu0 0.0
      %1435 = vmatmul.mubr.f32.gmra.mrb[0].mxu0 %v1266
      %v1436 = vpop.f32.mrb[0].mxu0
      %v1437 = vadd.f32 0.0, %v1436
      %v1438 = vpop.f32.mrb[0].mxu0
      %1439 = vmatprep.mubr.f32.mxu0 0.0
      %1440 = vmatmul.mubr.f32.gmra.mrb[0].mxu0 %v1269
      %v1441 = vpop.f32.mrb[0].mxu0
      %v1442 = vadd.f32 0.0, %v1441
      %v1443 = vpop.f32.mrb[0].mxu0
      %1444 = vmatprep.mubr.f32.mxu0 0.0
      %1445 = vmatmul.mubr.f32.gmra.mrb[0].mxu0 %v1272
      %v1446 = vpop.f32.mrb[0].mxu0
      %v1447 = vadd.f32 0.0, %v1446
      %v1448 = vpop.f32.mrb[0].mxu0
      %1449 = vmatprep.mubr.f32.mxu0 0.0
      %1450 = vmatmul.mubr.f32.gmra.mrb[0].mxu0 %v1275
      %v1451 = vpop.f32.mrb[0].mxu0
      %v1452 = vadd.f32 0.0, %v1451
      %v1453 = vpop.f32.mrb[0].mxu0
      %1454 = vmatprep.mubr.f32.mxu0 0.0
      %1455 = vmatmul.mubr.f32.gmra.mrb[0].mxu0 %v1278
      %v1456 = vpop.f32.mrb[0].mxu0
      %v1457 = vadd.f32 0.0, %v1456
      %v1458 = vpop.f32.mrb[0].mxu0
      %1459 = vmatprep.mubr.f32.mxu0 0.0
      %1460 = vmatmul.mubr.f32.gmra.mrb[0].mxu0 %v1281
      %v1461 = vpop.f32.mrb[0].mxu0
      %v1462 = vadd.f32 0.0, %v1461
      %v1463 = vpop.f32.mrb[0].mxu0
      %1464 = vmatprep.mubr.f32.mxu0 0.0
      %1465 = vmatmul.mubr.f32.gmra.mrb[0].mxu0 %v1284
      %v1466 = vpop.f32.mrb[0].mxu0
      %v1467 = vadd.f32 0.0, %v1466
      %v1468 = vpop.f32.mrb[0].mxu0
      %1469 = vmatprep.mubr.f32.mxu0 0.0
      %1470 = vmatmul.mubr.f32.gmra.mrb[0].mxu0 %v1287
      %v1471 = vpop.f32.mrb[0].mxu0
      %v1472 = vadd.f32 0.0, %v1471
      %v1473 = vpop.f32.mrb[0].mxu0
      %1474 = vmatprep.mubr.f32.mxu0 0.0
      %1475 = vmatmul.mubr.f32.gmra.mrb[0].mxu0 %v1290
      %v1476 = vpop.f32.mrb[0].mxu0
      %v1477 = vadd.f32 0.0, %v1476
      %v1478 = vpop.f32.mrb[0].mxu0
      %1479 = vmatprep.mubr.f32.mxu0 0.0
      %1480 = vmatmul.mubr.f32.gmra.mrb[0].mxu0 %v1293
      %v1481 = vpop.f32.mrb[0].mxu0
      %v1482 = vadd.f32 0.0, %v1481
      %v1483 = vpop.f32.mrb[0].mxu0
      %1484 = vmatprep.mubr.f32.mxu0 0.0
      %1485 = vmatmul.mubr.f32.gmra.mrb[0].mxu0 %v1296
      %v1486 = vpop.f32.mrb[0].mxu0
      %v1487 = vadd.f32 0.0, %v1486
      %v1488 = vpop.f32.mrb[0].mxu0
      %1489 = vmatprep.mubr.f32.mxu0 0.0
      %1490 = vmatmul.mubr.f32.gmra.mrb[0].mxu0 %v1299
      %v1491 = vpop.f32.mrb[0].mxu0
      %v1492 = vadd.f32 0.0, %v1491
      %v1493 = vpop.f32.mrb[0].mxu0
      %1494 = vmatprep.mubr.f32.mxu0 0.0
      %1495 = vmatmul.mubr.f32.gmra.mrb[0].mxu0 %v1302
      %v1496 = vpop.f32.mrb[0].mxu0
      %v1497 = vadd.f32 0.0, %v1496
      %v1498 = vpop.f32.mrb[0].mxu0
      %1499 = vmatprep.mubr.f32.mxu0 0.0
      %1500 = vmatmul.mubr.f32.gmra.mrb[0].mxu0 %v1305
      %v1501 = vpop.f32.mrb[0].mxu0
      %v1502 = vadd.f32 0.0, %v1501
      %v1503 = vpop.f32.mrb[0].mxu0
      %1504 = vmatprep.mubr.f32.mxu0 0.0
      %1505 = vmatmul.mubr.f32.gmra.mrb[0].mxu0 %v1308
      %v1506 = vpop.f32.mrb[0].mxu0
      %v1507 = vadd.f32 0.0, %v1506
      %v1508 = vpop.f32.mrb[0].mxu0
      %1509 = vmatprep.mubr.f32.mxu0 0.0
      %1510 = vmatmul.mubr.f32.gmra.mrb[0].mxu0 %v1311
      %v1511 = vpop.f32.mrb[0].mxu0
      %v1512 = vadd.f32 0.0, %v1511
      %v1513 = vpop.f32.mrb[0].mxu0
      %1514 = vmatprep.mubr.f32.mxu0 0.0
      %1515 = vmatmul.mubr.f32.gmra.mrb[0].mxu0 %v1314
      %v1516 = vpop.f32.mrb[0].mxu0
      %v1517 = vadd.f32 0.0, %v1516
      %v1518 = vpop.f32.mrb[0].mxu0
      %1519 = vmatprep.mubr.f32.mxu0 0.0
      %1520 = vmatmul.mubr.f32.gmra.mrb[0].mxu0 %v1317
      %v1521 = vpop.f32.mrb[0].mxu0
      %v1522 = vadd.f32 0.0, %v1521
      %v1523 = vpop.f32.mrb[0].mxu0
      %1524 = vmatprep.mubr.f32.mxu0 0.0
      %1525 = vmatmul.mubr.f32.gmra.mrb[0].mxu0 %v1320
      %v1526 = vpop.f32.mrb[0].mxu0
      %v1527 = vadd.f32 0.0, %v1526
      %v1528 = vpop.f32.mrb[0].mxu0
      %1529 = vmatprep.mubr.f32.mxu0 0.0
      %1530 = vmatmul.mubr.f32.gmra.mrb[0].mxu0 %v1323
      %v1531 = vpop.f32.mrb[0].mxu0
      %v1532 = vadd.f32 0.0, %v1531
      %v1533 = vpop.f32.mrb[0].mxu0
      %1534 = vmatprep.mubr.f32.mxu0 0.0
      %1535 = vmatmul.mubr.f32.gmra.mrb[0].mxu0 %v1326
      %v1536 = vpop.f32.mrb[0].mxu0
      %v1537 = vadd.f32 0.0, %v1536
      %v1538 = vpop.f32.mrb[0].mxu0
      %1539 = vmatprep.mubr.f32.mxu0 0.0
      %1540 = vmatmul.mubr.f32.gmra.mrb[0].mxu0 %v1329
      %v1541 = vpop.f32.mrb[0].mxu0
      %v1542 = vadd.f32 0.0, %v1541
      %v1543 = vpop.f32.mrb[0].mxu0
      %1544 = vmatprep.mubr.f32.mxu0 0.0
      %1545 = vmatmul.mubr.f32.gmra.mrb[0].mxu0 %v1332
      %v1546 = vpop.f32.mrb[0].mxu0
      %v1547 = vadd.f32 0.0, %v1546
      %v1548 = vpop.f32.mrb[0].mxu0
      %1549 = vmatprep.mubr.f32.mxu0 0.0
      %1550 = vmatmul.mubr.f32.gmra.mrb[0].mxu0 %v1335
      %v1551 = vpop.f32.mrb[0].mxu0
      %v1552 = vadd.f32 0.0, %v1551
      %v1553 = vpop.f32.mrb[0].mxu0
      %1554 = vmatprep.mubr.f32.mxu0 0.0
      %1555 = vmatmul.mubr.f32.gmra.mrb[0].mxu0 %v1338
      %v1556 = vpop.f32.mrb[0].mxu0
      %v1557 = vadd.f32 0.0, %v1556
      %v1558 = vpop.f32.mrb[0].mxu0
      %1559 = vmatprep.mubr.f32.mxu0 0.0
      %1560 = vmatmul.mubr.f32.gmra.mrb[0].mxu0 %v1341
      %v1561 = vpop.f32.mrb[0].mxu0
      %v1562 = vadd.f32 0.0, %v1561
      %v1563 = vpop.f32.mrb[0].mxu0
      %1564 = vmatprep.mubr.f32.mxu0 0.0
      %1565 = vmatmul.mubr.f32.gmra.mrb[0].mxu0 %v1344
      %v1566 = vpop.f32.mrb[0].mxu0
      %v1567 = vadd.f32 0.0, %v1566
      %v1568 = vpop.f32.mrb[0].mxu0
      %1569 = vmatprep.mubr.f32.mxu0 0.0
      %1570 = vmatmul.mubr.f32.gmra.mrb[0].mxu0 %v1347
      %v1571 = vpop.f32.mrb[0].mxu0
      %v1572 = vadd.f32 0.0, %v1571
      %v1573 = vpop.f32.mrb[0].mxu0
      %1574 = vmatprep.mubr.f32.mxu0 0.0
      %1575 = vmatmul.mubr.f32.gmra.mrb[0].mxu0 %v1350
      %v1576 = vpop.f32.mrb[0].mxu0
      %v1577 = vadd.f32 0.0, %v1576
      %v1578 = vpop.f32.mrb[0].mxu0
      %1579 = vdwg.mxu0
      %v1580 = vadd.f32 %v1224, %v1422
      %v1581 = vadd.f32 %v1225, %v1427
      %v1582 = vadd.f32 %v1226, %v1432
      %v1583 = vadd.f32 %v1227, %v1437
      %v1584 = vadd.f32 %v1228, %v1442
      %v1585 = vadd.f32 %v1229, %v1447
      %v1586 = vadd.f32 %v1230, %v1452
      %v1587 = vadd.f32 %v1231, %v1457
      %v1588 = vadd.f32 %v1232, %v1462
      %v1589 = vadd.f32 %v1233, %v1467
      %v1590 = vadd.f32 %v1234, %v1472
      %v1591 = vadd.f32 %v1235, %v1477
      %v1592 = vadd.f32 %v1236, %v1482
      %v1593 = vadd.f32 %v1237, %v1487
      %v1594 = vadd.f32 %v1238, %v1492
      %v1595 = vadd.f32 %v1239, %v1497
      %v1596 = vadd.f32 %v1240, %v1502
      %v1597 = vadd.f32 %v1241, %v1507
      %v1598 = vadd.f32 %v1242, %v1512
      %v1599 = vadd.f32 %v1243, %v1517
      %v1600 = vadd.f32 %v1244, %v1522
      %v1601 = vadd.f32 %v1245, %v1527
      %v1602 = vadd.f32 %v1246, %v1532
      %v1603 = vadd.f32 %v1247, %v1537
      %v1604 = vadd.f32 %v1248, %v1542
      %v1605 = vadd.f32 %v1249, %v1547
      %v1606 = vadd.f32 %v1250, %v1552
      %v1607 = vadd.f32 %v1251, %v1557
      %v1608 = vadd.f32 %v1252, %v1562
      %v1609 = vadd.f32 %v1253, %v1567
      %v1610 = vadd.f32 %v1254, %v1572
      %v1611 = vadd.f32 %v1255, %v1577
      %1612 = vst.msk [vmem:[#allocation2] sm:$0xff] %vm226, %v1580
      %1613 = vst.msk [vmem:[#allocation2 + $0x8] sm:$0xff] %vm226, %v1581
      %1614 = vst.msk [vmem:[#allocation2 + $0x10] sm:$0xff] %vm226, %v1582
      %1615 = vst.msk [vmem:[#allocation2 + $0x18] sm:$0xff] %vm226, %v1583
      %1616 = vst.msk [vmem:[#allocation2 + $0x20] sm:$0xff] %vm226, %v1584
      %1617 = vst.msk [vmem:[#allocation2 + $0x28] sm:$0xff] %vm226, %v1585
      %1618 = vst.msk [vmem:[#allocation2 + $0x30] sm:$0xff] %vm226, %v1586
      %1619 = vst.msk [vmem:[#allocation2 + $0x38] sm:$0xff] %vm226, %v1587
      %1620 = vst.msk [vmem:[#allocation2 + $0x40] sm:$0xff] %vm226, %v1588
      %1621 = vst.msk [vmem:[#allocation2 + $0x48] sm:$0xff] %vm226, %v1589
      %1622 = vst.msk [vmem:[#allocation2 + $0x50] sm:$0xff] %vm226, %v1590
      %1623 = vst.msk [vmem:[#allocation2 + $0x58] sm:$0xff] %vm226, %v1591
      %1624 = vst.msk [vmem:[#allocation2 + $0x60] sm:$0xff] %vm226, %v1592
      %1625 = vst.msk [vmem:[#allocation2 + $0x68] sm:$0xff] %vm226, %v1593
      %1626 = vst.msk [vmem:[#allocation2 + $0x70] sm:$0xff] %vm226, %v1594
      %1627 = vst.msk [vmem:[#allocation2 + $0x78] sm:$0xff] %vm226, %v1595
      %1628 = vst.msk [vmem:[#allocation2 + $0x80] sm:$0xff] %vm226, %v1596
      %1629 = vst.msk [vmem:[#allocation2 + $0x88] sm:$0xff] %vm226, %v1597
      %1630 = vst.msk [vmem:[#allocation2 + $0x90] sm:$0xff] %vm226, %v1598
      %1631 = vst.msk [vmem:[#allocation2 + $0x98] sm:$0xff] %vm226, %v1599
      %1632 = vst.msk [vmem:[#allocation2 + $0xa0] sm:$0xff] %vm226, %v1600
      %1633 = vst.msk [vmem:[#allocation2 + $0xa8] sm:$0xff] %vm226, %v1601
      %1634 = vst.msk [vmem:[#allocation2 + $0xb0] sm:$0xff] %vm226, %v1602
      %1635 = vst.msk [vmem:[#allocation2 + $0xb8] sm:$0xff] %vm226, %v1603
      %1636 = vst.msk [vmem:[#allocation2 + $0xc0] sm:$0xff] %vm226, %v1604
      %1637 = vst.msk [vmem:[#allocation2 + $0xc8] sm:$0xff] %vm226, %v1605
      %1638 = vst.msk [vmem:[#allocation2 + $0xd0] sm:$0xff] %vm226, %v1606
      %1639 = vst.msk [vmem:[#allocation2 + $0xd8] sm:$0xff] %vm226, %v1607
      %1640 = vst.msk [vmem:[#allocation2 + $0xe0] sm:$0xff] %vm226, %v1608
      %1641 = vst.msk [vmem:[#allocation2 + $0xe8] sm:$0xff] %vm226, %v1609
      %1642 = vst.msk [vmem:[#allocation2 + $0xf0] sm:$0xff] %vm226, %v1610
      %1643 = vst.msk [vmem:[#allocation2 + $0xf8] sm:$0xff] %vm226, %v1611
      %s1644 = scalar_lea.vmem %s219, 24
      %v1645 = vld [vmem:[%s1644] sm:$0xff]
      %v1646 = vld [vmem:[%s1644 + $0x8] sm:$0xff]
      %v1647 = vld [vmem:[%s1644 + $0x18] sm:$0xff]
      %v1648 = vld [vmem:[%s1644 + $0x20] sm:$0xff]
      %v1649 = vld [vmem:[%s1644 + $0x30] sm:$0xff]
      %v1650 = vld [vmem:[%s1644 + $0x38] sm:$0xff]
      %v1651 = vld [vmem:[%s1644 + $0x48] sm:$0xff]
      %v1652 = vld [vmem:[%s1644 + $0x50] sm:$0xff]
      %v1653 = vld [vmem:[%s1644 + $0x60] sm:$0xff]
      %v1654 = vld [vmem:[%s1644 + $0x68] sm:$0xff]
      %v1655 = vld [vmem:[%s1644 + $0x78] sm:$0xff]
      %v1656 = vld [vmem:[%s1644 + $0x80] sm:$0xff]
      %v1657 = vld [vmem:[%s1644 + $0x90] sm:$0xff]
      %v1658 = vld [vmem:[%s1644 + $0x98] sm:$0xff]
      %v1659 = vld [vmem:[%s1644 + $0xa8] sm:$0xff]
      %v1660 = vld [vmem:[%s1644 + $0xb0] sm:$0xff]
      %v1661 = vld [vmem:[%s1644 + $0xc0] sm:$0xff]
      %v1662 = vld [vmem:[%s1644 + $0xc8] sm:$0xff]
      %v1663 = vld [vmem:[%s1644 + $0xd8] sm:$0xff]
      %v1664 = vld [vmem:[%s1644 + $0xe0] sm:$0xff]
      %v1665 = vld [vmem:[%s1644 + $0xf0] sm:$0xff]
      %v1666 = vld [vmem:[%s1644 + $0xf8] sm:$0xff]
      %v1667 = vld [vmem:[%s1644 + $0x108] sm:$0xff]
      %v1668 = vld [vmem:[%s1644 + $0x110] sm:$0xff]
      %v1669 = vld [vmem:[%s1644 + $0x120] sm:$0xff]
      %v1670 = vld [vmem:[%s1644 + $0x128] sm:$0xff]
      %v1671 = vld [vmem:[%s1644 + $0x138] sm:$0xff]
      %v1672 = vld [vmem:[%s1644 + $0x140] sm:$0xff]
      %v1673 = vld [vmem:[%s1644 + $0x150] sm:$0xff]
      %v1674 = vld [vmem:[%s1644 + $0x158] sm:$0xff]
      %v1675 = vld [vmem:[%s1644 + $0x168] sm:$0xff]
      %v1676 = vld [vmem:[%s1644 + $0x170] sm:$0xff]
      %v1677 = vld [vmem:[#allocation2] sm:$0xff]
      %v1678 = vld [vmem:[#allocation2 + $0x8] sm:$0xff]
      %v1679 = vld [vmem:[#allocation2 + $0x10] sm:$0xff]
      %v1680 = vld [vmem:[#allocation2 + $0x18] sm:$0xff]
      %v1681 = vld [vmem:[#allocation2 + $0x20] sm:$0xff]
      %v1682 = vld [vmem:[#allocation2 + $0x28] sm:$0xff]
      %v1683 = vld [vmem:[#allocation2 + $0x30] sm:$0xff]
      %v1684 = vld [vmem:[#allocation2 + $0x38] sm:$0xff]
      %v1685 = vld [vmem:[#allocation2 + $0x40] sm:$0xff]
      %v1686 = vld [vmem:[#allocation2 + $0x48] sm:$0xff]
      %v1687 = vld [vmem:[#allocation2 + $0x50] sm:$0xff]
      %v1688 = vld [vmem:[#allocation2 + $0x58] sm:$0xff]
      %v1689 = vld [vmem:[#allocation2 + $0x60] sm:$0xff]
      %v1690 = vld [vmem:[#allocation2 + $0x68] sm:$0xff]
      %v1691 = vld [vmem:[#allocation2 + $0x70] sm:$0xff]
      %v1692 = vld [vmem:[#allocation2 + $0x78] sm:$0xff]
      %v1693 = vld [vmem:[#allocation2 + $0x80] sm:$0xff]
      %v1694 = vld [vmem:[#allocation2 + $0x88] sm:$0xff]
      %v1695 = vld [vmem:[#allocation2 + $0x90] sm:$0xff]
      %v1696 = vld [vmem:[#allocation2 + $0x98] sm:$0xff]
      %v1697 = vld [vmem:[#allocation2 + $0xa0] sm:$0xff]
      %v1698 = vld [vmem:[#allocation2 + $0xa8] sm:$0xff]
      %v1699 = vld [vmem:[#allocation2 + $0xb0] sm:$0xff]
      %v1700 = vld [vmem:[#allocation2 + $0xb8] sm:$0xff]
      %v1701 = vld [vmem:[#allocation2 + $0xc0] sm:$0xff]
      %v1702 = vld [vmem:[#allocation2 + $0xc8] sm:$0xff]
      %v1703 = vld [vmem:[#allocation2 + $0xd0] sm:$0xff]
      %v1704 = vld [vmem:[#allocation2 + $0xd8] sm:$0xff]
      %v1705 = vld [vmem:[#allocation2 + $0xe0] sm:$0xff]
      %v1706 = vld [vmem:[#allocation2 + $0xe8] sm:$0xff]
      %v1707 = vld [vmem:[#allocation2 + $0xf0] sm:$0xff]
      %v1708 = vld [vmem:[#allocation2 + $0xf8] sm:$0xff]
      %v1710 = vsel %vm350, %v1645, 0
      %v1713 = vsel %vm350, %v1646, 0
      %v1716 = vsel %vm350, %v1647, 0
      %v1719 = vsel %vm350, %v1648, 0
      %v1722 = vsel %vm350, %v1649, 0
      %v1725 = vsel %vm350, %v1650, 0
      %v1728 = vsel %vm350, %v1651, 0
      %v1731 = vsel %vm350, %v1652, 0
      %v1734 = vsel %vm350, %v1653, 0
      %v1737 = vsel %vm350, %v1654, 0
      %v1740 = vsel %vm350, %v1655, 0
      %v1743 = vsel %vm350, %v1656, 0
      %v1746 = vsel %vm350, %v1657, 0
      %v1749 = vsel %vm350, %v1658, 0
      %v1752 = vsel %vm350, %v1659, 0
      %v1755 = vsel %vm350, %v1660, 0
      %v1758 = vsel %vm350, %v1661, 0
      %v1761 = vsel %vm350, %v1662, 0
      %v1764 = vsel %vm350, %v1663, 0
      %v1767 = vsel %vm350, %v1664, 0
      %v1770 = vsel %vm350, %v1665, 0
      %v1773 = vsel %vm350, %v1666, 0
      %v1776 = vsel %vm350, %v1667, 0
      %v1779 = vsel %vm350, %v1668, 0
      %v1782 = vsel %vm350, %v1669, 0
      %v1785 = vsel %vm350, %v1670, 0
      %v1788 = vsel %vm350, %v1671, 0
      %v1791 = vsel %vm350, %v1672, 0
      %v1794 = vsel %vm350, %v1673, 0
      %v1797 = vsel %vm350, %v1674, 0
      %v1800 = vsel %vm350, %v1675, 0
      %v1803 = vsel %vm350, %v1676, 0
      %v1806 = vsel %vm447, %v280, 0
      %1808 = vmatprep.subr.mxu0 0.0
      %1809 = vmatpush1.msra.mxu0 %v1806
      %1810 = vmatprep.subr.mxu0 0.0
      %1811 = vmatpush1.msra.mxu0 0.0
      %1812 = vmatprep.subr.mxu0 0.0
      %1813 = vmatpush1.msra.mxu0 0.0
      %1814 = vmatprep.subr.mxu0 0.0
      %1815 = vmatpush1.msra.mxu0 0.0
      %1816 = vmatprep.subr.mxu0 0.0
      %1817 = vmatpush1.msra.mxu0 0.0
      %1818 = vmatprep.subr.mxu0 0.0
      %1819 = vmatpush1.msra.mxu0 0.0
      %1820 = vmatprep.subr.mxu0 0.0
      %1821 = vmatpush1.msra.mxu0 0.0
      %1822 = vmatprep.subr.mxu0 0.0
      %1823 = vmatpush1.msra.mxu0 0.0
      %1824 = vmatprep.subr.mxu0 0.0
      %1825 = vmatpush1.msra.mxu0 0.0
      %1826 = vmatprep.subr.mxu0 0.0
      %1827 = vmatpush1.msra.mxu0 0.0
      %1828 = vmatprep.subr.mxu0 0.0
      %1829 = vmatpush1.msra.mxu0 0.0
      %1830 = vmatprep.subr.mxu0 0.0
      %1831 = vmatpush1.msra.mxu0 0.0
      %1832 = vmatprep.subr.mxu0 0.0
      %1833 = vmatpush1.msra.mxu0 0.0
      %1834 = vmatprep.subr.mxu0 0.0
      %1835 = vmatpush1.msra.mxu0 0.0
      %1836 = vmatprep.subr.mxu0 0.0
      %1837 = vmatpush1.msra.mxu0 0.0
      %1838 = vmatprep.subr.mxu0 0.0
      %1839 = vmatpush1.msra.mxu0 0.0
      %1840 = vmatprep.subr.mxu0 0.0
      %1841 = vmatpush1.msra.mxu0 0.0
      %1842 = vmatprep.subr.mxu0 0.0
      %1843 = vmatpush1.msra.mxu0 0.0
      %1844 = vmatprep.subr.mxu0 0.0
      %1845 = vmatpush1.msra.mxu0 0.0
      %1846 = vmatprep.subr.mxu0 0.0
      %1847 = vmatpush1.msra.mxu0 0.0
      %1848 = vmatprep.subr.mxu0 0.0
      %1849 = vmatpush1.msra.mxu0 0.0
      %1850 = vmatprep.subr.mxu0 0.0
      %1851 = vmatpush1.msra.mxu0 0.0
      %1852 = vmatprep.subr.mxu0 0.0
      %1853 = vmatpush1.msra.mxu0 0.0
      %1854 = vmatprep.subr.mxu0 0.0
      %1855 = vmatpush1.msra.mxu0 0.0
      %1856 = vmatprep.subr.mxu0 0.0
      %1857 = vmatpush1.msra.mxu0 0.0
      %1858 = vmatprep.subr.mxu0 0.0
      %1859 = vmatpush1.msra.mxu0 0.0
      %1860 = vmatprep.subr.mxu0 0.0
      %1861 = vmatpush1.msra.mxu0 0.0
      %1862 = vmatprep.subr.mxu0 0.0
      %1863 = vmatpush1.msra.mxu0 0.0
      %1864 = vmatprep.subr.mxu0 0.0
      %1865 = vmatpush1.msra.mxu0 0.0
      %1866 = vmatprep.subr.mxu0 0.0
      %1867 = vmatpush1.msra.mxu0 0.0
      %1868 = vmatprep.subr.mxu0 0.0
      %1869 = vmatpush1.msra.mxu0 0.0
      %1870 = vmatprep.subr.mxu0 0.0
      %1871 = vmatpush1.msra.mxu0 0.0
      %1872 = vmatprep.mubr.f32.mxu0 0.0
      %1873 = vmatmul.mubr.f32.gmra.mrb[0].mxu0 %v1710
      %v1874 = vpop.f32.mrb[0].mxu0
      %v1875 = vadd.f32 0.0, %v1874
      %v1876 = vpop.f32.mrb[0].mxu0
      %1877 = vmatprep.mubr.f32.mxu0 0.0
      %1878 = vmatmul.mubr.f32.gmra.mrb[0].mxu0 %v1713
      %v1879 = vpop.f32.mrb[0].mxu0
      %v1880 = vadd.f32 0.0, %v1879
      %v1881 = vpop.f32.mrb[0].mxu0
      %1882 = vmatprep.mubr.f32.mxu0 0.0
      %1883 = vmatmul.mubr.f32.gmra.mrb[0].mxu0 %v1716
      %v1884 = vpop.f32.mrb[0].mxu0
      %v1885 = vadd.f32 0.0, %v1884
      %v1886 = vpop.f32.mrb[0].mxu0
      %1887 = vmatprep.mubr.f32.mxu0 0.0
      %1888 = vmatmul.mubr.f32.gmra.mrb[0].mxu0 %v1719
      %v1889 = vpop.f32.mrb[0].mxu0
      %v1890 = vadd.f32 0.0, %v1889
      %v1891 = vpop.f32.mrb[0].mxu0
      %1892 = vmatprep.mubr.f32.mxu0 0.0
      %1893 = vmatmul.mubr.f32.gmra.mrb[0].mxu0 %v1722
      %v1894 = vpop.f32.mrb[0].mxu0
      %v1895 = vadd.f32 0.0, %v1894
      %v1896 = vpop.f32.mrb[0].mxu0
      %1897 = vmatprep.mubr.f32.mxu0 0.0
      %1898 = vmatmul.mubr.f32.gmra.mrb[0].mxu0 %v1725
      %v1899 = vpop.f32.mrb[0].mxu0
      %v1900 = vadd.f32 0.0, %v1899
      %v1901 = vpop.f32.mrb[0].mxu0
      %1902 = vmatprep.mubr.f32.mxu0 0.0
      %1903 = vmatmul.mubr.f32.gmra.mrb[0].mxu0 %v1728
      %v1904 = vpop.f32.mrb[0].mxu0
      %v1905 = vadd.f32 0.0, %v1904
      %v1906 = vpop.f32.mrb[0].mxu0
      %1907 = vmatprep.mubr.f32.mxu0 0.0
      %1908 = vmatmul.mubr.f32.gmra.mrb[0].mxu0 %v1731
      %v1909 = vpop.f32.mrb[0].mxu0
      %v1910 = vadd.f32 0.0, %v1909
      %v1911 = vpop.f32.mrb[0].mxu0
      %1912 = vmatprep.mubr.f32.mxu0 0.0
      %1913 = vmatmul.mubr.f32.gmra.mrb[0].mxu0 %v1734
      %v1914 = vpop.f32.mrb[0].mxu0
      %v1915 = vadd.f32 0.0, %v1914
      %v1916 = vpop.f32.mrb[0].mxu0
      %1917 = vmatprep.mubr.f32.mxu0 0.0
      %1918 = vmatmul.mubr.f32.gmra.mrb[0].mxu0 %v1737
      %v1919 = vpop.f32.mrb[0].mxu0
      %v1920 = vadd.f32 0.0, %v1919
      %v1921 = vpop.f32.mrb[0].mxu0
      %1922 = vmatprep.mubr.f32.mxu0 0.0
      %1923 = vmatmul.mubr.f32.gmra.mrb[0].mxu0 %v1740
      %v1924 = vpop.f32.mrb[0].mxu0
      %v1925 = vadd.f32 0.0, %v1924
      %v1926 = vpop.f32.mrb[0].mxu0
      %1927 = vmatprep.mubr.f32.mxu0 0.0
      %1928 = vmatmul.mubr.f32.gmra.mrb[0].mxu0 %v1743
      %v1929 = vpop.f32.mrb[0].mxu0
      %v1930 = vadd.f32 0.0, %v1929
      %v1931 = vpop.f32.mrb[0].mxu0
      %1932 = vmatprep.mubr.f32.mxu0 0.0
      %1933 = vmatmul.mubr.f32.gmra.mrb[0].mxu0 %v1746
      %v1934 = vpop.f32.mrb[0].mxu0
      %v1935 = vadd.f32 0.0, %v1934
      %v1936 = vpop.f32.mrb[0].mxu0
      %1937 = vmatprep.mubr.f32.mxu0 0.0
      %1938 = vmatmul.mubr.f32.gmra.mrb[0].mxu0 %v1749
      %v1939 = vpop.f32.mrb[0].mxu0
      %v1940 = vadd.f32 0.0, %v1939
      %v1941 = vpop.f32.mrb[0].mxu0
      %1942 = vmatprep.mubr.f32.mxu0 0.0
      %1943 = vmatmul.mubr.f32.gmra.mrb[0].mxu0 %v1752
      %v1944 = vpop.f32.mrb[0].mxu0
      %v1945 = vadd.f32 0.0, %v1944
      %v1946 = vpop.f32.mrb[0].mxu0
      %1947 = vmatprep.mubr.f32.mxu0 0.0
      %1948 = vmatmul.mubr.f32.gmra.mrb[0].mxu0 %v1755
      %v1949 = vpop.f32.mrb[0].mxu0
      %v1950 = vadd.f32 0.0, %v1949
      %v1951 = vpop.f32.mrb[0].mxu0
      %1952 = vmatprep.mubr.f32.mxu0 0.0
      %1953 = vmatmul.mubr.f32.gmra.mrb[0].mxu0 %v1758
      %v1954 = vpop.f32.mrb[0].mxu0
      %v1955 = vadd.f32 0.0, %v1954
      %v1956 = vpop.f32.mrb[0].mxu0
      %1957 = vmatprep.mubr.f32.mxu0 0.0
      %1958 = vmatmul.mubr.f32.gmra.mrb[0].mxu0 %v1761
      %v1959 = vpop.f32.mrb[0].mxu0
      %v1960 = vadd.f32 0.0, %v1959
      %v1961 = vpop.f32.mrb[0].mxu0
      %1962 = vmatprep.mubr.f32.mxu0 0.0
      %1963 = vmatmul.mubr.f32.gmra.mrb[0].mxu0 %v1764
      %v1964 = vpop.f32.mrb[0].mxu0
      %v1965 = vadd.f32 0.0, %v1964
      %v1966 = vpop.f32.mrb[0].mxu0
      %1967 = vmatprep.mubr.f32.mxu0 0.0
      %1968 = vmatmul.mubr.f32.gmra.mrb[0].mxu0 %v1767
      %v1969 = vpop.f32.mrb[0].mxu0
      %v1970 = vadd.f32 0.0, %v1969
      %v1971 = vpop.f32.mrb[0].mxu0
      %1972 = vmatprep.mubr.f32.mxu0 0.0
      %1973 = vmatmul.mubr.f32.gmra.mrb[0].mxu0 %v1770
      %v1974 = vpop.f32.mrb[0].mxu0
      %v1975 = vadd.f32 0.0, %v1974
      %v1976 = vpop.f32.mrb[0].mxu0
      %1977 = vmatprep.mubr.f32.mxu0 0.0
      %1978 = vmatmul.mubr.f32.gmra.mrb[0].mxu0 %v1773
      %v1979 = vpop.f32.mrb[0].mxu0
      %v1980 = vadd.f32 0.0, %v1979
      %v1981 = vpop.f32.mrb[0].mxu0
      %1982 = vmatprep.mubr.f32.mxu0 0.0
      %1983 = vmatmul.mubr.f32.gmra.mrb[0].mxu0 %v1776
      %v1984 = vpop.f32.mrb[0].mxu0
      %v1985 = vadd.f32 0.0, %v1984
      %v1986 = vpop.f32.mrb[0].mxu0
      %1987 = vmatprep.mubr.f32.mxu0 0.0
      %1988 = vmatmul.mubr.f32.gmra.mrb[0].mxu0 %v1779
      %v1989 = vpop.f32.mrb[0].mxu0
      %v1990 = vadd.f32 0.0, %v1989
      %v1991 = vpop.f32.mrb[0].mxu0
      %1992 = vmatprep.mubr.f32.mxu0 0.0
      %1993 = vmatmul.mubr.f32.gmra.mrb[0].mxu0 %v1782
      %v1994 = vpop.f32.mrb[0].mxu0
      %v1995 = vadd.f32 0.0, %v1994
      %v1996 = vpop.f32.mrb[0].mxu0
      %1997 = vmatprep.mubr.f32.mxu0 0.0
      %1998 = vmatmul.mubr.f32.gmra.mrb[0].mxu0 %v1785
      %v1999 = vpop.f32.mrb[0].mxu0
      %v2000 = vadd.f32 0.0, %v1999
      %v2001 = vpop.f32.mrb[0].mxu0
      %2002 = vmatprep.mubr.f32.mxu0 0.0
      %2003 = vmatmul.mubr.f32.gmra.mrb[0].mxu0 %v1788
      %v2004 = vpop.f32.mrb[0].mxu0
      %v2005 = vadd.f32 0.0, %v2004
      %v2006 = vpop.f32.mrb[0].mxu0
      %2007 = vmatprep.mubr.f32.mxu0 0.0
      %2008 = vmatmul.mubr.f32.gmra.mrb[0].mxu0 %v1791
      %v2009 = vpop.f32.mrb[0].mxu0
      %v2010 = vadd.f32 0.0, %v2009
      %v2011 = vpop.f32.mrb[0].mxu0
      %2012 = vmatprep.mubr.f32.mxu0 0.0
      %2013 = vmatmul.mubr.f32.gmra.mrb[0].mxu0 %v1794
      %v2014 = vpop.f32.mrb[0].mxu0
      %v2015 = vadd.f32 0.0, %v2014
      %v2016 = vpop.f32.mrb[0].mxu0
      %2017 = vmatprep.mubr.f32.mxu0 0.0
      %2018 = vmatmul.mubr.f32.gmra.mrb[0].mxu0 %v1797
      %v2019 = vpop.f32.mrb[0].mxu0
      %v2020 = vadd.f32 0.0, %v2019
      %v2021 = vpop.f32.mrb[0].mxu0
      %2022 = vmatprep.mubr.f32.mxu0 0.0
      %2023 = vmatmul.mubr.f32.gmra.mrb[0].mxu0 %v1800
      %v2024 = vpop.f32.mrb[0].mxu0
      %v2025 = vadd.f32 0.0, %v2024
      %v2026 = vpop.f32.mrb[0].mxu0
      %2027 = vmatprep.mubr.f32.mxu0 0.0
      %2028 = vmatmul.mubr.f32.gmra.mrb[0].mxu0 %v1803
      %v2029 = vpop.f32.mrb[0].mxu0
      %v2030 = vadd.f32 0.0, %v2029
      %v2031 = vpop.f32.mrb[0].mxu0
      %2032 = vdwg.mxu0
      %v2033 = vadd.f32 %v1677, %v1875
      %v2034 = vadd.f32 %v1678, %v1880
      %v2035 = vadd.f32 %v1679, %v1885
      %v2036 = vadd.f32 %v1680, %v1890
      %v2037 = vadd.f32 %v1681, %v1895
      %v2038 = vadd.f32 %v1682, %v1900
      %v2039 = vadd.f32 %v1683, %v1905
      %v2040 = vadd.f32 %v1684, %v1910
      %v2041 = vadd.f32 %v1685, %v1915
      %v2042 = vadd.f32 %v1686, %v1920
      %v2043 = vadd.f32 %v1687, %v1925
      %v2044 = vadd.f32 %v1688, %v1930
      %v2045 = vadd.f32 %v1689, %v1935
      %v2046 = vadd.f32 %v1690, %v1940
      %v2047 = vadd.f32 %v1691, %v1945
      %v2048 = vadd.f32 %v1692, %v1950
      %v2049 = vadd.f32 %v1693, %v1955
      %v2050 = vadd.f32 %v1694, %v1960
      %v2051 = vadd.f32 %v1695, %v1965
      %v2052 = vadd.f32 %v1696, %v1970
      %v2053 = vadd.f32 %v1697, %v1975
      %v2054 = vadd.f32 %v1698, %v1980
      %v2055 = vadd.f32 %v1699, %v1985
      %v2056 = vadd.f32 %v1700, %v1990
      %v2057 = vadd.f32 %v1701, %v1995
      %v2058 = vadd.f32 %v1702, %v2000
      %v2059 = vadd.f32 %v1703, %v2005
      %v2060 = vadd.f32 %v1704, %v2010
      %v2061 = vadd.f32 %v1705, %v2015
      %v2062 = vadd.f32 %v1706, %v2020
      %v2063 = vadd.f32 %v1707, %v2025
      %v2064 = vadd.f32 %v1708, %v2030
      %2065 = vst.msk [vmem:[#allocation2] sm:$0xff] %vm226, %v2033
      %2066 = vst.msk [vmem:[#allocation2 + $0x8] sm:$0xff] %vm226, %v2034
      %2067 = vst.msk [vmem:[#allocation2 + $0x10] sm:$0xff] %vm226, %v2035
      %2068 = vst.msk [vmem:[#allocation2 + $0x18] sm:$0xff] %vm226, %v2036
      %2069 = vst.msk [vmem:[#allocation2 + $0x20] sm:$0xff] %vm226, %v2037
      %2070 = vst.msk [vmem:[#allocation2 + $0x28] sm:$0xff] %vm226, %v2038
      %2071 = vst.msk [vmem:[#allocation2 + $0x30] sm:$0xff] %vm226, %v2039
      %2072 = vst.msk [vmem:[#allocation2 + $0x38] sm:$0xff] %vm226, %v2040
      %2073 = vst.msk [vmem:[#allocation2 + $0x40] sm:$0xff] %vm226, %v2041
      %2074 = vst.msk [vmem:[#allocation2 + $0x48] sm:$0xff] %vm226, %v2042
      %2075 = vst.msk [vmem:[#allocation2 + $0x50] sm:$0xff] %vm226, %v2043
      %2076 = vst.msk [vmem:[#allocation2 + $0x58] sm:$0xff] %vm226, %v2044
      %2077 = vst.msk [vmem:[#allocation2 + $0x60] sm:$0xff] %vm226, %v2045
      %2078 = vst.msk [vmem:[#allocation2 + $0x68] sm:$0xff] %vm226, %v2046
      %2079 = vst.msk [vmem:[#allocation2 + $0x70] sm:$0xff] %vm226, %v2047
      %2080 = vst.msk [vmem:[#allocation2 + $0x78] sm:$0xff] %vm226, %v2048
      %2081 = vst.msk [vmem:[#allocation2 + $0x80] sm:$0xff] %vm226, %v2049
      %2082 = vst.msk [vmem:[#allocation2 + $0x88] sm:$0xff] %vm226, %v2050
      %2083 = vst.msk [vmem:[#allocation2 + $0x90] sm:$0xff] %vm226, %v2051
      %2084 = vst.msk [vmem:[#allocation2 + $0x98] sm:$0xff] %vm226, %v2052
      %2085 = vst.msk [vmem:[#allocation2 + $0xa0] sm:$0xff] %vm226, %v2053
      %2086 = vst.msk [vmem:[#allocation2 + $0xa8] sm:$0xff] %vm226, %v2054
      %2087 = vst.msk [vmem:[#allocation2 + $0xb0] sm:$0xff] %vm226, %v2055
      %2088 = vst.msk [vmem:[#allocation2 + $0xb8] sm:$0xff] %vm226, %v2056
      %2089 = vst.msk [vmem:[#allocation2 + $0xc0] sm:$0xff] %vm226, %v2057
      %2090 = vst.msk [vmem:[#allocation2 + $0xc8] sm:$0xff] %vm226, %v2058
      %2091 = vst.msk [vmem:[#allocation2 + $0xd0] sm:$0xff] %vm226, %v2059
      %2092 = vst.msk [vmem:[#allocation2 + $0xd8] sm:$0xff] %vm226, %v2060
      %2093 = vst.msk [vmem:[#allocation2 + $0xe0] sm:$0xff] %vm226, %v2061
      %2094 = vst.msk [vmem:[#allocation2 + $0xe8] sm:$0xff] %vm226, %v2062
      %2095 = vst.msk [vmem:[#allocation2 + $0xf0] sm:$0xff] %vm226, %v2063
      %2096 = vst.msk [vmem:[#allocation2 + $0xf8] sm:$0xff] %vm226, %v2064
      %v2097 = vld [vmem:[%s1644 + $0x1] sm:$0xff]
      %v2098 = vld [vmem:[%s1644 + $0x9] sm:$0xff]
      %v2099 = vld [vmem:[%s1644 + $0x19] sm:$0xff]
      %v2100 = vld [vmem:[%s1644 + $0x21] sm:$0xff]
      %v2101 = vld [vmem:[%s1644 + $0x31] sm:$0xff]
      %v2102 = vld [vmem:[%s1644 + $0x39] sm:$0xff]
      %v2103 = vld [vmem:[%s1644 + $0x49] sm:$0xff]
      %v2104 = vld [vmem:[%s1644 + $0x51] sm:$0xff]
      %v2105 = vld [vmem:[%s1644 + $0x61] sm:$0xff]
      %v2106 = vld [vmem:[%s1644 + $0x69] sm:$0xff]
      %v2107 = vld [vmem:[%s1644 + $0x79] sm:$0xff]
      %v2108 = vld [vmem:[%s1644 + $0x81] sm:$0xff]
      %v2109 = vld [vmem:[%s1644 + $0x91] sm:$0xff]
      %v2110 = vld [vmem:[%s1644 + $0x99] sm:$0xff]
      %v2111 = vld [vmem:[%s1644 + $0xa9] sm:$0xff]
      %v2112 = vld [vmem:[%s1644 + $0xb1] sm:$0xff]
      %v2113 = vld [vmem:[%s1644 + $0xc1] sm:$0xff]
      %v2114 = vld [vmem:[%s1644 + $0xc9] sm:$0xff]
      %v2115 = vld [vmem:[%s1644 + $0xd9] sm:$0xff]
      %v2116 = vld [vmem:[%s1644 + $0xe1] sm:$0xff]
      %v2117 = vld [vmem:[%s1644 + $0xf1] sm:$0xff]
      %v2118 = vld [vmem:[%s1644 + $0xf9] sm:$0xff]
      %v2119 = vld [vmem:[%s1644 + $0x109] sm:$0xff]
      %v2120 = vld [vmem:[%s1644 + $0x111] sm:$0xff]
      %v2121 = vld [vmem:[%s1644 + $0x121] sm:$0xff]
      %v2122 = vld [vmem:[%s1644 + $0x129] sm:$0xff]
      %v2123 = vld [vmem:[%s1644 + $0x139] sm:$0xff]
      %v2124 = vld [vmem:[%s1644 + $0x141] sm:$0xff]
      %v2125 = vld [vmem:[%s1644 + $0x151] sm:$0xff]
      %v2126 = vld [vmem:[%s1644 + $0x159] sm:$0xff]
      %v2127 = vld [vmem:[%s1644 + $0x169] sm:$0xff]
      %v2128 = vld [vmem:[%s1644 + $0x171] sm:$0xff]
      %v2129 = vld [vmem:[#allocation2] sm:$0xff]
      %v2130 = vld [vmem:[#allocation2 + $0x8] sm:$0xff]
      %v2131 = vld [vmem:[#allocation2 + $0x10] sm:$0xff]
      %v2132 = vld [vmem:[#allocation2 + $0x18] sm:$0xff]
      %v2133 = vld [vmem:[#allocation2 + $0x20] sm:$0xff]
      %v2134 = vld [vmem:[#allocation2 + $0x28] sm:$0xff]
      %v2135 = vld [vmem:[#allocation2 + $0x30] sm:$0xff]
      %v2136 = vld [vmem:[#allocation2 + $0x38] sm:$0xff]
      %v2137 = vld [vmem:[#allocation2 + $0x40] sm:$0xff]
      %v2138 = vld [vmem:[#allocation2 + $0x48] sm:$0xff]
      %v2139 = vld [vmem:[#allocation2 + $0x50] sm:$0xff]
      %v2140 = vld [vmem:[#allocation2 + $0x58] sm:$0xff]
      %v2141 = vld [vmem:[#allocation2 + $0x60] sm:$0xff]
      %v2142 = vld [vmem:[#allocation2 + $0x68] sm:$0xff]
      %v2143 = vld [vmem:[#allocation2 + $0x70] sm:$0xff]
      %v2144 = vld [vmem:[#allocation2 + $0x78] sm:$0xff]
      %v2145 = vld [vmem:[#allocation2 + $0x80] sm:$0xff]
      %v2146 = vld [vmem:[#allocation2 + $0x88] sm:$0xff]
      %v2147 = vld [vmem:[#allocation2 + $0x90] sm:$0xff]
      %v2148 = vld [vmem:[#allocation2 + $0x98] sm:$0xff]
      %v2149 = vld [vmem:[#allocation2 + $0xa0] sm:$0xff]
      %v2150 = vld [vmem:[#allocation2 + $0xa8] sm:$0xff]
      %v2151 = vld [vmem:[#allocation2 + $0xb0] sm:$0xff]
      %v2152 = vld [vmem:[#allocation2 + $0xb8] sm:$0xff]
      %v2153 = vld [vmem:[#allocation2 + $0xc0] sm:$0xff]
      %v2154 = vld [vmem:[#allocation2 + $0xc8] sm:$0xff]
      %v2155 = vld [vmem:[#allocation2 + $0xd0] sm:$0xff]
      %v2156 = vld [vmem:[#allocation2 + $0xd8] sm:$0xff]
      %v2157 = vld [vmem:[#allocation2 + $0xe0] sm:$0xff]
      %v2158 = vld [vmem:[#allocation2 + $0xe8] sm:$0xff]
      %v2159 = vld [vmem:[#allocation2 + $0xf0] sm:$0xff]
      %v2160 = vld [vmem:[#allocation2 + $0xf8] sm:$0xff]
      %v2162 = vsel %vm350, %v2097, 0
      %v2165 = vsel %vm350, %v2098, 0
      %v2168 = vsel %vm350, %v2099, 0
      %v2171 = vsel %vm350, %v2100, 0
      %v2174 = vsel %vm350, %v2101, 0
      %v2177 = vsel %vm350, %v2102, 0
      %v2180 = vsel %vm350, %v2103, 0
      %v2183 = vsel %vm350, %v2104, 0
      %v2186 = vsel %vm350, %v2105, 0
      %v2189 = vsel %vm350, %v2106, 0
      %v2192 = vsel %vm350, %v2107, 0
      %v2195 = vsel %vm350, %v2108, 0
      %v2198 = vsel %vm350, %v2109, 0
      %v2201 = vsel %vm350, %v2110, 0
      %v2204 = vsel %vm350, %v2111, 0
      %v2207 = vsel %vm350, %v2112, 0
      %v2210 = vsel %vm350, %v2113, 0
      %v2213 = vsel %vm350, %v2114, 0
      %v2216 = vsel %vm350, %v2115, 0
      %v2219 = vsel %vm350, %v2116, 0
      %v2222 = vsel %vm350, %v2117, 0
      %v2225 = vsel %vm350, %v2118, 0
      %v2228 = vsel %vm350, %v2119, 0
      %v2231 = vsel %vm350, %v2120, 0
      %v2234 = vsel %vm350, %v2121, 0
      %v2237 = vsel %vm350, %v2122, 0
      %v2240 = vsel %vm350, %v2123, 0
      %v2243 = vsel %vm350, %v2124, 0
      %v2246 = vsel %vm350, %v2125, 0
      %v2249 = vsel %vm350, %v2126, 0
      %v2252 = vsel %vm350, %v2127, 0
      %v2255 = vsel %vm350, %v2128, 0
      %v2258 = vsel %vm447, %v281, 0
      %2260 = vmatprep.subr.mxu0 0.0
      %2261 = vmatpush1.msra.mxu0 %v2258
      %2262 = vmatprep.subr.mxu0 0.0
      %2263 = vmatpush1.msra.mxu0 0.0
      %2264 = vmatprep.subr.mxu0 0.0
      %2265 = vmatpush1.msra.mxu0 0.0
      %2266 = vmatprep.subr.mxu0 0.0
      %2267 = vmatpush1.msra.mxu0 0.0
      %2268 = vmatprep.subr.mxu0 0.0
      %2269 = vmatpush1.msra.mxu0 0.0
      %2270 = vmatprep.subr.mxu0 0.0
      %2271 = vmatpush1.msra.mxu0 0.0
      %2272 = vmatprep.subr.mxu0 0.0
      %2273 = vmatpush1.msra.mxu0 0.0
      %2274 = vmatprep.subr.mxu0 0.0
      %2275 = vmatpush1.msra.mxu0 0.0
      %2276 = vmatprep.subr.mxu0 0.0
      %2277 = vmatpush1.msra.mxu0 0.0
      %2278 = vmatprep.subr.mxu0 0.0
      %2279 = vmatpush1.msra.mxu0 0.0
      %2280 = vmatprep.subr.mxu0 0.0
      %2281 = vmatpush1.msra.mxu0 0.0
      %2282 = vmatprep.subr.mxu0 0.0
      %2283 = vmatpush1.msra.mxu0 0.0
      %2284 = vmatprep.subr.mxu0 0.0
      %2285 = vmatpush1.msra.mxu0 0.0
      %2286 = vmatprep.subr.mxu0 0.0
      %2287 = vmatpush1.msra.mxu0 0.0
      %2288 = vmatprep.subr.mxu0 0.0
      %2289 = vmatpush1.msra.mxu0 0.0
      %2290 = vmatprep.subr.mxu0 0.0
      %2291 = vmatpush1.msra.mxu0 0.0
      %2292 = vmatprep.subr.mxu0 0.0
      %2293 = vmatpush1.msra.mxu0 0.0
      %2294 = vmatprep.subr.mxu0 0.0
      %2295 = vmatpush1.msra.mxu0 0.0
      %2296 = vmatprep.subr.mxu0 0.0
      %2297 = vmatpush1.msra.mxu0 0.0
      %2298 = vmatprep.subr.mxu0 0.0
      %2299 = vmatpush1.msra.mxu0 0.0
      %2300 = vmatprep.subr.mxu0 0.0
      %2301 = vmatpush1.msra.mxu0 0.0
      %2302 = vmatprep.subr.mxu0 0.0
      %2303 = vmatpush1.msra.mxu0 0.0
      %2304 = vmatprep.subr.mxu0 0.0
      %2305 = vmatpush1.msra.mxu0 0.0
      %2306 = vmatprep.subr.mxu0 0.0
      %2307 = vmatpush1.msra.mxu0 0.0
      %2308 = vmatprep.subr.mxu0 0.0
      %2309 = vmatpush1.msra.mxu0 0.0
      %2310 = vmatprep.subr.mxu0 0.0
      %2311 = vmatpush1.msra.mxu0 0.0
      %2312 = vmatprep.subr.mxu0 0.0
      %2313 = vmatpush1.msra.mxu0 0.0
      %2314 = vmatprep.subr.mxu0 0.0
      %2315 = vmatpush1.msra.mxu0 0.0
      %2316 = vmatprep.subr.mxu0 0.0
      %2317 = vmatpush1.msra.mxu0 0.0
      %2318 = vmatprep.subr.mxu0 0.0
      %2319 = vmatpush1.msra.mxu0 0.0
      %2320 = vmatprep.subr.mxu0 0.0
      %2321 = vmatpush1.msra.mxu0 0.0
      %2322 = vmatprep.subr.mxu0 0.0
      %2323 = vmatpush1.msra.mxu0 0.0
      %2324 = vmatprep.mubr.f32.mxu0 0.0
      %2325 = vmatmul.mubr.f32.gmra.mrb[0].mxu0 %v2162
      %v2326 = vpop.f32.mrb[0].mxu0
      %v2327 = vadd.f32 0.0, %v2326
      %v2328 = vpop.f32.mrb[0].mxu0
      %2329 = vmatprep.mubr.f32.mxu0 0.0
      %2330 = vmatmul.mubr.f32.gmra.mrb[0].mxu0 %v2165
      %v2331 = vpop.f32.mrb[0].mxu0
      %v2332 = vadd.f32 0.0, %v2331
      %v2333 = vpop.f32.mrb[0].mxu0
      %2334 = vmatprep.mubr.f32.mxu0 0.0
      %2335 = vmatmul.mubr.f32.gmra.mrb[0].mxu0 %v2168
      %v2336 = vpop.f32.mrb[0].mxu0
      %v2337 = vadd.f32 0.0, %v2336
      %v2338 = vpop.f32.mrb[0].mxu0
      %2339 = vmatprep.mubr.f32.mxu0 0.0
      %2340 = vmatmul.mubr.f32.gmra.mrb[0].mxu0 %v2171
      %v2341 = vpop.f32.mrb[0].mxu0
      %v2342 = vadd.f32 0.0, %v2341
      %v2343 = vpop.f32.mrb[0].mxu0
      %2344 = vmatprep.mubr.f32.mxu0 0.0
      %2345 = vmatmul.mubr.f32.gmra.mrb[0].mxu0 %v2174
      %v2346 = vpop.f32.mrb[0].mxu0
      %v2347 = vadd.f32 0.0, %v2346
      %v2348 = vpop.f32.mrb[0].mxu0
      %2349 = vmatprep.mubr.f32.mxu0 0.0
      %2350 = vmatmul.mubr.f32.gmra.mrb[0].mxu0 %v2177
      %v2351 = vpop.f32.mrb[0].mxu0
      %v2352 = vadd.f32 0.0, %v2351
      %v2353 = vpop.f32.mrb[0].mxu0
      %2354 = vmatprep.mubr.f32.mxu0 0.0
      %2355 = vmatmul.mubr.f32.gmra.mrb[0].mxu0 %v2180
      %v2356 = vpop.f32.mrb[0].mxu0
      %v2357 = vadd.f32 0.0, %v2356
      %v2358 = vpop.f32.mrb[0].mxu0
      %2359 = vmatprep.mubr.f32.mxu0 0.0
      %2360 = vmatmul.mubr.f32.gmra.mrb[0].mxu0 %v2183
      %v2361 = vpop.f32.mrb[0].mxu0
      %v2362 = vadd.f32 0.0, %v2361
      %v2363 = vpop.f32.mrb[0].mxu0
      %2364 = vmatprep.mubr.f32.mxu0 0.0
      %2365 = vmatmul.mubr.f32.gmra.mrb[0].mxu0 %v2186
      %v2366 = vpop.f32.mrb[0].mxu0
      %v2367 = vadd.f32 0.0, %v2366
      %v2368 = vpop.f32.mrb[0].mxu0
      %2369 = vmatprep.mubr.f32.mxu0 0.0
      %2370 = vmatmul.mubr.f32.gmra.mrb[0].mxu0 %v2189
      %v2371 = vpop.f32.mrb[0].mxu0
      %v2372 = vadd.f32 0.0, %v2371
      %v2373 = vpop.f32.mrb[0].mxu0
      %2374 = vmatprep.mubr.f32.mxu0 0.0
      %2375 = vmatmul.mubr.f32.gmra.mrb[0].mxu0 %v2192
      %v2376 = vpop.f32.mrb[0].mxu0
      %v2377 = vadd.f32 0.0, %v2376
      %v2378 = vpop.f32.mrb[0].mxu0
      %2379 = vmatprep.mubr.f32.mxu0 0.0
      %2380 = vmatmul.mubr.f32.gmra.mrb[0].mxu0 %v2195
      %v2381 = vpop.f32.mrb[0].mxu0
      %v2382 = vadd.f32 0.0, %v2381
      %v2383 = vpop.f32.mrb[0].mxu0
      %2384 = vmatprep.mubr.f32.mxu0 0.0
      %2385 = vmatmul.mubr.f32.gmra.mrb[0].mxu0 %v2198
      %v2386 = vpop.f32.mrb[0].mxu0
      %v2387 = vadd.f32 0.0, %v2386
      %v2388 = vpop.f32.mrb[0].mxu0
      %2389 = vmatprep.mubr.f32.mxu0 0.0
      %2390 = vmatmul.mubr.f32.gmra.mrb[0].mxu0 %v2201
      %v2391 = vpop.f32.mrb[0].mxu0
      %v2392 = vadd.f32 0.0, %v2391
      %v2393 = vpop.f32.mrb[0].mxu0
      %2394 = vmatprep.mubr.f32.mxu0 0.0
      %2395 = vmatmul.mubr.f32.gmra.mrb[0].mxu0 %v2204
      %v2396 = vpop.f32.mrb[0].mxu0
      %v2397 = vadd.f32 0.0, %v2396
      %v2398 = vpop.f32.mrb[0].mxu0
      %2399 = vmatprep.mubr.f32.mxu0 0.0
      %2400 = vmatmul.mubr.f32.gmra.mrb[0].mxu0 %v2207
      %v2401 = vpop.f32.mrb[0].mxu0
      %v2402 = vadd.f32 0.0, %v2401
      %v2403 = vpop.f32.mrb[0].mxu0
      %2404 = vmatprep.mubr.f32.mxu0 0.0
      %2405 = vmatmul.mubr.f32.gmra.mrb[0].mxu0 %v2210
      %v2406 = vpop.f32.mrb[0].mxu0
      %v2407 = vadd.f32 0.0, %v2406
      %v2408 = vpop.f32.mrb[0].mxu0
      %2409 = vmatprep.mubr.f32.mxu0 0.0
      %2410 = vmatmul.mubr.f32.gmra.mrb[0].mxu0 %v2213
      %v2411 = vpop.f32.mrb[0].mxu0
      %v2412 = vadd.f32 0.0, %v2411
      %v2413 = vpop.f32.mrb[0].mxu0
      %2414 = vmatprep.mubr.f32.mxu0 0.0
      %2415 = vmatmul.mubr.f32.gmra.mrb[0].mxu0 %v2216
      %v2416 = vpop.f32.mrb[0].mxu0
      %v2417 = vadd.f32 0.0, %v2416
      %v2418 = vpop.f32.mrb[0].mxu0
      %2419 = vmatprep.mubr.f32.mxu0 0.0
      %2420 = vmatmul.mubr.f32.gmra.mrb[0].mxu0 %v2219
      %v2421 = vpop.f32.mrb[0].mxu0
      %v2422 = vadd.f32 0.0, %v2421
      %v2423 = vpop.f32.mrb[0].mxu0
      %2424 = vmatprep.mubr.f32.mxu0 0.0
      %2425 = vmatmul.mubr.f32.gmra.mrb[0].mxu0 %v2222
      %v2426 = vpop.f32.mrb[0].mxu0
      %v2427 = vadd.f32 0.0, %v2426
      %v2428 = vpop.f32.mrb[0].mxu0
      %2429 = vmatprep.mubr.f32.mxu0 0.0
      %2430 = vmatmul.mubr.f32.gmra.mrb[0].mxu0 %v2225
      %v2431 = vpop.f32.mrb[0].mxu0
      %v2432 = vadd.f32 0.0, %v2431
      %v2433 = vpop.f32.mrb[0].mxu0
      %2434 = vmatprep.mubr.f32.mxu0 0.0
      %2435 = vmatmul.mubr.f32.gmra.mrb[0].mxu0 %v2228
      %v2436 = vpop.f32.mrb[0].mxu0
      %v2437 = vadd.f32 0.0, %v2436
      %v2438 = vpop.f32.mrb[0].mxu0
      %2439 = vmatprep.mubr.f32.mxu0 0.0
      %2440 = vmatmul.mubr.f32.gmra.mrb[0].mxu0 %v2231
      %v2441 = vpop.f32.mrb[0].mxu0
      %v2442 = vadd.f32 0.0, %v2441
      %v2443 = vpop.f32.mrb[0].mxu0
      %2444 = vmatprep.mubr.f32.mxu0 0.0
      %2445 = vmatmul.mubr.f32.gmra.mrb[0].mxu0 %v2234
      %v2446 = vpop.f32.mrb[0].mxu0
      %v2447 = vadd.f32 0.0, %v2446
      %v2448 = vpop.f32.mrb[0].mxu0
      %2449 = vmatprep.mubr.f32.mxu0 0.0
      %2450 = vmatmul.mubr.f32.gmra.mrb[0].mxu0 %v2237
      %v2451 = vpop.f32.mrb[0].mxu0
      %v2452 = vadd.f32 0.0, %v2451
      %v2453 = vpop.f32.mrb[0].mxu0
      %2454 = vmatprep.mubr.f32.mxu0 0.0
      %2455 = vmatmul.mubr.f32.gmra.mrb[0].mxu0 %v2240
      %v2456 = vpop.f32.mrb[0].mxu0
      %v2457 = vadd.f32 0.0, %v2456
      %v2458 = vpop.f32.mrb[0].mxu0
      %2459 = vmatprep.mubr.f32.mxu0 0.0
      %2460 = vmatmul.mubr.f32.gmra.mrb[0].mxu0 %v2243
      %v2461 = vpop.f32.mrb[0].mxu0
      %v2462 = vadd.f32 0.0, %v2461
      %v2463 = vpop.f32.mrb[0].mxu0
      %2464 = vmatprep.mubr.f32.mxu0 0.0
      %2465 = vmatmul.mubr.f32.gmra.mrb[0].mxu0 %v2246
      %v2466 = vpop.f32.mrb[0].mxu0
      %v2467 = vadd.f32 0.0, %v2466
      %v2468 = vpop.f32.mrb[0].mxu0
      %2469 = vmatprep.mubr.f32.mxu0 0.0
      %2470 = vmatmul.mubr.f32.gmra.mrb[0].mxu0 %v2249
      %v2471 = vpop.f32.mrb[0].mxu0
      %v2472 = vadd.f32 0.0, %v2471
      %v2473 = vpop.f32.mrb[0].mxu0
      %2474 = vmatprep.mubr.f32.mxu0 0.0
      %2475 = vmatmul.mubr.f32.gmra.mrb[0].mxu0 %v2252
      %v2476 = vpop.f32.mrb[0].mxu0
      %v2477 = vadd.f32 0.0, %v2476
      %v2478 = vpop.f32.mrb[0].mxu0
      %2479 = vmatprep.mubr.f32.mxu0 0.0
      %2480 = vmatmul.mubr.f32.gmra.mrb[0].mxu0 %v2255
      %v2481 = vpop.f32.mrb[0].mxu0
      %v2482 = vadd.f32 0.0, %v2481
      %v2483 = vpop.f32.mrb[0].mxu0
      %2484 = vdwg.mxu0
      %v2485 = vadd.f32 %v2129, %v2327
      %v2486 = vadd.f32 %v2130, %v2332
      %v2487 = vadd.f32 %v2131, %v2337
      %v2488 = vadd.f32 %v2132, %v2342
      %v2489 = vadd.f32 %v2133, %v2347
      %v2490 = vadd.f32 %v2134, %v2352
      %v2491 = vadd.f32 %v2135, %v2357
      %v2492 = vadd.f32 %v2136, %v2362
      %v2493 = vadd.f32 %v2137, %v2367
      %v2494 = vadd.f32 %v2138, %v2372
      %v2495 = vadd.f32 %v2139, %v2377
      %v2496 = vadd.f32 %v2140, %v2382
      %v2497 = vadd.f32 %v2141, %v2387
      %v2498 = vadd.f32 %v2142, %v2392
      %v2499 = vadd.f32 %v2143, %v2397
      %v2500 = vadd.f32 %v2144, %v2402
      %v2501 = vadd.f32 %v2145, %v2407
      %v2502 = vadd.f32 %v2146, %v2412
      %v2503 = vadd.f32 %v2147, %v2417
      %v2504 = vadd.f32 %v2148, %v2422
      %v2505 = vadd.f32 %v2149, %v2427
      %v2506 = vadd.f32 %v2150, %v2432
      %v2507 = vadd.f32 %v2151, %v2437
      %v2508 = vadd.f32 %v2152, %v2442
      %v2509 = vadd.f32 %v2153, %v2447
      %v2510 = vadd.f32 %v2154, %v2452
      %v2511 = vadd.f32 %v2155, %v2457
      %v2512 = vadd.f32 %v2156, %v2462
      %v2513 = vadd.f32 %v2157, %v2467
      %v2514 = vadd.f32 %v2158, %v2472
      %v2515 = vadd.f32 %v2159, %v2477
      %v2516 = vadd.f32 %v2160, %v2482
      %2517 = vst.msk [vmem:[#allocation2] sm:$0xff] %vm226, %v2485
      %2518 = vst.msk [vmem:[#allocation2 + $0x8] sm:$0xff] %vm226, %v2486
      %2519 = vst.msk [vmem:[#allocation2 + $0x10] sm:$0xff] %vm226, %v2487
      %2520 = vst.msk [vmem:[#allocation2 + $0x18] sm:$0xff] %vm226, %v2488
      %2521 = vst.msk [vmem:[#allocation2 + $0x20] sm:$0xff] %vm226, %v2489
      %2522 = vst.msk [vmem:[#allocation2 + $0x28] sm:$0xff] %vm226, %v2490
      %2523 = vst.msk [vmem:[#allocation2 + $0x30] sm:$0xff] %vm226, %v2491
      %2524 = vst.msk [vmem:[#allocation2 + $0x38] sm:$0xff] %vm226, %v2492
      %2525 = vst.msk [vmem:[#allocation2 + $0x40] sm:$0xff] %vm226, %v2493
      %2526 = vst.msk [vmem:[#allocation2 + $0x48] sm:$0xff] %vm226, %v2494
      %2527 = vst.msk [vmem:[#allocation2 + $0x50] sm:$0xff] %vm226, %v2495
      %2528 = vst.msk [vmem:[#allocation2 + $0x58] sm:$0xff] %vm226, %v2496
      %2529 = vst.msk [vmem:[#allocation2 + $0x60] sm:$0xff] %vm226, %v2497
      %2530 = vst.msk [vmem:[#allocation2 + $0x68] sm:$0xff] %vm226, %v2498
      %2531 = vst.msk [vmem:[#allocation2 + $0x70] sm:$0xff] %vm226, %v2499
      %2532 = vst.msk [vmem:[#allocation2 + $0x78] sm:$0xff] %vm226, %v2500
      %2533 = vst.msk [vmem:[#allocation2 + $0x80] sm:$0xff] %vm226, %v2501
      %2534 = vst.msk [vmem:[#allocation2 + $0x88] sm:$0xff] %vm226, %v2502
      %2535 = vst.msk [vmem:[#allocation2 + $0x90] sm:$0xff] %vm226, %v2503
      %2536 = vst.msk [vmem:[#allocation2 + $0x98] sm:$0xff] %vm226, %v2504
      %2537 = vst.msk [vmem:[#allocation2 + $0xa0] sm:$0xff] %vm226, %v2505
      %2538 = vst.msk [vmem:[#allocation2 + $0xa8] sm:$0xff] %vm226, %v2506
      %2539 = vst.msk [vmem:[#allocation2 + $0xb0] sm:$0xff] %vm226, %v2507
      %2540 = vst.msk [vmem:[#allocation2 + $0xb8] sm:$0xff] %vm226, %v2508
      %2541 = vst.msk [vmem:[#allocation2 + $0xc0] sm:$0xff] %vm226, %v2509
      %2542 = vst.msk [vmem:[#allocation2 + $0xc8] sm:$0xff] %vm226, %v2510
      %2543 = vst.msk [vmem:[#allocation2 + $0xd0] sm:$0xff] %vm226, %v2511
      %2544 = vst.msk [vmem:[#allocation2 + $0xd8] sm:$0xff] %vm226, %v2512
      %2545 = vst.msk [vmem:[#allocation2 + $0xe0] sm:$0xff] %vm226, %v2513
      %2546 = vst.msk [vmem:[#allocation2 + $0xe8] sm:$0xff] %vm226, %v2514
      %2547 = vst.msk [vmem:[#allocation2 + $0xf0] sm:$0xff] %vm226, %v2515
      %2548 = vst.msk [vmem:[#allocation2 + $0xf8] sm:$0xff] %vm226, %v2516
      %v2549 = vld [vmem:[%s1644 + $0x2] sm:$0xff]
      %v2550 = vld [vmem:[%s1644 + $0xa] sm:$0xff]
      %v2551 = vld [vmem:[%s1644 + $0x1a] sm:$0xff]
      %v2552 = vld [vmem:[%s1644 + $0x22] sm:$0xff]
      %v2553 = vld [vmem:[%s1644 + $0x32] sm:$0xff]
      %v2554 = vld [vmem:[%s1644 + $0x3a] sm:$0xff]
      %v2555 = vld [vmem:[%s1644 + $0x4a] sm:$0xff]
      %v2556 = vld [vmem:[%s1644 + $0x52] sm:$0xff]
      %v2557 = vld [vmem:[%s1644 + $0x62] sm:$0xff]
      %v2558 = vld [vmem:[%s1644 + $0x6a] sm:$0xff]
      %v2559 = vld [vmem:[%s1644 + $0x7a] sm:$0xff]
      %v2560 = vld [vmem:[%s1644 + $0x82] sm:$0xff]
      %v2561 = vld [vmem:[%s1644 + $0x92] sm:$0xff]
      %v2562 = vld [vmem:[%s1644 + $0x9a] sm:$0xff]
      %v2563 = vld [vmem:[%s1644 + $0xaa] sm:$0xff]
      %v2564 = vld [vmem:[%s1644 + $0xb2] sm:$0xff]
      %v2565 = vld [vmem:[%s1644 + $0xc2] sm:$0xff]
      %v2566 = vld [vmem:[%s1644 + $0xca] sm:$0xff]
      %v2567 = vld [vmem:[%s1644 + $0xda] sm:$0xff]
      %v2568 = vld [vmem:[%s1644 + $0xe2] sm:$0xff]
      %v2569 = vld [vmem:[%s1644 + $0xf2] sm:$0xff]
      %v2570 = vld [vmem:[%s1644 + $0xfa] sm:$0xff]
      %v2571 = vld [vmem:[%s1644 + $0x10a] sm:$0xff]
      %v2572 = vld [vmem:[%s1644 + $0x112] sm:$0xff]
      %v2573 = vld [vmem:[%s1644 + $0x122] sm:$0xff]
      %v2574 = vld [vmem:[%s1644 + $0x12a] sm:$0xff]
      %v2575 = vld [vmem:[%s1644 + $0x13a] sm:$0xff]
      %v2576 = vld [vmem:[%s1644 + $0x142] sm:$0xff]
      %v2577 = vld [vmem:[%s1644 + $0x152] sm:$0xff]
      %v2578 = vld [vmem:[%s1644 + $0x15a] sm:$0xff]
      %v2579 = vld [vmem:[%s1644 + $0x16a] sm:$0xff]
      %v2580 = vld [vmem:[%s1644 + $0x172] sm:$0xff]
      %v2581 = vld [vmem:[#allocation2] sm:$0xff]
      %v2582 = vld [vmem:[#allocation2 + $0x8] sm:$0xff]
      %v2583 = vld [vmem:[#allocation2 + $0x10] sm:$0xff]
      %v2584 = vld [vmem:[#allocation2 + $0x18] sm:$0xff]
      %v2585 = vld [vmem:[#allocation2 + $0x20] sm:$0xff]
      %v2586 = vld [vmem:[#allocation2 + $0x28] sm:$0xff]
      %v2587 = vld [vmem:[#allocation2 + $0x30] sm:$0xff]
      %v2588 = vld [vmem:[#allocation2 + $0x38] sm:$0xff]
      %v2589 = vld [vmem:[#allocation2 + $0x40] sm:$0xff]
      %v2590 = vld [vmem:[#allocation2 + $0x48] sm:$0xff]
      %v2591 = vld [vmem:[#allocation2 + $0x50] sm:$0xff]
      %v2592 = vld [vmem:[#allocation2 + $0x58] sm:$0xff]
      %v2593 = vld [vmem:[#allocation2 + $0x60] sm:$0xff]
      %v2594 = vld [vmem:[#allocation2 + $0x68] sm:$0xff]
      %v2595 = vld [vmem:[#allocation2 + $0x70] sm:$0xff]
      %v2596 = vld [vmem:[#allocation2 + $0x78] sm:$0xff]
      %v2597 = vld [vmem:[#allocation2 + $0x80] sm:$0xff]
      %v2598 = vld [vmem:[#allocation2 + $0x88] sm:$0xff]
      %v2599 = vld [vmem:[#allocation2 + $0x90] sm:$0xff]
      %v2600 = vld [vmem:[#allocation2 + $0x98] sm:$0xff]
      %v2601 = vld [vmem:[#allocation2 + $0xa0] sm:$0xff]
      %v2602 = vld [vmem:[#allocation2 + $0xa8] sm:$0xff]
      %v2603 = vld [vmem:[#allocation2 + $0xb0] sm:$0xff]
      %v2604 = vld [vmem:[#allocation2 + $0xb8] sm:$0xff]
      %v2605 = vld [vmem:[#allocation2 + $0xc0] sm:$0xff]
      %v2606 = vld [vmem:[#allocation2 + $0xc8] sm:$0xff]
      %v2607 = vld [vmem:[#allocation2 + $0xd0] sm:$0xff]
      %v2608 = vld [vmem:[#allocation2 + $0xd8] sm:$0xff]
      %v2609 = vld [vmem:[#allocation2 + $0xe0] sm:$0xff]
      %v2610 = vld [vmem:[#allocation2 + $0xe8] sm:$0xff]
      %v2611 = vld [vmem:[#allocation2 + $0xf0] sm:$0xff]
      %v2612 = vld [vmem:[#allocation2 + $0xf8] sm:$0xff]
      %v2614 = vsel %vm350, %v2549, 0
      %v2617 = vsel %vm350, %v2550, 0
      %v2620 = vsel %vm350, %v2551, 0
      %v2623 = vsel %vm350, %v2552, 0
      %v2626 = vsel %vm350, %v2553, 0
      %v2629 = vsel %vm350, %v2554, 0
      %v2632 = vsel %vm350, %v2555, 0
      %v2635 = vsel %vm350, %v2556, 0
      %v2638 = vsel %vm350, %v2557, 0
      %v2641 = vsel %vm350, %v2558, 0
      %v2644 = vsel %vm350, %v2559, 0
      %v2647 = vsel %vm350, %v2560, 0
      %v2650 = vsel %vm350, %v2561, 0
      %v2653 = vsel %vm350, %v2562, 0
      %v2656 = vsel %vm350, %v2563, 0
      %v2659 = vsel %vm350, %v2564, 0
      %v2662 = vsel %vm350, %v2565, 0
      %v2665 = vsel %vm350, %v2566, 0
      %v2668 = vsel %vm350, %v2567, 0
      %v2671 = vsel %vm350, %v2568, 0
      %v2674 = vsel %vm350, %v2569, 0
      %v2677 = vsel %vm350, %v2570, 0
      %v2680 = vsel %vm350, %v2571, 0
      %v2683 = vsel %vm350, %v2572, 0
      %v2686 = vsel %vm350, %v2573, 0
      %v2689 = vsel %vm350, %v2574, 0
      %v2692 = vsel %vm350, %v2575, 0
      %v2695 = vsel %vm350, %v2576, 0
      %v2698 = vsel %vm350, %v2577, 0
      %v2701 = vsel %vm350, %v2578, 0
      %v2704 = vsel %vm350, %v2579, 0
      %v2707 = vsel %vm350, %v2580, 0
      %v2710 = vsel %vm447, %v282, 0
      %2712 = vmatprep.subr.mxu0 0.0
      %2713 = vmatpush1.msra.mxu0 %v2710
      %2714 = vmatprep.subr.mxu0 0.0
      %2715 = vmatpush1.msra.mxu0 0.0
      %2716 = vmatprep.subr.mxu0 0.0
      %2717 = vmatpush1.msra.mxu0 0.0
      %2718 = vmatprep.subr.mxu0 0.0
      %2719 = vmatpush1.msra.mxu0 0.0
      %2720 = vmatprep.subr.mxu0 0.0
      %2721 = vmatpush1.msra.mxu0 0.0
      %2722 = vmatprep.subr.mxu0 0.0
      %2723 = vmatpush1.msra.mxu0 0.0
      %2724 = vmatprep.subr.mxu0 0.0
      %2725 = vmatpush1.msra.mxu0 0.0
      %2726 = vmatprep.subr.mxu0 0.0
      %2727 = vmatpush1.msra.mxu0 0.0
      %2728 = vmatprep.subr.mxu0 0.0
      %2729 = vmatpush1.msra.mxu0 0.0
      %2730 = vmatprep.subr.mxu0 0.0
      %2731 = vmatpush1.msra.mxu0 0.0
      %2732 = vmatprep.subr.mxu0 0.0
      %2733 = vmatpush1.msra.mxu0 0.0
      %2734 = vmatprep.subr.mxu0 0.0
      %2735 = vmatpush1.msra.mxu0 0.0
      %2736 = vmatprep.subr.mxu0 0.0
      %2737 = vmatpush1.msra.mxu0 0.0
      %2738 = vmatprep.subr.mxu0 0.0
      %2739 = vmatpush1.msra.mxu0 0.0
      %2740 = vmatprep.subr.mxu0 0.0
      %2741 = vmatpush1.msra.mxu0 0.0
      %2742 = vmatprep.subr.mxu0 0.0
      %2743 = vmatpush1.msra.mxu0 0.0
      %2744 = vmatprep.subr.mxu0 0.0
      %2745 = vmatpush1.msra.mxu0 0.0
      %2746 = vmatprep.subr.mxu0 0.0
      %2747 = vmatpush1.msra.mxu0 0.0
      %2748 = vmatprep.subr.mxu0 0.0
      %2749 = vmatpush1.msra.mxu0 0.0
      %2750 = vmatprep.subr.mxu0 0.0
      %2751 = vmatpush1.msra.mxu0 0.0
      %2752 = vmatprep.subr.mxu0 0.0
      %2753 = vmatpush1.msra.mxu0 0.0
      %2754 = vmatprep.subr.mxu0 0.0
      %2755 = vmatpush1.msra.mxu0 0.0
      %2756 = vmatprep.subr.mxu0 0.0
      %2757 = vmatpush1.msra.mxu0 0.0
      %2758 = vmatprep.subr.mxu0 0.0
      %2759 = vmatpush1.msra.mxu0 0.0
      %2760 = vmatprep.subr.mxu0 0.0
      %2761 = vmatpush1.msra.mxu0 0.0
      %2762 = vmatprep.subr.mxu0 0.0
      %2763 = vmatpush1.msra.mxu0 0.0
      %2764 = vmatprep.subr.mxu0 0.0
      %2765 = vmatpush1.msra.mxu0 0.0
      %2766 = vmatprep.subr.mxu0 0.0
      %2767 = vmatpush1.msra.mxu0 0.0
      %2768 = vmatprep.subr.mxu0 0.0
      %2769 = vmatpush1.msra.mxu0 0.0
      %2770 = vmatprep.subr.mxu0 0.0
      %2771 = vmatpush1.msra.mxu0 0.0
      %2772 = vmatprep.subr.mxu0 0.0
      %2773 = vmatpush1.msra.mxu0 0.0
      %2774 = vmatprep.subr.mxu0 0.0
      %2775 = vmatpush1.msra.mxu0 0.0
      %2776 = vmatprep.mubr.f32.mxu0 0.0
      %2777 = vmatmul.mubr.f32.gmra.mrb[0].mxu0 %v2614
      %v2778 = vpop.f32.mrb[0].mxu0
      %v2779 = vadd.f32 0.0, %v2778
      %v2780 = vpop.f32.mrb[0].mxu0
      %2781 = vmatprep.mubr.f32.mxu0 0.0
      %2782 = vmatmul.mubr.f32.gmra.mrb[0].mxu0 %v2617
      %v2783 = vpop.f32.mrb[0].mxu0
      %v2784 = vadd.f32 0.0, %v2783
      %v2785 = vpop.f32.mrb[0].mxu0
      %2786 = vmatprep.mubr.f32.mxu0 0.0
      %2787 = vmatmul.mubr.f32.gmra.mrb[0].mxu0 %v2620
      %v2788 = vpop.f32.mrb[0].mxu0
      %v2789 = vadd.f32 0.0, %v2788
      %v2790 = vpop.f32.mrb[0].mxu0
      %2791 = vmatprep.mubr.f32.mxu0 0.0
      %2792 = vmatmul.mubr.f32.gmra.mrb[0].mxu0 %v2623
      %v2793 = vpop.f32.mrb[0].mxu0
      %v2794 = vadd.f32 0.0, %v2793
      %v2795 = vpop.f32.mrb[0].mxu0
      %2796 = vmatprep.mubr.f32.mxu0 0.0
      %2797 = vmatmul.mubr.f32.gmra.mrb[0].mxu0 %v2626
      %v2798 = vpop.f32.mrb[0].mxu0
      %v2799 = vadd.f32 0.0, %v2798
      %v2800 = vpop.f32.mrb[0].mxu0
      %2801 = vmatprep.mubr.f32.mxu0 0.0
      %2802 = vmatmul.mubr.f32.gmra.mrb[0].mxu0 %v2629
      %v2803 = vpop.f32.mrb[0].mxu0
      %v2804 = vadd.f32 0.0, %v2803
      %v2805 = vpop.f32.mrb[0].mxu0
      %2806 = vmatprep.mubr.f32.mxu0 0.0
      %2807 = vmatmul.mubr.f32.gmra.mrb[0].mxu0 %v2632
      %v2808 = vpop.f32.mrb[0].mxu0
      %v2809 = vadd.f32 0.0, %v2808
      %v2810 = vpop.f32.mrb[0].mxu0
      %2811 = vmatprep.mubr.f32.mxu0 0.0
      %2812 = vmatmul.mubr.f32.gmra.mrb[0].mxu0 %v2635
      %v2813 = vpop.f32.mrb[0].mxu0
      %v2814 = vadd.f32 0.0, %v2813
      %v2815 = vpop.f32.mrb[0].mxu0
      %2816 = vmatprep.mubr.f32.mxu0 0.0
      %2817 = vmatmul.mubr.f32.gmra.mrb[0].mxu0 %v2638
      %v2818 = vpop.f32.mrb[0].mxu0
      %v2819 = vadd.f32 0.0, %v2818
      %v2820 = vpop.f32.mrb[0].mxu0
      %2821 = vmatprep.mubr.f32.mxu0 0.0
      %2822 = vmatmul.mubr.f32.gmra.mrb[0].mxu0 %v2641
      %v2823 = vpop.f32.mrb[0].mxu0
      %v2824 = vadd.f32 0.0, %v2823
      %v2825 = vpop.f32.mrb[0].mxu0
      %2826 = vmatprep.mubr.f32.mxu0 0.0
      %2827 = vmatmul.mubr.f32.gmra.mrb[0].mxu0 %v2644
      %v2828 = vpop.f32.mrb[0].mxu0
      %v2829 = vadd.f32 0.0, %v2828
      %v2830 = vpop.f32.mrb[0].mxu0
      %2831 = vmatprep.mubr.f32.mxu0 0.0
      %2832 = vmatmul.mubr.f32.gmra.mrb[0].mxu0 %v2647
      %v2833 = vpop.f32.mrb[0].mxu0
      %v2834 = vadd.f32 0.0, %v2833
      %v2835 = vpop.f32.mrb[0].mxu0
      %2836 = vmatprep.mubr.f32.mxu0 0.0
      %2837 = vmatmul.mubr.f32.gmra.mrb[0].mxu0 %v2650
      %v2838 = vpop.f32.mrb[0].mxu0
      %v2839 = vadd.f32 0.0, %v2838
      %v2840 = vpop.f32.mrb[0].mxu0
      %2841 = vmatprep.mubr.f32.mxu0 0.0
      %2842 = vmatmul.mubr.f32.gmra.mrb[0].mxu0 %v2653
      %v2843 = vpop.f32.mrb[0].mxu0
      %v2844 = vadd.f32 0.0, %v2843
      %v2845 = vpop.f32.mrb[0].mxu0
      %2846 = vmatprep.mubr.f32.mxu0 0.0
      %2847 = vmatmul.mubr.f32.gmra.mrb[0].mxu0 %v2656
      %v2848 = vpop.f32.mrb[0].mxu0
      %v2849 = vadd.f32 0.0, %v2848
      %v2850 = vpop.f32.mrb[0].mxu0
      %2851 = vmatprep.mubr.f32.mxu0 0.0
      %2852 = vmatmul.mubr.f32.gmra.mrb[0].mxu0 %v2659
      %v2853 = vpop.f32.mrb[0].mxu0
      %v2854 = vadd.f32 0.0, %v2853
      %v2855 = vpop.f32.mrb[0].mxu0
      %2856 = vmatprep.mubr.f32.mxu0 0.0
      %2857 = vmatmul.mubr.f32.gmra.mrb[0].mxu0 %v2662
      %v2858 = vpop.f32.mrb[0].mxu0
      %v2859 = vadd.f32 0.0, %v2858
      %v2860 = vpop.f32.mrb[0].mxu0
      %2861 = vmatprep.mubr.f32.mxu0 0.0
      %2862 = vmatmul.mubr.f32.gmra.mrb[0].mxu0 %v2665
      %v2863 = vpop.f32.mrb[0].mxu0
      %v2864 = vadd.f32 0.0, %v2863
      %v2865 = vpop.f32.mrb[0].mxu0
      %2866 = vmatprep.mubr.f32.mxu0 0.0
      %2867 = vmatmul.mubr.f32.gmra.mrb[0].mxu0 %v2668
      %v2868 = vpop.f32.mrb[0].mxu0
      %v2869 = vadd.f32 0.0, %v2868
      %v2870 = vpop.f32.mrb[0].mxu0
      %2871 = vmatprep.mubr.f32.mxu0 0.0
      %2872 = vmatmul.mubr.f32.gmra.mrb[0].mxu0 %v2671
      %v2873 = vpop.f32.mrb[0].mxu0
      %v2874 = vadd.f32 0.0, %v2873
      %v2875 = vpop.f32.mrb[0].mxu0
      %2876 = vmatprep.mubr.f32.mxu0 0.0
      %2877 = vmatmul.mubr.f32.gmra.mrb[0].mxu0 %v2674
      %v2878 = vpop.f32.mrb[0].mxu0
      %v2879 = vadd.f32 0.0, %v2878
      %v2880 = vpop.f32.mrb[0].mxu0
      %2881 = vmatprep.mubr.f32.mxu0 0.0
      %2882 = vmatmul.mubr.f32.gmra.mrb[0].mxu0 %v2677
      %v2883 = vpop.f32.mrb[0].mxu0
      %v2884 = vadd.f32 0.0, %v2883
      %v2885 = vpop.f32.mrb[0].mxu0
      %2886 = vmatprep.mubr.f32.mxu0 0.0
      %2887 = vmatmul.mubr.f32.gmra.mrb[0].mxu0 %v2680
      %v2888 = vpop.f32.mrb[0].mxu0
      %v2889 = vadd.f32 0.0, %v2888
      %v2890 = vpop.f32.mrb[0].mxu0
      %2891 = vmatprep.mubr.f32.mxu0 0.0
      %2892 = vmatmul.mubr.f32.gmra.mrb[0].mxu0 %v2683
      %v2893 = vpop.f32.mrb[0].mxu0
      %v2894 = vadd.f32 0.0, %v2893
      %v2895 = vpop.f32.mrb[0].mxu0
      %2896 = vmatprep.mubr.f32.mxu0 0.0
      %2897 = vmatmul.mubr.f32.gmra.mrb[0].mxu0 %v2686
      %v2898 = vpop.f32.mrb[0].mxu0
      %v2899 = vadd.f32 0.0, %v2898
      %v2900 = vpop.f32.mrb[0].mxu0
      %2901 = vmatprep.mubr.f32.mxu0 0.0
      %2902 = vmatmul.mubr.f32.gmra.mrb[0].mxu0 %v2689
      %v2903 = vpop.f32.mrb[0].mxu0
      %v2904 = vadd.f32 0.0, %v2903
      %v2905 = vpop.f32.mrb[0].mxu0
      %2906 = vmatprep.mubr.f32.mxu0 0.0
      %2907 = vmatmul.mubr.f32.gmra.mrb[0].mxu0 %v2692
      %v2908 = vpop.f32.mrb[0].mxu0
      %v2909 = vadd.f32 0.0, %v2908
      %v2910 = vpop.f32.mrb[0].mxu0
      %2911 = vmatprep.mubr.f32.mxu0 0.0
      %2912 = vmatmul.mubr.f32.gmra.mrb[0].mxu0 %v2695
      %v2913 = vpop.f32.mrb[0].mxu0
      %v2914 = vadd.f32 0.0, %v2913
      %v2915 = vpop.f32.mrb[0].mxu0
      %2916 = vmatprep.mubr.f32.mxu0 0.0
      %2917 = vmatmul.mubr.f32.gmra.mrb[0].mxu0 %v2698
      %v2918 = vpop.f32.mrb[0].mxu0
      %v2919 = vadd.f32 0.0, %v2918
      %v2920 = vpop.f32.mrb[0].mxu0
      %2921 = vmatprep.mubr.f32.mxu0 0.0
      %2922 = vmatmul.mubr.f32.gmra.mrb[0].mxu0 %v2701
      %v2923 = vpop.f32.mrb[0].mxu0
      %v2924 = vadd.f32 0.0, %v2923
      %v2925 = vpop.f32.mrb[0].mxu0
      %2926 = vmatprep.mubr.f32.mxu0 0.0
      %2927 = vmatmul.mubr.f32.gmra.mrb[0].mxu0 %v2704
      %v2928 = vpop.f32.mrb[0].mxu0
      %v2929 = vadd.f32 0.0, %v2928
      %v2930 = vpop.f32.mrb[0].mxu0
      %2931 = vmatprep.mubr.f32.mxu0 0.0
      %2932 = vmatmul.mubr.f32.gmra.mrb[0].mxu0 %v2707
      %v2933 = vpop.f32.mrb[0].mxu0
      %v2934 = vadd.f32 0.0, %v2933
      %v2935 = vpop.f32.mrb[0].mxu0
      %2936 = vdwg.mxu0
      %v2937 = vadd.f32 %v2581, %v2779
      %v2938 = vadd.f32 %v2582, %v2784
      %v2939 = vadd.f32 %v2583, %v2789
      %v2940 = vadd.f32 %v2584, %v2794
      %v2941 = vadd.f32 %v2585, %v2799
      %v2942 = vadd.f32 %v2586, %v2804
      %v2943 = vadd.f32 %v2587, %v2809
      %v2944 = vadd.f32 %v2588, %v2814
      %v2945 = vadd.f32 %v2589, %v2819
      %v2946 = vadd.f32 %v2590, %v2824
      %v2947 = vadd.f32 %v2591, %v2829
      %v2948 = vadd.f32 %v2592, %v2834
      %v2949 = vadd.f32 %v2593, %v2839
      %v2950 = vadd.f32 %v2594, %v2844
      %v2951 = vadd.f32 %v2595, %v2849
      %v2952 = vadd.f32 %v2596, %v2854
      %v2953 = vadd.f32 %v2597, %v2859
      %v2954 = vadd.f32 %v2598, %v2864
      %v2955 = vadd.f32 %v2599, %v2869
      %v2956 = vadd.f32 %v2600, %v2874
      %v2957 = vadd.f32 %v2601, %v2879
      %v2958 = vadd.f32 %v2602, %v2884
      %v2959 = vadd.f32 %v2603, %v2889
      %v2960 = vadd.f32 %v2604, %v2894
      %v2961 = vadd.f32 %v2605, %v2899
      %v2962 = vadd.f32 %v2606, %v2904
      %v2963 = vadd.f32 %v2607, %v2909
      %v2964 = vadd.f32 %v2608, %v2914
      %v2965 = vadd.f32 %v2609, %v2919
      %v2966 = vadd.f32 %v2610, %v2924
      %v2967 = vadd.f32 %v2611, %v2929
      %v2968 = vadd.f32 %v2612, %v2934
      %2969 = vst.msk [vmem:[#allocation2] sm:$0xff] %vm226, %v2937
      %2970 = vst.msk [vmem:[#allocation2 + $0x8] sm:$0xff] %vm226, %v2938
      %2971 = vst.msk [vmem:[#allocation2 + $0x10] sm:$0xff] %vm226, %v2939
      %2972 = vst.msk [vmem:[#allocation2 + $0x18] sm:$0xff] %vm226, %v2940
      %2973 = vst.msk [vmem:[#allocation2 + $0x20] sm:$0xff] %vm226, %v2941
      %2974 = vst.msk [vmem:[#allocation2 + $0x28] sm:$0xff] %vm226, %v2942
      %2975 = vst.msk [vmem:[#allocation2 + $0x30] sm:$0xff] %vm226, %v2943
      %2976 = vst.msk [vmem:[#allocation2 + $0x38] sm:$0xff] %vm226, %v2944
      %2977 = vst.msk [vmem:[#allocation2 + $0x40] sm:$0xff] %vm226, %v2945
      %2978 = vst.msk [vmem:[#allocation2 + $0x48] sm:$0xff] %vm226, %v2946
      %2979 = vst.msk [vmem:[#allocation2 + $0x50] sm:$0xff] %vm226, %v2947
      %2980 = vst.msk [vmem:[#allocation2 + $0x58] sm:$0xff] %vm226, %v2948
      %2981 = vst.msk [vmem:[#allocation2 + $0x60] sm:$0xff] %vm226, %v2949
      %2982 = vst.msk [vmem:[#allocation2 + $0x68] sm:$0xff] %vm226, %v2950
      %2983 = vst.msk [vmem:[#allocation2 + $0x70] sm:$0xff] %vm226, %v2951
      %2984 = vst.msk [vmem:[#allocation2 + $0x78] sm:$0xff] %vm226, %v2952
      %2985 = vst.msk [vmem:[#allocation2 + $0x80] sm:$0xff] %vm226, %v2953
      %2986 = vst.msk [vmem:[#allocation2 + $0x88] sm:$0xff] %vm226, %v2954
      %2987 = vst.msk [vmem:[#allocation2 + $0x90] sm:$0xff] %vm226, %v2955
      %2988 = vst.msk [vmem:[#allocation2 + $0x98] sm:$0xff] %vm226, %v2956
      %2989 = vst.msk [vmem:[#allocation2 + $0xa0] sm:$0xff] %vm226, %v2957
      %2990 = vst.msk [vmem:[#allocation2 + $0xa8] sm:$0xff] %vm226, %v2958
      %2991 = vst.msk [vmem:[#allocation2 + $0xb0] sm:$0xff] %vm226, %v2959
      %2992 = vst.msk [vmem:[#allocation2 + $0xb8] sm:$0xff] %vm226, %v2960
      %2993 = vst.msk [vmem:[#allocation2 + $0xc0] sm:$0xff] %vm226, %v2961
      %2994 = vst.msk [vmem:[#allocation2 + $0xc8] sm:$0xff] %vm226, %v2962
      %2995 = vst.msk [vmem:[#allocation2 + $0xd0] sm:$0xff] %vm226, %v2963
      %2996 = vst.msk [vmem:[#allocation2 + $0xd8] sm:$0xff] %vm226, %v2964
      %2997 = vst.msk [vmem:[#allocation2 + $0xe0] sm:$0xff] %vm226, %v2965
      %2998 = vst.msk [vmem:[#allocation2 + $0xe8] sm:$0xff] %vm226, %v2966
      %2999 = vst.msk [vmem:[#allocation2 + $0xf0] sm:$0xff] %vm226, %v2967
      %3000 = vst.msk [vmem:[#allocation2 + $0xf8] sm:$0xff] %vm226, %v2968
      %s3001 = scalar_lea.vmem %s219, 48
      %v3002 = vld [vmem:[%s3001] sm:$0xff]
      %v3003 = vld [vmem:[%s3001 + $0x8] sm:$0xff]
      %v3004 = vld [vmem:[%s3001 + $0x18] sm:$0xff]
      %v3005 = vld [vmem:[%s3001 + $0x20] sm:$0xff]
      %v3006 = vld [vmem:[%s3001 + $0x30] sm:$0xff]
      %v3007 = vld [vmem:[%s3001 + $0x38] sm:$0xff]
      %v3008 = vld [vmem:[%s3001 + $0x48] sm:$0xff]
      %v3009 = vld [vmem:[%s3001 + $0x50] sm:$0xff]
      %v3010 = vld [vmem:[%s3001 + $0x60] sm:$0xff]
      %v3011 = vld [vmem:[%s3001 + $0x68] sm:$0xff]
      %v3012 = vld [vmem:[%s3001 + $0x78] sm:$0xff]
      %v3013 = vld [vmem:[%s3001 + $0x80] sm:$0xff]
      %v3014 = vld [vmem:[%s3001 + $0x90] sm:$0xff]
      %v3015 = vld [vmem:[%s3001 + $0x98] sm:$0xff]
      %v3016 = vld [vmem:[%s3001 + $0xa8] sm:$0xff]
      %v3017 = vld [vmem:[%s3001 + $0xb0] sm:$0xff]
      %v3018 = vld [vmem:[%s3001 + $0xc0] sm:$0xff]
      %v3019 = vld [vmem:[%s3001 + $0xc8] sm:$0xff]
      %v3020 = vld [vmem:[%s3001 + $0xd8] sm:$0xff]
      %v3021 = vld [vmem:[%s3001 + $0xe0] sm:$0xff]
      %v3022 = vld [vmem:[%s3001 + $0xf0] sm:$0xff]
      %v3023 = vld [vmem:[%s3001 + $0xf8] sm:$0xff]
      %v3024 = vld [vmem:[%s3001 + $0x108] sm:$0xff]
      %v3025 = vld [vmem:[%s3001 + $0x110] sm:$0xff]
      %v3026 = vld [vmem:[%s3001 + $0x120] sm:$0xff]
      %v3027 = vld [vmem:[%s3001 + $0x128] sm:$0xff]
      %v3028 = vld [vmem:[%s3001 + $0x138] sm:$0xff]
      %v3029 = vld [vmem:[%s3001 + $0x140] sm:$0xff]
      %v3030 = vld [vmem:[%s3001 + $0x150] sm:$0xff]
      %v3031 = vld [vmem:[%s3001 + $0x158] sm:$0xff]
      %v3032 = vld [vmem:[%s3001 + $0x168] sm:$0xff]
      %v3033 = vld [vmem:[%s3001 + $0x170] sm:$0xff]
      %v3034 = vld [vmem:[#allocation2] sm:$0xff]
      %v3035 = vld [vmem:[#allocation2 + $0x8] sm:$0xff]
      %v3036 = vld [vmem:[#allocation2 + $0x10] sm:$0xff]
      %v3037 = vld [vmem:[#allocation2 + $0x18] sm:$0xff]
      %v3038 = vld [vmem:[#allocation2 + $0x20] sm:$0xff]
      %v3039 = vld [vmem:[#allocation2 + $0x28] sm:$0xff]
      %v3040 = vld [vmem:[#allocation2 + $0x30] sm:$0xff]
      %v3041 = vld [vmem:[#allocation2 + $0x38] sm:$0xff]
      %v3042 = vld [vmem:[#allocation2 + $0x40] sm:$0xff]
      %v3043 = vld [vmem:[#allocation2 + $0x48] sm:$0xff]
      %v3044 = vld [vmem:[#allocation2 + $0x50] sm:$0xff]
      %v3045 = vld [vmem:[#allocation2 + $0x58] sm:$0xff]
      %v3046 = vld [vmem:[#allocation2 + $0x60] sm:$0xff]
      %v3047 = vld [vmem:[#allocation2 + $0x68] sm:$0xff]
      %v3048 = vld [vmem:[#allocation2 + $0x70] sm:$0xff]
      %v3049 = vld [vmem:[#allocation2 + $0x78] sm:$0xff]
      %v3050 = vld [vmem:[#allocation2 + $0x80] sm:$0xff]
      %v3051 = vld [vmem:[#allocation2 + $0x88] sm:$0xff]
      %v3052 = vld [vmem:[#allocation2 + $0x90] sm:$0xff]
      %v3053 = vld [vmem:[#allocation2 + $0x98] sm:$0xff]
      %v3054 = vld [vmem:[#allocation2 + $0xa0] sm:$0xff]
      %v3055 = vld [vmem:[#allocation2 + $0xa8] sm:$0xff]
      %v3056 = vld [vmem:[#allocation2 + $0xb0] sm:$0xff]
      %v3057 = vld [vmem:[#allocation2 + $0xb8] sm:$0xff]
      %v3058 = vld [vmem:[#allocation2 + $0xc0] sm:$0xff]
      %v3059 = vld [vmem:[#allocation2 + $0xc8] sm:$0xff]
      %v3060 = vld [vmem:[#allocation2 + $0xd0] sm:$0xff]
      %v3061 = vld [vmem:[#allocation2 + $0xd8] sm:$0xff]
      %v3062 = vld [vmem:[#allocation2 + $0xe0] sm:$0xff]
      %v3063 = vld [vmem:[#allocation2 + $0xe8] sm:$0xff]
      %v3064 = vld [vmem:[#allocation2 + $0xf0] sm:$0xff]
      %v3065 = vld [vmem:[#allocation2 + $0xf8] sm:$0xff]
      %v3067 = vsel %vm350, %v3002, 0
      %v3070 = vsel %vm350, %v3003, 0
      %v3073 = vsel %vm350, %v3004, 0
      %v3076 = vsel %vm350, %v3005, 0
      %v3079 = vsel %vm350, %v3006, 0
      %v3082 = vsel %vm350, %v3007, 0
      %v3085 = vsel %vm350, %v3008, 0
      %v3088 = vsel %vm350, %v3009, 0
      %v3091 = vsel %vm350, %v3010, 0
      %v3094 = vsel %vm350, %v3011, 0
      %v3097 = vsel %vm350, %v3012, 0
      %v3100 = vsel %vm350, %v3013, 0
      %v3103 = vsel %vm350, %v3014, 0
      %v3106 = vsel %vm350, %v3015, 0
      %v3109 = vsel %vm350, %v3016, 0
      %v3112 = vsel %vm350, %v3017, 0
      %v3115 = vsel %vm350, %v3018, 0
      %v3118 = vsel %vm350, %v3019, 0
      %v3121 = vsel %vm350, %v3020, 0
      %v3124 = vsel %vm350, %v3021, 0
      %v3127 = vsel %vm350, %v3022, 0
      %v3130 = vsel %vm350, %v3023, 0
      %v3133 = vsel %vm350, %v3024, 0
      %v3136 = vsel %vm350, %v3025, 0
      %v3139 = vsel %vm350, %v3026, 0
      %v3142 = vsel %vm350, %v3027, 0
      %v3145 = vsel %vm350, %v3028, 0
      %v3148 = vsel %vm350, %v3029, 0
      %v3151 = vsel %vm350, %v3030, 0
      %v3154 = vsel %vm350, %v3031, 0
      %v3157 = vsel %vm350, %v3032, 0
      %v3160 = vsel %vm350, %v3033, 0
      %v3163 = vsel %vm447, %v283, 0
      %3165 = vmatprep.subr.mxu0 0.0
      %3166 = vmatpush1.msra.mxu0 %v3163
      %3167 = vmatprep.subr.mxu0 0.0
      %3168 = vmatpush1.msra.mxu0 0.0
      %3169 = vmatprep.subr.mxu0 0.0
      %3170 = vmatpush1.msra.mxu0 0.0
      %3171 = vmatprep.subr.mxu0 0.0
      %3172 = vmatpush1.msra.mxu0 0.0
      %3173 = vmatprep.subr.mxu0 0.0
      %3174 = vmatpush1.msra.mxu0 0.0
      %3175 = vmatprep.subr.mxu0 0.0
      %3176 = vmatpush1.msra.mxu0 0.0
      %3177 = vmatprep.subr.mxu0 0.0
      %3178 = vmatpush1.msra.mxu0 0.0
      %3179 = vmatprep.subr.mxu0 0.0
      %3180 = vmatpush1.msra.mxu0 0.0
      %3181 = vmatprep.subr.mxu0 0.0
      %3182 = vmatpush1.msra.mxu0 0.0
      %3183 = vmatprep.subr.mxu0 0.0
      %3184 = vmatpush1.msra.mxu0 0.0
      %3185 = vmatprep.subr.mxu0 0.0
      %3186 = vmatpush1.msra.mxu0 0.0
      %3187 = vmatprep.subr.mxu0 0.0
      %3188 = vmatpush1.msra.mxu0 0.0
      %3189 = vmatprep.subr.mxu0 0.0
      %3190 = vmatpush1.msra.mxu0 0.0
      %3191 = vmatprep.subr.mxu0 0.0
      %3192 = vmatpush1.msra.mxu0 0.0
      %3193 = vmatprep.subr.mxu0 0.0
      %3194 = vmatpush1.msra.mxu0 0.0
      %3195 = vmatprep.subr.mxu0 0.0
      %3196 = vmatpush1.msra.mxu0 0.0
      %3197 = vmatprep.subr.mxu0 0.0
      %3198 = vmatpush1.msra.mxu0 0.0
      %3199 = vmatprep.subr.mxu0 0.0
      %3200 = vmatpush1.msra.mxu0 0.0
      %3201 = vmatprep.subr.mxu0 0.0
      %3202 = vmatpush1.msra.mxu0 0.0
      %3203 = vmatprep.subr.mxu0 0.0
      %3204 = vmatpush1.msra.mxu0 0.0
      %3205 = vmatprep.subr.mxu0 0.0
      %3206 = vmatpush1.msra.mxu0 0.0
      %3207 = vmatprep.subr.mxu0 0.0
      %3208 = vmatpush1.msra.mxu0 0.0
      %3209 = vmatprep.subr.mxu0 0.0
      %3210 = vmatpush1.msra.mxu0 0.0
      %3211 = vmatprep.subr.mxu0 0.0
      %3212 = vmatpush1.msra.mxu0 0.0
      %3213 = vmatprep.subr.mxu0 0.0
      %3214 = vmatpush1.msra.mxu0 0.0
      %3215 = vmatprep.subr.mxu0 0.0
      %3216 = vmatpush1.msra.mxu0 0.0
      %3217 = vmatprep.subr.mxu0 0.0
      %3218 = vmatpush1.msra.mxu0 0.0
      %3219 = vmatprep.subr.mxu0 0.0
      %3220 = vmatpush1.msra.mxu0 0.0
      %3221 = vmatprep.subr.mxu0 0.0
      %3222 = vmatpush1.msra.mxu0 0.0
      %3223 = vmatprep.subr.mxu0 0.0
      %3224 = vmatpush1.msra.mxu0 0.0
      %3225 = vmatprep.subr.mxu0 0.0
      %3226 = vmatpush1.msra.mxu0 0.0
      %3227 = vmatprep.subr.mxu0 0.0
      %3228 = vmatpush1.msra.mxu0 0.0
      %3229 = vmatprep.mubr.f32.mxu0 0.0
      %3230 = vmatmul.mubr.f32.gmra.mrb[0].mxu0 %v3067
      %v3231 = vpop.f32.mrb[0].mxu0
      %v3232 = vadd.f32 0.0, %v3231
      %v3233 = vpop.f32.mrb[0].mxu0
      %3234 = vmatprep.mubr.f32.mxu0 0.0
      %3235 = vmatmul.mubr.f32.gmra.mrb[0].mxu0 %v3070
      %v3236 = vpop.f32.mrb[0].mxu0
      %v3237 = vadd.f32 0.0, %v3236
      %v3238 = vpop.f32.mrb[0].mxu0
      %3239 = vmatprep.mubr.f32.mxu0 0.0
      %3240 = vmatmul.mubr.f32.gmra.mrb[0].mxu0 %v3073
      %v3241 = vpop.f32.mrb[0].mxu0
      %v3242 = vadd.f32 0.0, %v3241
      %v3243 = vpop.f32.mrb[0].mxu0
      %3244 = vmatprep.mubr.f32.mxu0 0.0
      %3245 = vmatmul.mubr.f32.gmra.mrb[0].mxu0 %v3076
      %v3246 = vpop.f32.mrb[0].mxu0
      %v3247 = vadd.f32 0.0, %v3246
      %v3248 = vpop.f32.mrb[0].mxu0
      %3249 = vmatprep.mubr.f32.mxu0 0.0
      %3250 = vmatmul.mubr.f32.gmra.mrb[0].mxu0 %v3079
      %v3251 = vpop.f32.mrb[0].mxu0
      %v3252 = vadd.f32 0.0, %v3251
      %v3253 = vpop.f32.mrb[0].mxu0
      %3254 = vmatprep.mubr.f32.mxu0 0.0
      %3255 = vmatmul.mubr.f32.gmra.mrb[0].mxu0 %v3082
      %v3256 = vpop.f32.mrb[0].mxu0
      %v3257 = vadd.f32 0.0, %v3256
      %v3258 = vpop.f32.mrb[0].mxu0
      %3259 = vmatprep.mubr.f32.mxu0 0.0
      %3260 = vmatmul.mubr.f32.gmra.mrb[0].mxu0 %v3085
      %v3261 = vpop.f32.mrb[0].mxu0
      %v3262 = vadd.f32 0.0, %v3261
      %v3263 = vpop.f32.mrb[0].mxu0
      %3264 = vmatprep.mubr.f32.mxu0 0.0
      %3265 = vmatmul.mubr.f32.gmra.mrb[0].mxu0 %v3088
      %v3266 = vpop.f32.mrb[0].mxu0
      %v3267 = vadd.f32 0.0, %v3266
      %v3268 = vpop.f32.mrb[0].mxu0
      %3269 = vmatprep.mubr.f32.mxu0 0.0
      %3270 = vmatmul.mubr.f32.gmra.mrb[0].mxu0 %v3091
      %v3271 = vpop.f32.mrb[0].mxu0
      %v3272 = vadd.f32 0.0, %v3271
      %v3273 = vpop.f32.mrb[0].mxu0
      %3274 = vmatprep.mubr.f32.mxu0 0.0
      %3275 = vmatmul.mubr.f32.gmra.mrb[0].mxu0 %v3094
      %v3276 = vpop.f32.mrb[0].mxu0
      %v3277 = vadd.f32 0.0, %v3276
      %v3278 = vpop.f32.mrb[0].mxu0
      %3279 = vmatprep.mubr.f32.mxu0 0.0
      %3280 = vmatmul.mubr.f32.gmra.mrb[0].mxu0 %v3097
      %v3281 = vpop.f32.mrb[0].mxu0
      %v3282 = vadd.f32 0.0, %v3281
      %v3283 = vpop.f32.mrb[0].mxu0
      %3284 = vmatprep.mubr.f32.mxu0 0.0
      %3285 = vmatmul.mubr.f32.gmra.mrb[0].mxu0 %v3100
      %v3286 = vpop.f32.mrb[0].mxu0
      %v3287 = vadd.f32 0.0, %v3286
      %v3288 = vpop.f32.mrb[0].mxu0
      %3289 = vmatprep.mubr.f32.mxu0 0.0
      %3290 = vmatmul.mubr.f32.gmra.mrb[0].mxu0 %v3103
      %v3291 = vpop.f32.mrb[0].mxu0
      %v3292 = vadd.f32 0.0, %v3291
      %v3293 = vpop.f32.mrb[0].mxu0
      %3294 = vmatprep.mubr.f32.mxu0 0.0
      %3295 = vmatmul.mubr.f32.gmra.mrb[0].mxu0 %v3106
      %v3296 = vpop.f32.mrb[0].mxu0
      %v3297 = vadd.f32 0.0, %v3296
      %v3298 = vpop.f32.mrb[0].mxu0
      %3299 = vmatprep.mubr.f32.mxu0 0.0
      %3300 = vmatmul.mubr.f32.gmra.mrb[0].mxu0 %v3109
      %v3301 = vpop.f32.mrb[0].mxu0
      %v3302 = vadd.f32 0.0, %v3301
      %v3303 = vpop.f32.mrb[0].mxu0
      %3304 = vmatprep.mubr.f32.mxu0 0.0
      %3305 = vmatmul.mubr.f32.gmra.mrb[0].mxu0 %v3112
      %v3306 = vpop.f32.mrb[0].mxu0
      %v3307 = vadd.f32 0.0, %v3306
      %v3308 = vpop.f32.mrb[0].mxu0
      %3309 = vmatprep.mubr.f32.mxu0 0.0
      %3310 = vmatmul.mubr.f32.gmra.mrb[0].mxu0 %v3115
      %v3311 = vpop.f32.mrb[0].mxu0
      %v3312 = vadd.f32 0.0, %v3311
      %v3313 = vpop.f32.mrb[0].mxu0
      %3314 = vmatprep.mubr.f32.mxu0 0.0
      %3315 = vmatmul.mubr.f32.gmra.mrb[0].mxu0 %v3118
      %v3316 = vpop.f32.mrb[0].mxu0
      %v3317 = vadd.f32 0.0, %v3316
      %v3318 = vpop.f32.mrb[0].mxu0
      %3319 = vmatprep.mubr.f32.mxu0 0.0
      %3320 = vmatmul.mubr.f32.gmra.mrb[0].mxu0 %v3121
      %v3321 = vpop.f32.mrb[0].mxu0
      %v3322 = vadd.f32 0.0, %v3321
      %v3323 = vpop.f32.mrb[0].mxu0
      %3324 = vmatprep.mubr.f32.mxu0 0.0
      %3325 = vmatmul.mubr.f32.gmra.mrb[0].mxu0 %v3124
      %v3326 = vpop.f32.mrb[0].mxu0
      %v3327 = vadd.f32 0.0, %v3326
      %v3328 = vpop.f32.mrb[0].mxu0
      %3329 = vmatprep.mubr.f32.mxu0 0.0
      %3330 = vmatmul.mubr.f32.gmra.mrb[0].mxu0 %v3127
      %v3331 = vpop.f32.mrb[0].mxu0
      %v3332 = vadd.f32 0.0, %v3331
      %v3333 = vpop.f32.mrb[0].mxu0
      %3334 = vmatprep.mubr.f32.mxu0 0.0
      %3335 = vmatmul.mubr.f32.gmra.mrb[0].mxu0 %v3130
      %v3336 = vpop.f32.mrb[0].mxu0
      %v3337 = vadd.f32 0.0, %v3336
      %v3338 = vpop.f32.mrb[0].mxu0
      %3339 = vmatprep.mubr.f32.mxu0 0.0
      %3340 = vmatmul.mubr.f32.gmra.mrb[0].mxu0 %v3133
      %v3341 = vpop.f32.mrb[0].mxu0
      %v3342 = vadd.f32 0.0, %v3341
      %v3343 = vpop.f32.mrb[0].mxu0
      %3344 = vmatprep.mubr.f32.mxu0 0.0
      %3345 = vmatmul.mubr.f32.gmra.mrb[0].mxu0 %v3136
      %v3346 = vpop.f32.mrb[0].mxu0
      %v3347 = vadd.f32 0.0, %v3346
      %v3348 = vpop.f32.mrb[0].mxu0
      %3349 = vmatprep.mubr.f32.mxu0 0.0
      %3350 = vmatmul.mubr.f32.gmra.mrb[0].mxu0 %v3139
      %v3351 = vpop.f32.mrb[0].mxu0
      %v3352 = vadd.f32 0.0, %v3351
      %v3353 = vpop.f32.mrb[0].mxu0
      %3354 = vmatprep.mubr.f32.mxu0 0.0
      %3355 = vmatmul.mubr.f32.gmra.mrb[0].mxu0 %v3142
      %v3356 = vpop.f32.mrb[0].mxu0
      %v3357 = vadd.f32 0.0, %v3356
      %v3358 = vpop.f32.mrb[0].mxu0
      %3359 = vmatprep.mubr.f32.mxu0 0.0
      %3360 = vmatmul.mubr.f32.gmra.mrb[0].mxu0 %v3145
      %v3361 = vpop.f32.mrb[0].mxu0
      %v3362 = vadd.f32 0.0, %v3361
      %v3363 = vpop.f32.mrb[0].mxu0
      %3364 = vmatprep.mubr.f32.mxu0 0.0
      %3365 = vmatmul.mubr.f32.gmra.mrb[0].mxu0 %v3148
      %v3366 = vpop.f32.mrb[0].mxu0
      %v3367 = vadd.f32 0.0, %v3366
      %v3368 = vpop.f32.mrb[0].mxu0
      %3369 = vmatprep.mubr.f32.mxu0 0.0
      %3370 = vmatmul.mubr.f32.gmra.mrb[0].mxu0 %v3151
      %v3371 = vpop.f32.mrb[0].mxu0
      %v3372 = vadd.f32 0.0, %v3371
      %v3373 = vpop.f32.mrb[0].mxu0
      %3374 = vmatprep.mubr.f32.mxu0 0.0
      %3375 = vmatmul.mubr.f32.gmra.mrb[0].mxu0 %v3154
      %v3376 = vpop.f32.mrb[0].mxu0
      %v3377 = vadd.f32 0.0, %v3376
      %v3378 = vpop.f32.mrb[0].mxu0
      %3379 = vmatprep.mubr.f32.mxu0 0.0
      %3380 = vmatmul.mubr.f32.gmra.mrb[0].mxu0 %v3157
      %v3381 = vpop.f32.mrb[0].mxu0
      %v3382 = vadd.f32 0.0, %v3381
      %v3383 = vpop.f32.mrb[0].mxu0
      %3384 = vmatprep.mubr.f32.mxu0 0.0
      %3385 = vmatmul.mubr.f32.gmra.mrb[0].mxu0 %v3160
      %v3386 = vpop.f32.mrb[0].mxu0
      %v3387 = vadd.f32 0.0, %v3386
      %v3388 = vpop.f32.mrb[0].mxu0
      %3389 = vdwg.mxu0
      %v3390 = vadd.f32 %v3034, %v3232
      %v3391 = vadd.f32 %v3035, %v3237
      %v3392 = vadd.f32 %v3036, %v3242
      %v3393 = vadd.f32 %v3037, %v3247
      %v3394 = vadd.f32 %v3038, %v3252
      %v3395 = vadd.f32 %v3039, %v3257
      %v3396 = vadd.f32 %v3040, %v3262
      %v3397 = vadd.f32 %v3041, %v3267
      %v3398 = vadd.f32 %v3042, %v3272
      %v3399 = vadd.f32 %v3043, %v3277
      %v3400 = vadd.f32 %v3044, %v3282
      %v3401 = vadd.f32 %v3045, %v3287
      %v3402 = vadd.f32 %v3046, %v3292
      %v3403 = vadd.f32 %v3047, %v3297
      %v3404 = vadd.f32 %v3048, %v3302
      %v3405 = vadd.f32 %v3049, %v3307
      %v3406 = vadd.f32 %v3050, %v3312
      %v3407 = vadd.f32 %v3051, %v3317
      %v3408 = vadd.f32 %v3052, %v3322
      %v3409 = vadd.f32 %v3053, %v3327
      %v3410 = vadd.f32 %v3054, %v3332
      %v3411 = vadd.f32 %v3055, %v3337
      %v3412 = vadd.f32 %v3056, %v3342
      %v3413 = vadd.f32 %v3057, %v3347
      %v3414 = vadd.f32 %v3058, %v3352
      %v3415 = vadd.f32 %v3059, %v3357
      %v3416 = vadd.f32 %v3060, %v3362
      %v3417 = vadd.f32 %v3061, %v3367
      %v3418 = vadd.f32 %v3062, %v3372
      %v3419 = vadd.f32 %v3063, %v3377
      %v3420 = vadd.f32 %v3064, %v3382
      %v3421 = vadd.f32 %v3065, %v3387
      %3422 = vst.msk [vmem:[#allocation2] sm:$0xff] %vm226, %v3390
      %3423 = vst.msk [vmem:[#allocation2 + $0x8] sm:$0xff] %vm226, %v3391
      %3424 = vst.msk [vmem:[#allocation2 + $0x10] sm:$0xff] %vm226, %v3392
      %3425 = vst.msk [vmem:[#allocation2 + $0x18] sm:$0xff] %vm226, %v3393
      %3426 = vst.msk [vmem:[#allocation2 + $0x20] sm:$0xff] %vm226, %v3394
      %3427 = vst.msk [vmem:[#allocation2 + $0x28] sm:$0xff] %vm226, %v3395
      %3428 = vst.msk [vmem:[#allocation2 + $0x30] sm:$0xff] %vm226, %v3396
      %3429 = vst.msk [vmem:[#allocation2 + $0x38] sm:$0xff] %vm226, %v3397
      %3430 = vst.msk [vmem:[#allocation2 + $0x40] sm:$0xff] %vm226, %v3398
      %3431 = vst.msk [vmem:[#allocation2 + $0x48] sm:$0xff] %vm226, %v3399
      %3432 = vst.msk [vmem:[#allocation2 + $0x50] sm:$0xff] %vm226, %v3400
      %3433 = vst.msk [vmem:[#allocation2 + $0x58] sm:$0xff] %vm226, %v3401
      %3434 = vst.msk [vmem:[#allocation2 + $0x60] sm:$0xff] %vm226, %v3402
      %3435 = vst.msk [vmem:[#allocation2 + $0x68] sm:$0xff] %vm226, %v3403
      %3436 = vst.msk [vmem:[#allocation2 + $0x70] sm:$0xff] %vm226, %v3404
      %3437 = vst.msk [vmem:[#allocation2 + $0x78] sm:$0xff] %vm226, %v3405
      %3438 = vst.msk [vmem:[#allocation2 + $0x80] sm:$0xff] %vm226, %v3406
      %3439 = vst.msk [vmem:[#allocation2 + $0x88] sm:$0xff] %vm226, %v3407
      %3440 = vst.msk [vmem:[#allocation2 + $0x90] sm:$0xff] %vm226, %v3408
      %3441 = vst.msk [vmem:[#allocation2 + $0x98] sm:$0xff] %vm226, %v3409
      %3442 = vst.msk [vmem:[#allocation2 + $0xa0] sm:$0xff] %vm226, %v3410
      %3443 = vst.msk [vmem:[#allocation2 + $0xa8] sm:$0xff] %vm226, %v3411
      %3444 = vst.msk [vmem:[#allocation2 + $0xb0] sm:$0xff] %vm226, %v3412
      %3445 = vst.msk [vmem:[#allocation2 + $0xb8] sm:$0xff] %vm226, %v3413
      %3446 = vst.msk [vmem:[#allocation2 + $0xc0] sm:$0xff] %vm226, %v3414
      %3447 = vst.msk [vmem:[#allocation2 + $0xc8] sm:$0xff] %vm226, %v3415
      %3448 = vst.msk [vmem:[#allocation2 + $0xd0] sm:$0xff] %vm226, %v3416
      %3449 = vst.msk [vmem:[#allocation2 + $0xd8] sm:$0xff] %vm226, %v3417
      %3450 = vst.msk [vmem:[#allocation2 + $0xe0] sm:$0xff] %vm226, %v3418
      %3451 = vst.msk [vmem:[#allocation2 + $0xe8] sm:$0xff] %vm226, %v3419
      %3452 = vst.msk [vmem:[#allocation2 + $0xf0] sm:$0xff] %vm226, %v3420
      %3453 = vst.msk [vmem:[#allocation2 + $0xf8] sm:$0xff] %vm226, %v3421
      %v3454 = vld [vmem:[%s3001 + $0x1] sm:$0xff]
      %v3455 = vld [vmem:[%s3001 + $0x9] sm:$0xff]
      %v3456 = vld [vmem:[%s3001 + $0x19] sm:$0xff]
      %v3457 = vld [vmem:[%s3001 + $0x21] sm:$0xff]
      %v3458 = vld [vmem:[%s3001 + $0x31] sm:$0xff]
      %v3459 = vld [vmem:[%s3001 + $0x39] sm:$0xff]
      %v3460 = vld [vmem:[%s3001 + $0x49] sm:$0xff]
      %v3461 = vld [vmem:[%s3001 + $0x51] sm:$0xff]
      %v3462 = vld [vmem:[%s3001 + $0x61] sm:$0xff]
      %v3463 = vld [vmem:[%s3001 + $0x69] sm:$0xff]
      %v3464 = vld [vmem:[%s3001 + $0x79] sm:$0xff]
      %v3465 = vld [vmem:[%s3001 + $0x81] sm:$0xff]
      %v3466 = vld [vmem:[%s3001 + $0x91] sm:$0xff]
      %v3467 = vld [vmem:[%s3001 + $0x99] sm:$0xff]
      %v3468 = vld [vmem:[%s3001 + $0xa9] sm:$0xff]
      %v3469 = vld [vmem:[%s3001 + $0xb1] sm:$0xff]
      %v3470 = vld [vmem:[%s3001 + $0xc1] sm:$0xff]
      %v3471 = vld [vmem:[%s3001 + $0xc9] sm:$0xff]
      %v3472 = vld [vmem:[%s3001 + $0xd9] sm:$0xff]
      %v3473 = vld [vmem:[%s3001 + $0xe1] sm:$0xff]
      %v3474 = vld [vmem:[%s3001 + $0xf1] sm:$0xff]
      %v3475 = vld [vmem:[%s3001 + $0xf9] sm:$0xff]
      %v3476 = vld [vmem:[%s3001 + $0x109] sm:$0xff]
      %v3477 = vld [vmem:[%s3001 + $0x111] sm:$0xff]
      %v3478 = vld [vmem:[%s3001 + $0x121] sm:$0xff]
      %v3479 = vld [vmem:[%s3001 + $0x129] sm:$0xff]
      %v3480 = vld [vmem:[%s3001 + $0x139] sm:$0xff]
      %v3481 = vld [vmem:[%s3001 + $0x141] sm:$0xff]
      %v3482 = vld [vmem:[%s3001 + $0x151] sm:$0xff]
      %v3483 = vld [vmem:[%s3001 + $0x159] sm:$0xff]
      %v3484 = vld [vmem:[%s3001 + $0x169] sm:$0xff]
      %v3485 = vld [vmem:[%s3001 + $0x171] sm:$0xff]
      %v3486 = vld [vmem:[#allocation2] sm:$0xff]
      %v3487 = vld [vmem:[#allocation2 + $0x8] sm:$0xff]
      %v3488 = vld [vmem:[#allocation2 + $0x10] sm:$0xff]
      %v3489 = vld [vmem:[#allocation2 + $0x18] sm:$0xff]
      %v3490 = vld [vmem:[#allocation2 + $0x20] sm:$0xff]
      %v3491 = vld [vmem:[#allocation2 + $0x28] sm:$0xff]
      %v3492 = vld [vmem:[#allocation2 + $0x30] sm:$0xff]
      %v3493 = vld [vmem:[#allocation2 + $0x38] sm:$0xff]
      %v3494 = vld [vmem:[#allocation2 + $0x40] sm:$0xff]
      %v3495 = vld [vmem:[#allocation2 + $0x48] sm:$0xff]
      %v3496 = vld [vmem:[#allocation2 + $0x50] sm:$0xff]
      %v3497 = vld [vmem:[#allocation2 + $0x58] sm:$0xff]
      %v3498 = vld [vmem:[#allocation2 + $0x60] sm:$0xff]
      %v3499 = vld [vmem:[#allocation2 + $0x68] sm:$0xff]
      %v3500 = vld [vmem:[#allocation2 + $0x70] sm:$0xff]
      %v3501 = vld [vmem:[#allocation2 + $0x78] sm:$0xff]
      %v3502 = vld [vmem:[#allocation2 + $0x80] sm:$0xff]
      %v3503 = vld [vmem:[#allocation2 + $0x88] sm:$0xff]
      %v3504 = vld [vmem:[#allocation2 + $0x90] sm:$0xff]
      %v3505 = vld [vmem:[#allocation2 + $0x98] sm:$0xff]
      %v3506 = vld [vmem:[#allocation2 + $0xa0] sm:$0xff]
      %v3507 = vld [vmem:[#allocation2 + $0xa8] sm:$0xff]
      %v3508 = vld [vmem:[#allocation2 + $0xb0] sm:$0xff]
      %v3509 = vld [vmem:[#allocation2 + $0xb8] sm:$0xff]
      %v3510 = vld [vmem:[#allocation2 + $0xc0] sm:$0xff]
      %v3511 = vld [vmem:[#allocation2 + $0xc8] sm:$0xff]
      %v3512 = vld [vmem:[#allocation2 + $0xd0] sm:$0xff]
      %v3513 = vld [vmem:[#allocation2 + $0xd8] sm:$0xff]
      %v3514 = vld [vmem:[#allocation2 + $0xe0] sm:$0xff]
      %v3515 = vld [vmem:[#allocation2 + $0xe8] sm:$0xff]
      %v3516 = vld [vmem:[#allocation2 + $0xf0] sm:$0xff]
      %v3517 = vld [vmem:[#allocation2 + $0xf8] sm:$0xff]
      %v3519 = vsel %vm350, %v3454, 0
      %v3522 = vsel %vm350, %v3455, 0
      %v3525 = vsel %vm350, %v3456, 0
      %v3528 = vsel %vm350, %v3457, 0
      %v3531 = vsel %vm350, %v3458, 0
      %v3534 = vsel %vm350, %v3459, 0
      %v3537 = vsel %vm350, %v3460, 0
      %v3540 = vsel %vm350, %v3461, 0
      %v3543 = vsel %vm350, %v3462, 0
      %v3546 = vsel %vm350, %v3463, 0
      %v3549 = vsel %vm350, %v3464, 0
      %v3552 = vsel %vm350, %v3465, 0
      %v3555 = vsel %vm350, %v3466, 0
      %v3558 = vsel %vm350, %v3467, 0
      %v3561 = vsel %vm350, %v3468, 0
      %v3564 = vsel %vm350, %v3469, 0
      %v3567 = vsel %vm350, %v3470, 0
      %v3570 = vsel %vm350, %v3471, 0
      %v3573 = vsel %vm350, %v3472, 0
      %v3576 = vsel %vm350, %v3473, 0
      %v3579 = vsel %vm350, %v3474, 0
      %v3582 = vsel %vm350, %v3475, 0
      %v3585 = vsel %vm350, %v3476, 0
      %v3588 = vsel %vm350, %v3477, 0
      %v3591 = vsel %vm350, %v3478, 0
      %v3594 = vsel %vm350, %v3479, 0
      %v3597 = vsel %vm350, %v3480, 0
      %v3600 = vsel %vm350, %v3481, 0
      %v3603 = vsel %vm350, %v3482, 0
      %v3606 = vsel %vm350, %v3483, 0
      %v3609 = vsel %vm350, %v3484, 0
      %v3612 = vsel %vm350, %v3485, 0
      %v3615 = vsel %vm447, %v284, 0
      %3617 = vmatprep.subr.mxu0 0.0
      %3618 = vmatpush1.msra.mxu0 %v3615
      %3619 = vmatprep.subr.mxu0 0.0
      %3620 = vmatpush1.msra.mxu0 0.0
      %3621 = vmatprep.subr.mxu0 0.0
      %3622 = vmatpush1.msra.mxu0 0.0
      %3623 = vmatprep.subr.mxu0 0.0
      %3624 = vmatpush1.msra.mxu0 0.0
      %3625 = vmatprep.subr.mxu0 0.0
      %3626 = vmatpush1.msra.mxu0 0.0
      %3627 = vmatprep.subr.mxu0 0.0
      %3628 = vmatpush1.msra.mxu0 0.0
      %3629 = vmatprep.subr.mxu0 0.0
      %3630 = vmatpush1.msra.mxu0 0.0
      %3631 = vmatprep.subr.mxu0 0.0
      %3632 = vmatpush1.msra.mxu0 0.0
      %3633 = vmatprep.subr.mxu0 0.0
      %3634 = vmatpush1.msra.mxu0 0.0
      %3635 = vmatprep.subr.mxu0 0.0
      %3636 = vmatpush1.msra.mxu0 0.0
      %3637 = vmatprep.subr.mxu0 0.0
      %3638 = vmatpush1.msra.mxu0 0.0
      %3639 = vmatprep.subr.mxu0 0.0
      %3640 = vmatpush1.msra.mxu0 0.0
      %3641 = vmatprep.subr.mxu0 0.0
      %3642 = vmatpush1.msra.mxu0 0.0
      %3643 = vmatprep.subr.mxu0 0.0
      %3644 = vmatpush1.msra.mxu0 0.0
      %3645 = vmatprep.subr.mxu0 0.0
      %3646 = vmatpush1.msra.mxu0 0.0
      %3647 = vmatprep.subr.mxu0 0.0
      %3648 = vmatpush1.msra.mxu0 0.0
      %3649 = vmatprep.subr.mxu0 0.0
      %3650 = vmatpush1.msra.mxu0 0.0
      %3651 = vmatprep.subr.mxu0 0.0
      %3652 = vmatpush1.msra.mxu0 0.0
      %3653 = vmatprep.subr.mxu0 0.0
      %3654 = vmatpush1.msra.mxu0 0.0
      %3655 = vmatprep.subr.mxu0 0.0
      %3656 = vmatpush1.msra.mxu0 0.0
      %3657 = vmatprep.subr.mxu0 0.0
      %3658 = vmatpush1.msra.mxu0 0.0
      %3659 = vmatprep.subr.mxu0 0.0
      %3660 = vmatpush1.msra.mxu0 0.0
      %3661 = vmatprep.subr.mxu0 0.0
      %3662 = vmatpush1.msra.mxu0 0.0
      %3663 = vmatprep.subr.mxu0 0.0
      %3664 = vmatpush1.msra.mxu0 0.0
      %3665 = vmatprep.subr.mxu0 0.0
      %3666 = vmatpush1.msra.mxu0 0.0
      %3667 = vmatprep.subr.mxu0 0.0
      %3668 = vmatpush1.msra.mxu0 0.0
      %3669 = vmatprep.subr.mxu0 0.0
      %3670 = vmatpush1.msra.mxu0 0.0
      %3671 = vmatprep.subr.mxu0 0.0
      %3672 = vmatpush1.msra.mxu0 0.0
      %3673 = vmatprep.subr.mxu0 0.0
      %3674 = vmatpush1.msra.mxu0 0.0
      %3675 = vmatprep.subr.mxu0 0.0
      %3676 = vmatpush1.msra.mxu0 0.0
      %3677 = vmatprep.subr.mxu0 0.0
      %3678 = vmatpush1.msra.mxu0 0.0
      %3679 = vmatprep.subr.mxu0 0.0
      %3680 = vmatpush1.msra.mxu0 0.0
      %3681 = vmatprep.mubr.f32.mxu0 0.0
      %3682 = vmatmul.mubr.f32.gmra.mrb[0].mxu0 %v3519
      %v3683 = vpop.f32.mrb[0].mxu0
      %v3684 = vadd.f32 0.0, %v3683
      %v3685 = vpop.f32.mrb[0].mxu0
      %3686 = vmatprep.mubr.f32.mxu0 0.0
      %3687 = vmatmul.mubr.f32.gmra.mrb[0].mxu0 %v3522
      %v3688 = vpop.f32.mrb[0].mxu0
      %v3689 = vadd.f32 0.0, %v3688
      %v3690 = vpop.f32.mrb[0].mxu0
      %3691 = vmatprep.mubr.f32.mxu0 0.0
      %3692 = vmatmul.mubr.f32.gmra.mrb[0].mxu0 %v3525
      %v3693 = vpop.f32.mrb[0].mxu0
      %v3694 = vadd.f32 0.0, %v3693
      %v3695 = vpop.f32.mrb[0].mxu0
      %3696 = vmatprep.mubr.f32.mxu0 0.0
      %3697 = vmatmul.mubr.f32.gmra.mrb[0].mxu0 %v3528
      %v3698 = vpop.f32.mrb[0].mxu0
      %v3699 = vadd.f32 0.0, %v3698
      %v3700 = vpop.f32.mrb[0].mxu0
      %3701 = vmatprep.mubr.f32.mxu0 0.0
      %3702 = vmatmul.mubr.f32.gmra.mrb[0].mxu0 %v3531
      %v3703 = vpop.f32.mrb[0].mxu0
      %v3704 = vadd.f32 0.0, %v3703
      %v3705 = vpop.f32.mrb[0].mxu0
      %3706 = vmatprep.mubr.f32.mxu0 0.0
      %3707 = vmatmul.mubr.f32.gmra.mrb[0].mxu0 %v3534
      %v3708 = vpop.f32.mrb[0].mxu0
      %v3709 = vadd.f32 0.0, %v3708
      %v3710 = vpop.f32.mrb[0].mxu0
      %3711 = vmatprep.mubr.f32.mxu0 0.0
      %3712 = vmatmul.mubr.f32.gmra.mrb[0].mxu0 %v3537
      %v3713 = vpop.f32.mrb[0].mxu0
      %v3714 = vadd.f32 0.0, %v3713
      %v3715 = vpop.f32.mrb[0].mxu0
      %3716 = vmatprep.mubr.f32.mxu0 0.0
      %3717 = vmatmul.mubr.f32.gmra.mrb[0].mxu0 %v3540
      %v3718 = vpop.f32.mrb[0].mxu0
      %v3719 = vadd.f32 0.0, %v3718
      %v3720 = vpop.f32.mrb[0].mxu0
      %3721 = vmatprep.mubr.f32.mxu0 0.0
      %3722 = vmatmul.mubr.f32.gmra.mrb[0].mxu0 %v3543
      %v3723 = vpop.f32.mrb[0].mxu0
      %v3724 = vadd.f32 0.0, %v3723
      %v3725 = vpop.f32.mrb[0].mxu0
      %3726 = vmatprep.mubr.f32.mxu0 0.0
      %3727 = vmatmul.mubr.f32.gmra.mrb[0].mxu0 %v3546
      %v3728 = vpop.f32.mrb[0].mxu0
      %v3729 = vadd.f32 0.0, %v3728
      %v3730 = vpop.f32.mrb[0].mxu0
      %3731 = vmatprep.mubr.f32.mxu0 0.0
      %3732 = vmatmul.mubr.f32.gmra.mrb[0].mxu0 %v3549
      %v3733 = vpop.f32.mrb[0].mxu0
      %v3734 = vadd.f32 0.0, %v3733
      %v3735 = vpop.f32.mrb[0].mxu0
      %3736 = vmatprep.mubr.f32.mxu0 0.0
      %3737 = vmatmul.mubr.f32.gmra.mrb[0].mxu0 %v3552
      %v3738 = vpop.f32.mrb[0].mxu0
      %v3739 = vadd.f32 0.0, %v3738
      %v3740 = vpop.f32.mrb[0].mxu0
      %3741 = vmatprep.mubr.f32.mxu0 0.0
      %3742 = vmatmul.mubr.f32.gmra.mrb[0].mxu0 %v3555
      %v3743 = vpop.f32.mrb[0].mxu0
      %v3744 = vadd.f32 0.0, %v3743
      %v3745 = vpop.f32.mrb[0].mxu0
      %3746 = vmatprep.mubr.f32.mxu0 0.0
      %3747 = vmatmul.mubr.f32.gmra.mrb[0].mxu0 %v3558
      %v3748 = vpop.f32.mrb[0].mxu0
      %v3749 = vadd.f32 0.0, %v3748
      %v3750 = vpop.f32.mrb[0].mxu0
      %3751 = vmatprep.mubr.f32.mxu0 0.0
      %3752 = vmatmul.mubr.f32.gmra.mrb[0].mxu0 %v3561
      %v3753 = vpop.f32.mrb[0].mxu0
      %v3754 = vadd.f32 0.0, %v3753
      %v3755 = vpop.f32.mrb[0].mxu0
      %3756 = vmatprep.mubr.f32.mxu0 0.0
      %3757 = vmatmul.mubr.f32.gmra.mrb[0].mxu0 %v3564
      %v3758 = vpop.f32.mrb[0].mxu0
      %v3759 = vadd.f32 0.0, %v3758
      %v3760 = vpop.f32.mrb[0].mxu0
      %3761 = vmatprep.mubr.f32.mxu0 0.0
      %3762 = vmatmul.mubr.f32.gmra.mrb[0].mxu0 %v3567
      %v3763 = vpop.f32.mrb[0].mxu0
      %v3764 = vadd.f32 0.0, %v3763
      %v3765 = vpop.f32.mrb[0].mxu0
      %3766 = vmatprep.mubr.f32.mxu0 0.0
      %3767 = vmatmul.mubr.f32.gmra.mrb[0].mxu0 %v3570
      %v3768 = vpop.f32.mrb[0].mxu0
      %v3769 = vadd.f32 0.0, %v3768
      %v3770 = vpop.f32.mrb[0].mxu0
      %3771 = vmatprep.mubr.f32.mxu0 0.0
      %3772 = vmatmul.mubr.f32.gmra.mrb[0].mxu0 %v3573
      %v3773 = vpop.f32.mrb[0].mxu0
      %v3774 = vadd.f32 0.0, %v3773
      %v3775 = vpop.f32.mrb[0].mxu0
      %3776 = vmatprep.mubr.f32.mxu0 0.0
      %3777 = vmatmul.mubr.f32.gmra.mrb[0].mxu0 %v3576
      %v3778 = vpop.f32.mrb[0].mxu0
      %v3779 = vadd.f32 0.0, %v3778
      %v3780 = vpop.f32.mrb[0].mxu0
      %3781 = vmatprep.mubr.f32.mxu0 0.0
      %3782 = vmatmul.mubr.f32.gmra.mrb[0].mxu0 %v3579
      %v3783 = vpop.f32.mrb[0].mxu0
      %v3784 = vadd.f32 0.0, %v3783
      %v3785 = vpop.f32.mrb[0].mxu0
      %3786 = vmatprep.mubr.f32.mxu0 0.0
      %3787 = vmatmul.mubr.f32.gmra.mrb[0].mxu0 %v3582
      %v3788 = vpop.f32.mrb[0].mxu0
      %v3789 = vadd.f32 0.0, %v3788
      %v3790 = vpop.f32.mrb[0].mxu0
      %3791 = vmatprep.mubr.f32.mxu0 0.0
      %3792 = vmatmul.mubr.f32.gmra.mrb[0].mxu0 %v3585
      %v3793 = vpop.f32.mrb[0].mxu0
      %v3794 = vadd.f32 0.0, %v3793
      %v3795 = vpop.f32.mrb[0].mxu0
      %3796 = vmatprep.mubr.f32.mxu0 0.0
      %3797 = vmatmul.mubr.f32.gmra.mrb[0].mxu0 %v3588
      %v3798 = vpop.f32.mrb[0].mxu0
      %v3799 = vadd.f32 0.0, %v3798
      %v3800 = vpop.f32.mrb[0].mxu0
      %3801 = vmatprep.mubr.f32.mxu0 0.0
      %3802 = vmatmul.mubr.f32.gmra.mrb[0].mxu0 %v3591
      %v3803 = vpop.f32.mrb[0].mxu0
      %v3804 = vadd.f32 0.0, %v3803
      %v3805 = vpop.f32.mrb[0].mxu0
      %3806 = vmatprep.mubr.f32.mxu0 0.0
      %3807 = vmatmul.mubr.f32.gmra.mrb[0].mxu0 %v3594
      %v3808 = vpop.f32.mrb[0].mxu0
      %v3809 = vadd.f32 0.0, %v3808
      %v3810 = vpop.f32.mrb[0].mxu0
      %3811 = vmatprep.mubr.f32.mxu0 0.0
      %3812 = vmatmul.mubr.f32.gmra.mrb[0].mxu0 %v3597
      %v3813 = vpop.f32.mrb[0].mxu0
      %v3814 = vadd.f32 0.0, %v3813
      %v3815 = vpop.f32.mrb[0].mxu0
      %3816 = vmatprep.mubr.f32.mxu0 0.0
      %3817 = vmatmul.mubr.f32.gmra.mrb[0].mxu0 %v3600
      %v3818 = vpop.f32.mrb[0].mxu0
      %v3819 = vadd.f32 0.0, %v3818
      %v3820 = vpop.f32.mrb[0].mxu0
      %3821 = vmatprep.mubr.f32.mxu0 0.0
      %3822 = vmatmul.mubr.f32.gmra.mrb[0].mxu0 %v3603
      %v3823 = vpop.f32.mrb[0].mxu0
      %v3824 = vadd.f32 0.0, %v3823
      %v3825 = vpop.f32.mrb[0].mxu0
      %3826 = vmatprep.mubr.f32.mxu0 0.0
      %3827 = vmatmul.mubr.f32.gmra.mrb[0].mxu0 %v3606
      %v3828 = vpop.f32.mrb[0].mxu0
      %v3829 = vadd.f32 0.0, %v3828
      %v3830 = vpop.f32.mrb[0].mxu0
      %3831 = vmatprep.mubr.f32.mxu0 0.0
      %3832 = vmatmul.mubr.f32.gmra.mrb[0].mxu0 %v3609
      %v3833 = vpop.f32.mrb[0].mxu0
      %v3834 = vadd.f32 0.0, %v3833
      %v3835 = vpop.f32.mrb[0].mxu0
      %3836 = vmatprep.mubr.f32.mxu0 0.0
      %3837 = vmatmul.mubr.f32.gmra.mrb[0].mxu0 %v3612
      %v3838 = vpop.f32.mrb[0].mxu0
      %v3839 = vadd.f32 0.0, %v3838
      %v3840 = vpop.f32.mrb[0].mxu0
      %3841 = vdwg.mxu0
      %v3842 = vadd.f32 %v3486, %v3684
      %v3843 = vadd.f32 %v3487, %v3689
      %v3844 = vadd.f32 %v3488, %v3694
      %v3845 = vadd.f32 %v3489, %v3699
      %v3846 = vadd.f32 %v3490, %v3704
      %v3847 = vadd.f32 %v3491, %v3709
      %v3848 = vadd.f32 %v3492, %v3714
      %v3849 = vadd.f32 %v3493, %v3719
      %v3850 = vadd.f32 %v3494, %v3724
      %v3851 = vadd.f32 %v3495, %v3729
      %v3852 = vadd.f32 %v3496, %v3734
      %v3853 = vadd.f32 %v3497, %v3739
      %v3854 = vadd.f32 %v3498, %v3744
      %v3855 = vadd.f32 %v3499, %v3749
      %v3856 = vadd.f32 %v3500, %v3754
      %v3857 = vadd.f32 %v3501, %v3759
      %v3858 = vadd.f32 %v3502, %v3764
      %v3859 = vadd.f32 %v3503, %v3769
      %v3860 = vadd.f32 %v3504, %v3774
      %v3861 = vadd.f32 %v3505, %v3779
      %v3862 = vadd.f32 %v3506, %v3784
      %v3863 = vadd.f32 %v3507, %v3789
      %v3864 = vadd.f32 %v3508, %v3794
      %v3865 = vadd.f32 %v3509, %v3799
      %v3866 = vadd.f32 %v3510, %v3804
      %v3867 = vadd.f32 %v3511, %v3809
      %v3868 = vadd.f32 %v3512, %v3814
      %v3869 = vadd.f32 %v3513, %v3819
      %v3870 = vadd.f32 %v3514, %v3824
      %v3871 = vadd.f32 %v3515, %v3829
      %v3872 = vadd.f32 %v3516, %v3834
      %v3873 = vadd.f32 %v3517, %v3839
      %3874 = vst.msk [vmem:[#allocation2] sm:$0xff] %vm226, %v3842
      %3875 = vst.msk [vmem:[#allocation2 + $0x8] sm:$0xff] %vm226, %v3843
      %3876 = vst.msk [vmem:[#allocation2 + $0x10] sm:$0xff] %vm226, %v3844
      %3877 = vst.msk [vmem:[#allocation2 + $0x18] sm:$0xff] %vm226, %v3845
      %3878 = vst.msk [vmem:[#allocation2 + $0x20] sm:$0xff] %vm226, %v3846
      %3879 = vst.msk [vmem:[#allocation2 + $0x28] sm:$0xff] %vm226, %v3847
      %3880 = vst.msk [vmem:[#allocation2 + $0x30] sm:$0xff] %vm226, %v3848
      %3881 = vst.msk [vmem:[#allocation2 + $0x38] sm:$0xff] %vm226, %v3849
      %3882 = vst.msk [vmem:[#allocation2 + $0x40] sm:$0xff] %vm226, %v3850
      %3883 = vst.msk [vmem:[#allocation2 + $0x48] sm:$0xff] %vm226, %v3851
      %3884 = vst.msk [vmem:[#allocation2 + $0x50] sm:$0xff] %vm226, %v3852
      %3885 = vst.msk [vmem:[#allocation2 + $0x58] sm:$0xff] %vm226, %v3853
      %3886 = vst.msk [vmem:[#allocation2 + $0x60] sm:$0xff] %vm226, %v3854
      %3887 = vst.msk [vmem:[#allocation2 + $0x68] sm:$0xff] %vm226, %v3855
      %3888 = vst.msk [vmem:[#allocation2 + $0x70] sm:$0xff] %vm226, %v3856
      %3889 = vst.msk [vmem:[#allocation2 + $0x78] sm:$0xff] %vm226, %v3857
      %3890 = vst.msk [vmem:[#allocation2 + $0x80] sm:$0xff] %vm226, %v3858
      %3891 = vst.msk [vmem:[#allocation2 + $0x88] sm:$0xff] %vm226, %v3859
      %3892 = vst.msk [vmem:[#allocation2 + $0x90] sm:$0xff] %vm226, %v3860
      %3893 = vst.msk [vmem:[#allocation2 + $0x98] sm:$0xff] %vm226, %v3861
      %3894 = vst.msk [vmem:[#allocation2 + $0xa0] sm:$0xff] %vm226, %v3862
      %3895 = vst.msk [vmem:[#allocation2 + $0xa8] sm:$0xff] %vm226, %v3863
      %3896 = vst.msk [vmem:[#allocation2 + $0xb0] sm:$0xff] %vm226, %v3864
      %3897 = vst.msk [vmem:[#allocation2 + $0xb8] sm:$0xff] %vm226, %v3865
      %3898 = vst.msk [vmem:[#allocation2 + $0xc0] sm:$0xff] %vm226, %v3866
      %3899 = vst.msk [vmem:[#allocation2 + $0xc8] sm:$0xff] %vm226, %v3867
      %3900 = vst.msk [vmem:[#allocation2 + $0xd0] sm:$0xff] %vm226, %v3868
      %3901 = vst.msk [vmem:[#allocation2 + $0xd8] sm:$0xff] %vm226, %v3869
      %3902 = vst.msk [vmem:[#allocation2 + $0xe0] sm:$0xff] %vm226, %v3870
      %3903 = vst.msk [vmem:[#allocation2 + $0xe8] sm:$0xff] %vm226, %v3871
      %3904 = vst.msk [vmem:[#allocation2 + $0xf0] sm:$0xff] %vm226, %v3872
      %3905 = vst.msk [vmem:[#allocation2 + $0xf8] sm:$0xff] %vm226, %v3873
      %v3906 = vld [vmem:[%s3001 + $0x2] sm:$0xff]
      %v3907 = vld [vmem:[%s3001 + $0xa] sm:$0xff]
      %v3908 = vld [vmem:[%s3001 + $0x1a] sm:$0xff]
      %v3909 = vld [vmem:[%s3001 + $0x22] sm:$0xff]
      %v3910 = vld [vmem:[%s3001 + $0x32] sm:$0xff]
      %v3911 = vld [vmem:[%s3001 + $0x3a] sm:$0xff]
      %v3912 = vld [vmem:[%s3001 + $0x4a] sm:$0xff]
      %v3913 = vld [vmem:[%s3001 + $0x52] sm:$0xff]
      %v3914 = vld [vmem:[%s3001 + $0x62] sm:$0xff]
      %v3915 = vld [vmem:[%s3001 + $0x6a] sm:$0xff]
      %v3916 = vld [vmem:[%s3001 + $0x7a] sm:$0xff]
      %v3917 = vld [vmem:[%s3001 + $0x82] sm:$0xff]
      %v3918 = vld [vmem:[%s3001 + $0x92] sm:$0xff]
      %v3919 = vld [vmem:[%s3001 + $0x9a] sm:$0xff]
      %v3920 = vld [vmem:[%s3001 + $0xaa] sm:$0xff]
      %v3921 = vld [vmem:[%s3001 + $0xb2] sm:$0xff]
      %v3922 = vld [vmem:[%s3001 + $0xc2] sm:$0xff]
      %v3923 = vld [vmem:[%s3001 + $0xca] sm:$0xff]
      %v3924 = vld [vmem:[%s3001 + $0xda] sm:$0xff]
      %v3925 = vld [vmem:[%s3001 + $0xe2] sm:$0xff]
      %v3926 = vld [vmem:[%s3001 + $0xf2] sm:$0xff]
      %v3927 = vld [vmem:[%s3001 + $0xfa] sm:$0xff]
      %v3928 = vld [vmem:[%s3001 + $0x10a] sm:$0xff]
      %v3929 = vld [vmem:[%s3001 + $0x112] sm:$0xff]
      %v3930 = vld [vmem:[%s3001 + $0x122] sm:$0xff]
      %v3931 = vld [vmem:[%s3001 + $0x12a] sm:$0xff]
      %v3932 = vld [vmem:[%s3001 + $0x13a] sm:$0xff]
      %v3933 = vld [vmem:[%s3001 + $0x142] sm:$0xff]
      %v3934 = vld [vmem:[%s3001 + $0x152] sm:$0xff]
      %v3935 = vld [vmem:[%s3001 + $0x15a] sm:$0xff]
      %v3936 = vld [vmem:[%s3001 + $0x16a] sm:$0xff]
      %v3937 = vld [vmem:[%s3001 + $0x172] sm:$0xff]
      %v3938 = vld [vmem:[#allocation2] sm:$0xff]
      %v3939 = vld [vmem:[#allocation2 + $0x8] sm:$0xff]
      %v3940 = vld [vmem:[#allocation2 + $0x10] sm:$0xff]
      %v3941 = vld [vmem:[#allocation2 + $0x18] sm:$0xff]
      %v3942 = vld [vmem:[#allocation2 + $0x20] sm:$0xff]
      %v3943 = vld [vmem:[#allocation2 + $0x28] sm:$0xff]
      %v3944 = vld [vmem:[#allocation2 + $0x30] sm:$0xff]
      %v3945 = vld [vmem:[#allocation2 + $0x38] sm:$0xff]
      %v3946 = vld [vmem:[#allocation2 + $0x40] sm:$0xff]
      %v3947 = vld [vmem:[#allocation2 + $0x48] sm:$0xff]
      %v3948 = vld [vmem:[#allocation2 + $0x50] sm:$0xff]
      %v3949 = vld [vmem:[#allocation2 + $0x58] sm:$0xff]
      %v3950 = vld [vmem:[#allocation2 + $0x60] sm:$0xff]
      %v3951 = vld [vmem:[#allocation2 + $0x68] sm:$0xff]
      %v3952 = vld [vmem:[#allocation2 + $0x70] sm:$0xff]
      %v3953 = vld [vmem:[#allocation2 + $0x78] sm:$0xff]
      %v3954 = vld [vmem:[#allocation2 + $0x80] sm:$0xff]
      %v3955 = vld [vmem:[#allocation2 + $0x88] sm:$0xff]
      %v3956 = vld [vmem:[#allocation2 + $0x90] sm:$0xff]
      %v3957 = vld [vmem:[#allocation2 + $0x98] sm:$0xff]
      %v3958 = vld [vmem:[#allocation2 + $0xa0] sm:$0xff]
      %v3959 = vld [vmem:[#allocation2 + $0xa8] sm:$0xff]
      %v3960 = vld [vmem:[#allocation2 + $0xb0] sm:$0xff]
      %v3961 = vld [vmem:[#allocation2 + $0xb8] sm:$0xff]
      %v3962 = vld [vmem:[#allocation2 + $0xc0] sm:$0xff]
      %v3963 = vld [vmem:[#allocation2 + $0xc8] sm:$0xff]
      %v3964 = vld [vmem:[#allocation2 + $0xd0] sm:$0xff]
      %v3965 = vld [vmem:[#allocation2 + $0xd8] sm:$0xff]
      %v3966 = vld [vmem:[#allocation2 + $0xe0] sm:$0xff]
      %v3967 = vld [vmem:[#allocation2 + $0xe8] sm:$0xff]
      %v3968 = vld [vmem:[#allocation2 + $0xf0] sm:$0xff]
      %v3969 = vld [vmem:[#allocation2 + $0xf8] sm:$0xff]
      %v3971 = vsel %vm350, %v3906, 0
      %v3974 = vsel %vm350, %v3907, 0
      %v3977 = vsel %vm350, %v3908, 0
      %v3980 = vsel %vm350, %v3909, 0
      %v3983 = vsel %vm350, %v3910, 0
      %v3986 = vsel %vm350, %v3911, 0
      %v3989 = vsel %vm350, %v3912, 0
      %v3992 = vsel %vm350, %v3913, 0
      %v3995 = vsel %vm350, %v3914, 0
      %v3998 = vsel %vm350, %v3915, 0
      %v4001 = vsel %vm350, %v3916, 0
      %v4004 = vsel %vm350, %v3917, 0
      %v4007 = vsel %vm350, %v3918, 0
      %v4010 = vsel %vm350, %v3919, 0
      %v4013 = vsel %vm350, %v3920, 0
      %v4016 = vsel %vm350, %v3921, 0
      %v4019 = vsel %vm350, %v3922, 0
      %v4022 = vsel %vm350, %v3923, 0
      %v4025 = vsel %vm350, %v3924, 0
      %v4028 = vsel %vm350, %v3925, 0
      %v4031 = vsel %vm350, %v3926, 0
      %v4034 = vsel %vm350, %v3927, 0
      %v4037 = vsel %vm350, %v3928, 0
      %v4040 = vsel %vm350, %v3929, 0
      %v4043 = vsel %vm350, %v3930, 0
      %v4046 = vsel %vm350, %v3931, 0
      %v4049 = vsel %vm350, %v3932, 0
      %v4052 = vsel %vm350, %v3933, 0
      %v4055 = vsel %vm350, %v3934, 0
      %v4058 = vsel %vm350, %v3935, 0
      %v4061 = vsel %vm350, %v3936, 0
      %v4064 = vsel %vm350, %v3937, 0
      %v4067 = vsel %vm447, %v285, 0
      %4069 = vmatprep.subr.mxu0 0.0
      %4070 = vmatpush1.msra.mxu0 %v4067
      %4071 = vmatprep.subr.mxu0 0.0
      %4072 = vmatpush1.msra.mxu0 0.0
      %4073 = vmatprep.subr.mxu0 0.0
      %4074 = vmatpush1.msra.mxu0 0.0
      %4075 = vmatprep.subr.mxu0 0.0
      %4076 = vmatpush1.msra.mxu0 0.0
      %4077 = vmatprep.subr.mxu0 0.0
      %4078 = vmatpush1.msra.mxu0 0.0
      %4079 = vmatprep.subr.mxu0 0.0
      %4080 = vmatpush1.msra.mxu0 0.0
      %4081 = vmatprep.subr.mxu0 0.0
      %4082 = vmatpush1.msra.mxu0 0.0
      %4083 = vmatprep.subr.mxu0 0.0
      %4084 = vmatpush1.msra.mxu0 0.0
      %4085 = vmatprep.subr.mxu0 0.0
      %4086 = vmatpush1.msra.mxu0 0.0
      %4087 = vmatprep.subr.mxu0 0.0
      %4088 = vmatpush1.msra.mxu0 0.0
      %4089 = vmatprep.subr.mxu0 0.0
      %4090 = vmatpush1.msra.mxu0 0.0
      %4091 = vmatprep.subr.mxu0 0.0
      %4092 = vmatpush1.msra.mxu0 0.0
      %4093 = vmatprep.subr.mxu0 0.0
      %4094 = vmatpush1.msra.mxu0 0.0
      %4095 = vmatprep.subr.mxu0 0.0
      %4096 = vmatpush1.msra.mxu0 0.0
      %4097 = vmatprep.subr.mxu0 0.0
      %4098 = vmatpush1.msra.mxu0 0.0
      %4099 = vmatprep.subr.mxu0 0.0
      %4100 = vmatpush1.msra.mxu0 0.0
      %4101 = vmatprep.subr.mxu0 0.0
      %4102 = vmatpush1.msra.mxu0 0.0
      %4103 = vmatprep.subr.mxu0 0.0
      %4104 = vmatpush1.msra.mxu0 0.0
      %4105 = vmatprep.subr.mxu0 0.0
      %4106 = vmatpush1.msra.mxu0 0.0
      %4107 = vmatprep.subr.mxu0 0.0
      %4108 = vmatpush1.msra.mxu0 0.0
      %4109 = vmatprep.subr.mxu0 0.0
      %4110 = vmatpush1.msra.mxu0 0.0
      %4111 = vmatprep.subr.mxu0 0.0
      %4112 = vmatpush1.msra.mxu0 0.0
      %4113 = vmatprep.subr.mxu0 0.0
      %4114 = vmatpush1.msra.mxu0 0.0
      %4115 = vmatprep.subr.mxu0 0.0
      %4116 = vmatpush1.msra.mxu0 0.0
      %4117 = vmatprep.subr.mxu0 0.0
      %4118 = vmatpush1.msra.mxu0 0.0
      %4119 = vmatprep.subr.mxu0 0.0
      %4120 = vmatpush1.msra.mxu0 0.0
      %4121 = vmatprep.subr.mxu0 0.0
      %4122 = vmatpush1.msra.mxu0 0.0
      %4123 = vmatprep.subr.mxu0 0.0
      %4124 = vmatpush1.msra.mxu0 0.0
      %4125 = vmatprep.subr.mxu0 0.0
      %4126 = vmatpush1.msra.mxu0 0.0
      %4127 = vmatprep.subr.mxu0 0.0
      %4128 = vmatpush1.msra.mxu0 0.0
      %4129 = vmatprep.subr.mxu0 0.0
      %4130 = vmatpush1.msra.mxu0 0.0
      %4131 = vmatprep.subr.mxu0 0.0
      %4132 = vmatpush1.msra.mxu0 0.0
      %4133 = vmatprep.mubr.f32.mxu0 0.0
      %4134 = vmatmul.mubr.f32.gmra.mrb[0].mxu0 %v3971
      %v4135 = vpop.f32.mrb[0].mxu0
      %v4136 = vadd.f32 0.0, %v4135
      %v4137 = vpop.f32.mrb[0].mxu0
      %4138 = vmatprep.mubr.f32.mxu0 0.0
      %4139 = vmatmul.mubr.f32.gmra.mrb[0].mxu0 %v3974
      %v4140 = vpop.f32.mrb[0].mxu0
      %v4141 = vadd.f32 0.0, %v4140
      %v4142 = vpop.f32.mrb[0].mxu0
      %4143 = vmatprep.mubr.f32.mxu0 0.0
      %4144 = vmatmul.mubr.f32.gmra.mrb[0].mxu0 %v3977
      %v4145 = vpop.f32.mrb[0].mxu0
      %v4146 = vadd.f32 0.0, %v4145
      %v4147 = vpop.f32.mrb[0].mxu0
      %4148 = vmatprep.mubr.f32.mxu0 0.0
      %4149 = vmatmul.mubr.f32.gmra.mrb[0].mxu0 %v3980
      %v4150 = vpop.f32.mrb[0].mxu0
      %v4151 = vadd.f32 0.0, %v4150
      %v4152 = vpop.f32.mrb[0].mxu0
      %4153 = vmatprep.mubr.f32.mxu0 0.0
      %4154 = vmatmul.mubr.f32.gmra.mrb[0].mxu0 %v3983
      %v4155 = vpop.f32.mrb[0].mxu0
      %v4156 = vadd.f32 0.0, %v4155
      %v4157 = vpop.f32.mrb[0].mxu0
      %4158 = vmatprep.mubr.f32.mxu0 0.0
      %4159 = vmatmul.mubr.f32.gmra.mrb[0].mxu0 %v3986
      %v4160 = vpop.f32.mrb[0].mxu0
      %v4161 = vadd.f32 0.0, %v4160
      %v4162 = vpop.f32.mrb[0].mxu0
      %4163 = vmatprep.mubr.f32.mxu0 0.0
      %4164 = vmatmul.mubr.f32.gmra.mrb[0].mxu0 %v3989
      %v4165 = vpop.f32.mrb[0].mxu0
      %v4166 = vadd.f32 0.0, %v4165
      %v4167 = vpop.f32.mrb[0].mxu0
      %4168 = vmatprep.mubr.f32.mxu0 0.0
      %4169 = vmatmul.mubr.f32.gmra.mrb[0].mxu0 %v3992
      %v4170 = vpop.f32.mrb[0].mxu0
      %v4171 = vadd.f32 0.0, %v4170
      %v4172 = vpop.f32.mrb[0].mxu0
      %4173 = vmatprep.mubr.f32.mxu0 0.0
      %4174 = vmatmul.mubr.f32.gmra.mrb[0].mxu0 %v3995
      %v4175 = vpop.f32.mrb[0].mxu0
      %v4176 = vadd.f32 0.0, %v4175
      %v4177 = vpop.f32.mrb[0].mxu0
      %4178 = vmatprep.mubr.f32.mxu0 0.0
      %4179 = vmatmul.mubr.f32.gmra.mrb[0].mxu0 %v3998
      %v4180 = vpop.f32.mrb[0].mxu0
      %v4181 = vadd.f32 0.0, %v4180
      %v4182 = vpop.f32.mrb[0].mxu0
      %4183 = vmatprep.mubr.f32.mxu0 0.0
      %4184 = vmatmul.mubr.f32.gmra.mrb[0].mxu0 %v4001
      %v4185 = vpop.f32.mrb[0].mxu0
      %v4186 = vadd.f32 0.0, %v4185
      %v4187 = vpop.f32.mrb[0].mxu0
      %4188 = vmatprep.mubr.f32.mxu0 0.0
      %4189 = vmatmul.mubr.f32.gmra.mrb[0].mxu0 %v4004
      %v4190 = vpop.f32.mrb[0].mxu0
      %v4191 = vadd.f32 0.0, %v4190
      %v4192 = vpop.f32.mrb[0].mxu0
      %4193 = vmatprep.mubr.f32.mxu0 0.0
      %4194 = vmatmul.mubr.f32.gmra.mrb[0].mxu0 %v4007
      %v4195 = vpop.f32.mrb[0].mxu0
      %v4196 = vadd.f32 0.0, %v4195
      %v4197 = vpop.f32.mrb[0].mxu0
      %4198 = vmatprep.mubr.f32.mxu0 0.0
      %4199 = vmatmul.mubr.f32.gmra.mrb[0].mxu0 %v4010
      %v4200 = vpop.f32.mrb[0].mxu0
      %v4201 = vadd.f32 0.0, %v4200
      %v4202 = vpop.f32.mrb[0].mxu0
      %4203 = vmatprep.mubr.f32.mxu0 0.0
      %4204 = vmatmul.mubr.f32.gmra.mrb[0].mxu0 %v4013
      %v4205 = vpop.f32.mrb[0].mxu0
      %v4206 = vadd.f32 0.0, %v4205
      %v4207 = vpop.f32.mrb[0].mxu0
      %4208 = vmatprep.mubr.f32.mxu0 0.0
      %4209 = vmatmul.mubr.f32.gmra.mrb[0].mxu0 %v4016
      %v4210 = vpop.f32.mrb[0].mxu0
      %v4211 = vadd.f32 0.0, %v4210
      %v4212 = vpop.f32.mrb[0].mxu0
      %4213 = vmatprep.mubr.f32.mxu0 0.0
      %4214 = vmatmul.mubr.f32.gmra.mrb[0].mxu0 %v4019
      %v4215 = vpop.f32.mrb[0].mxu0
      %v4216 = vadd.f32 0.0, %v4215
      %v4217 = vpop.f32.mrb[0].mxu0
      %4218 = vmatprep.mubr.f32.mxu0 0.0
      %4219 = vmatmul.mubr.f32.gmra.mrb[0].mxu0 %v4022
      %v4220 = vpop.f32.mrb[0].mxu0
      %v4221 = vadd.f32 0.0, %v4220
      %v4222 = vpop.f32.mrb[0].mxu0
      %4223 = vmatprep.mubr.f32.mxu0 0.0
      %4224 = vmatmul.mubr.f32.gmra.mrb[0].mxu0 %v4025
      %v4225 = vpop.f32.mrb[0].mxu0
      %v4226 = vadd.f32 0.0, %v4225
      %v4227 = vpop.f32.mrb[0].mxu0
      %4228 = vmatprep.mubr.f32.mxu0 0.0
      %4229 = vmatmul.mubr.f32.gmra.mrb[0].mxu0 %v4028
      %v4230 = vpop.f32.mrb[0].mxu0
      %v4231 = vadd.f32 0.0, %v4230
      %v4232 = vpop.f32.mrb[0].mxu0
      %4233 = vmatprep.mubr.f32.mxu0 0.0
      %4234 = vmatmul.mubr.f32.gmra.mrb[0].mxu0 %v4031
      %v4235 = vpop.f32.mrb[0].mxu0
      %v4236 = vadd.f32 0.0, %v4235
      %v4237 = vpop.f32.mrb[0].mxu0
      %4238 = vmatprep.mubr.f32.mxu0 0.0
      %4239 = vmatmul.mubr.f32.gmra.mrb[0].mxu0 %v4034
      %v4240 = vpop.f32.mrb[0].mxu0
      %v4241 = vadd.f32 0.0, %v4240
      %v4242 = vpop.f32.mrb[0].mxu0
      %4243 = vmatprep.mubr.f32.mxu0 0.0
      %4244 = vmatmul.mubr.f32.gmra.mrb[0].mxu0 %v4037
      %v4245 = vpop.f32.mrb[0].mxu0
      %v4246 = vadd.f32 0.0, %v4245
      %v4247 = vpop.f32.mrb[0].mxu0
      %4248 = vmatprep.mubr.f32.mxu0 0.0
      %4249 = vmatmul.mubr.f32.gmra.mrb[0].mxu0 %v4040
      %v4250 = vpop.f32.mrb[0].mxu0
      %v4251 = vadd.f32 0.0, %v4250
      %v4252 = vpop.f32.mrb[0].mxu0
      %4253 = vmatprep.mubr.f32.mxu0 0.0
      %4254 = vmatmul.mubr.f32.gmra.mrb[0].mxu0 %v4043
      %v4255 = vpop.f32.mrb[0].mxu0
      %v4256 = vadd.f32 0.0, %v4255
      %v4257 = vpop.f32.mrb[0].mxu0
      %4258 = vmatprep.mubr.f32.mxu0 0.0
      %4259 = vmatmul.mubr.f32.gmra.mrb[0].mxu0 %v4046
      %v4260 = vpop.f32.mrb[0].mxu0
      %v4261 = vadd.f32 0.0, %v4260
      %v4262 = vpop.f32.mrb[0].mxu0
      %4263 = vmatprep.mubr.f32.mxu0 0.0
      %4264 = vmatmul.mubr.f32.gmra.mrb[0].mxu0 %v4049
      %v4265 = vpop.f32.mrb[0].mxu0
      %v4266 = vadd.f32 0.0, %v4265
      %v4267 = vpop.f32.mrb[0].mxu0
      %4268 = vmatprep.mubr.f32.mxu0 0.0
      %4269 = vmatmul.mubr.f32.gmra.mrb[0].mxu0 %v4052
      %v4270 = vpop.f32.mrb[0].mxu0
      %v4271 = vadd.f32 0.0, %v4270
      %v4272 = vpop.f32.mrb[0].mxu0
      %4273 = vmatprep.mubr.f32.mxu0 0.0
      %4274 = vmatmul.mubr.f32.gmra.mrb[0].mxu0 %v4055
      %v4275 = vpop.f32.mrb[0].mxu0
      %v4276 = vadd.f32 0.0, %v4275
      %v4277 = vpop.f32.mrb[0].mxu0
      %4278 = vmatprep.mubr.f32.mxu0 0.0
      %4279 = vmatmul.mubr.f32.gmra.mrb[0].mxu0 %v4058
      %v4280 = vpop.f32.mrb[0].mxu0
      %v4281 = vadd.f32 0.0, %v4280
      %v4282 = vpop.f32.mrb[0].mxu0
      %4283 = vmatprep.mubr.f32.mxu0 0.0
      %4284 = vmatmul.mubr.f32.gmra.mrb[0].mxu0 %v4061
      %v4285 = vpop.f32.mrb[0].mxu0
      %v4286 = vadd.f32 0.0, %v4285
      %v4287 = vpop.f32.mrb[0].mxu0
      %4288 = vmatprep.mubr.f32.mxu0 0.0
      %4289 = vmatmul.mubr.f32.gmra.mrb[0].mxu0 %v4064
      %v4290 = vpop.f32.mrb[0].mxu0
      %v4291 = vadd.f32 0.0, %v4290
      %v4292 = vpop.f32.mrb[0].mxu0
      %4293 = vdwg.mxu0
      %v4294 = vadd.f32 %v3938, %v4136
      %v4295 = vadd.f32 %v3939, %v4141
      %v4296 = vadd.f32 %v3940, %v4146
      %v4297 = vadd.f32 %v3941, %v4151
      %v4298 = vadd.f32 %v3942, %v4156
      %v4299 = vadd.f32 %v3943, %v4161
      %v4300 = vadd.f32 %v3944, %v4166
      %v4301 = vadd.f32 %v3945, %v4171
      %v4302 = vadd.f32 %v3946, %v4176
      %v4303 = vadd.f32 %v3947, %v4181
      %v4304 = vadd.f32 %v3948, %v4186
      %v4305 = vadd.f32 %v3949, %v4191
      %v4306 = vadd.f32 %v3950, %v4196
      %v4307 = vadd.f32 %v3951, %v4201
      %v4308 = vadd.f32 %v3952, %v4206
      %v4309 = vadd.f32 %v3953, %v4211
      %v4310 = vadd.f32 %v3954, %v4216
      %v4311 = vadd.f32 %v3955, %v4221
      %v4312 = vadd.f32 %v3956, %v4226
      %v4313 = vadd.f32 %v3957, %v4231
      %v4314 = vadd.f32 %v3958, %v4236
      %v4315 = vadd.f32 %v3959, %v4241
      %v4316 = vadd.f32 %v3960, %v4246
      %v4317 = vadd.f32 %v3961, %v4251
      %v4318 = vadd.f32 %v3962, %v4256
      %v4319 = vadd.f32 %v3963, %v4261
      %v4320 = vadd.f32 %v3964, %v4266
      %v4321 = vadd.f32 %v3965, %v4271
      %v4322 = vadd.f32 %v3966, %v4276
      %v4323 = vadd.f32 %v3967, %v4281
      %v4324 = vadd.f32 %v3968, %v4286
      %v4325 = vadd.f32 %v3969, %v4291
      %4326 = vst.msk [vmem:[#allocation2] sm:$0xff] %vm226, %v4294
      %4327 = vst.msk [vmem:[#allocation2 + $0x8] sm:$0xff] %vm226, %v4295
      %4328 = vst.msk [vmem:[#allocation2 + $0x10] sm:$0xff] %vm226, %v4296
      %4329 = vst.msk [vmem:[#allocation2 + $0x18] sm:$0xff] %vm226, %v4297
      %4330 = vst.msk [vmem:[#allocation2 + $0x20] sm:$0xff] %vm226, %v4298
      %4331 = vst.msk [vmem:[#allocation2 + $0x28] sm:$0xff] %vm226, %v4299
      %4332 = vst.msk [vmem:[#allocation2 + $0x30] sm:$0xff] %vm226, %v4300
      %4333 = vst.msk [vmem:[#allocation2 + $0x38] sm:$0xff] %vm226, %v4301
      %4334 = vst.msk [vmem:[#allocation2 + $0x40] sm:$0xff] %vm226, %v4302
      %4335 = vst.msk [vmem:[#allocation2 + $0x48] sm:$0xff] %vm226, %v4303
      %4336 = vst.msk [vmem:[#allocation2 + $0x50] sm:$0xff] %vm226, %v4304
      %4337 = vst.msk [vmem:[#allocation2 + $0x58] sm:$0xff] %vm226, %v4305
      %4338 = vst.msk [vmem:[#allocation2 + $0x60] sm:$0xff] %vm226, %v4306
      %4339 = vst.msk [vmem:[#allocation2 + $0x68] sm:$0xff] %vm226, %v4307
      %4340 = vst.msk [vmem:[#allocation2 + $0x70] sm:$0xff] %vm226, %v4308
      %4341 = vst.msk [vmem:[#allocation2 + $0x78] sm:$0xff] %vm226, %v4309
      %4342 = vst.msk [vmem:[#allocation2 + $0x80] sm:$0xff] %vm226, %v4310
      %4343 = vst.msk [vmem:[#allocation2 + $0x88] sm:$0xff] %vm226, %v4311
      %4344 = vst.msk [vmem:[#allocation2 + $0x90] sm:$0xff] %vm226, %v4312
      %4345 = vst.msk [vmem:[#allocation2 + $0x98] sm:$0xff] %vm226, %v4313
      %4346 = vst.msk [vmem:[#allocation2 + $0xa0] sm:$0xff] %vm226, %v4314
      %4347 = vst.msk [vmem:[#allocation2 + $0xa8] sm:$0xff] %vm226, %v4315
      %4348 = vst.msk [vmem:[#allocation2 + $0xb0] sm:$0xff] %vm226, %v4316
      %4349 = vst.msk [vmem:[#allocation2 + $0xb8] sm:$0xff] %vm226, %v4317
      %4350 = vst.msk [vmem:[#allocation2 + $0xc0] sm:$0xff] %vm226, %v4318
      %4351 = vst.msk [vmem:[#allocation2 + $0xc8] sm:$0xff] %vm226, %v4319
      %4352 = vst.msk [vmem:[#allocation2 + $0xd0] sm:$0xff] %vm226, %v4320
      %4353 = vst.msk [vmem:[#allocation2 + $0xd8] sm:$0xff] %vm226, %v4321
      %4354 = vst.msk [vmem:[#allocation2 + $0xe0] sm:$0xff] %vm226, %v4322
      %4355 = vst.msk [vmem:[#allocation2 + $0xe8] sm:$0xff] %vm226, %v4323
      %4356 = vst.msk [vmem:[#allocation2 + $0xf0] sm:$0xff] %vm226, %v4324
      %4357 = vst.msk [vmem:[#allocation2 + $0xf8] sm:$0xff] %vm226, %v4325
      %v4358 = vld [vmem:[%s3] sm:$0x1]
      %v4359 = vld [vmem:[%s4] sm:$0x1]
      %v4360 = vadd.f32 %v4358, %v4359
      %v4361 = vld [vmem:[#allocation2] sm:$0xff]
      %v4362 = vld [vmem:[#allocation2 + $0x8] sm:$0xff]
      %v4363 = vld [vmem:[#allocation2 + $0x10] sm:$0xff]
      %v4364 = vld [vmem:[#allocation2 + $0x18] sm:$0xff]
      %v4365 = vld [vmem:[#allocation2 + $0x20] sm:$0xff]
      %v4366 = vld [vmem:[#allocation2 + $0x28] sm:$0xff]
      %v4367 = vld [vmem:[#allocation2 + $0x30] sm:$0xff]
      %v4368 = vld [vmem:[#allocation2 + $0x38] sm:$0xff]
      %v4369 = vld [vmem:[#allocation2 + $0x40] sm:$0xff]
      %v4370 = vld [vmem:[#allocation2 + $0x48] sm:$0xff]
      %v4371 = vld [vmem:[#allocation2 + $0x50] sm:$0xff]
      %v4372 = vld [vmem:[#allocation2 + $0x58] sm:$0xff]
      %v4373 = vld [vmem:[#allocation2 + $0x60] sm:$0xff]
      %v4374 = vld [vmem:[#allocation2 + $0x68] sm:$0xff]
      %v4375 = vld [vmem:[#allocation2 + $0x70] sm:$0xff]
      %v4376 = vld [vmem:[#allocation2 + $0x78] sm:$0xff]
      %v4377 = vld [vmem:[#allocation2 + $0x80] sm:$0xff]
      %v4378 = vld [vmem:[#allocation2 + $0x88] sm:$0xff]
      %v4379 = vld [vmem:[#allocation2 + $0x90] sm:$0xff]
      %v4380 = vld [vmem:[#allocation2 + $0x98] sm:$0xff]
      %v4381 = vld [vmem:[#allocation2 + $0xa0] sm:$0xff]
      %v4382 = vld [vmem:[#allocation2 + $0xa8] sm:$0xff]
      %v4383 = vld [vmem:[#allocation2 + $0xb0] sm:$0xff]
      %v4384 = vld [vmem:[#allocation2 + $0xb8] sm:$0xff]
      %v4385 = vld [vmem:[#allocation2 + $0xc0] sm:$0xff]
      %v4386 = vld [vmem:[#allocation2 + $0xc8] sm:$0xff]
      %v4387 = vld [vmem:[#allocation2 + $0xd0] sm:$0xff]
      %v4388 = vld [vmem:[#allocation2 + $0xd8] sm:$0xff]
      %v4389 = vld [vmem:[#allocation2 + $0xe0] sm:$0xff]
      %v4390 = vld [vmem:[#allocation2 + $0xe8] sm:$0xff]
      %v4391 = vld [vmem:[#allocation2 + $0xf0] sm:$0xff]
      %v4392 = vld [vmem:[#allocation2 + $0xf8] sm:$0xff]
      %v4394 = vlaneseq
      %v4395 = vshrl.u32 %v4394, 7
      %v4396 = vsub.s32 0, %v4395
      %v4397 = vrot.slane %v4360, %v4396
      %v4399 = vadd.f32 %v4361, %v4397
      %v4400 = vadd.f32 %v4362, %v4397
      %v4401 = vadd.f32 %v4363, %v4397
      %v4402 = vadd.f32 %v4364, %v4397
      %v4403 = vadd.f32 %v4365, %v4397
      %v4404 = vadd.f32 %v4366, %v4397
      %v4405 = vadd.f32 %v4367, %v4397
      %v4406 = vadd.f32 %v4368, %v4397
      %v4407 = vadd.f32 %v4369, %v4397
      %v4408 = vadd.f32 %v4370, %v4397
      %v4409 = vadd.f32 %v4371, %v4397
      %v4410 = vadd.f32 %v4372, %v4397
      %v4411 = vadd.f32 %v4373, %v4397
      %v4412 = vadd.f32 %v4374, %v4397
      %v4413 = vadd.f32 %v4375, %v4397
      %v4414 = vadd.f32 %v4376, %v4397
      %v4415 = vadd.f32 %v4377, %v4397
      %v4416 = vadd.f32 %v4378, %v4397
      %v4417 = vadd.f32 %v4379, %v4397
      %v4418 = vadd.f32 %v4380, %v4397
      %v4419 = vadd.f32 %v4381, %v4397
      %v4420 = vadd.f32 %v4382, %v4397
      %v4421 = vadd.f32 %v4383, %v4397
      %v4422 = vadd.f32 %v4384, %v4397
      %v4423 = vadd.f32 %v4385, %v4397
      %v4424 = vadd.f32 %v4386, %v4397
      %v4425 = vadd.f32 %v4387, %v4397
      %v4426 = vadd.f32 %v4388, %v4397
      %v4427 = vadd.f32 %v4389, %v4397
      %v4428 = vadd.f32 %v4390, %v4397
      %v4429 = vadd.f32 %v4391, %v4397
      %v4430 = vadd.f32 %v4392, %v4397
      %4431 = vst.msk [vmem:[%s224] sm:$0xff] %vm226, %v4399
      %4432 = vst.msk [vmem:[%s224 + $0x8] sm:$0xff] %vm226, %v4400
      %4433 = vst.msk [vmem:[%s224 + $0x10] sm:$0xff] %vm226, %v4401
      %4434 = vst.msk [vmem:[%s224 + $0x18] sm:$0xff] %vm226, %v4402
      %4435 = vst.msk [vmem:[%s224 + $0x20] sm:$0xff] %vm226, %v4403
      %4436 = vst.msk [vmem:[%s224 + $0x28] sm:$0xff] %vm226, %v4404
      %4437 = vst.msk [vmem:[%s224 + $0x30] sm:$0xff] %vm226, %v4405
      %4438 = vst.msk [vmem:[%s224 + $0x38] sm:$0xff] %vm226, %v4406
      %4439 = vst.msk [vmem:[%s224 + $0x40] sm:$0xff] %vm226, %v4407
      %4440 = vst.msk [vmem:[%s224 + $0x48] sm:$0xff] %vm226, %v4408
      %4441 = vst.msk [vmem:[%s224 + $0x50] sm:$0xff] %vm226, %v4409
      %4442 = vst.msk [vmem:[%s224 + $0x58] sm:$0xff] %vm226, %v4410
      %4443 = vst.msk [vmem:[%s224 + $0x60] sm:$0xff] %vm226, %v4411
      %4444 = vst.msk [vmem:[%s224 + $0x68] sm:$0xff] %vm226, %v4412
      %4445 = vst.msk [vmem:[%s224 + $0x70] sm:$0xff] %vm226, %v4413
      %4446 = vst.msk [vmem:[%s224 + $0x78] sm:$0xff] %vm226, %v4414
      %4447 = vst.msk [vmem:[%s224 + $0x80] sm:$0xff] %vm226, %v4415
      %4448 = vst.msk [vmem:[%s224 + $0x88] sm:$0xff] %vm226, %v4416
      %4449 = vst.msk [vmem:[%s224 + $0x90] sm:$0xff] %vm226, %v4417
      %4450 = vst.msk [vmem:[%s224 + $0x98] sm:$0xff] %vm226, %v4418
      %4451 = vst.msk [vmem:[%s224 + $0xa0] sm:$0xff] %vm226, %v4419
      %4452 = vst.msk [vmem:[%s224 + $0xa8] sm:$0xff] %vm226, %v4420
      %4453 = vst.msk [vmem:[%s224 + $0xb0] sm:$0xff] %vm226, %v4421
      %4454 = vst.msk [vmem:[%s224 + $0xb8] sm:$0xff] %vm226, %v4422
      %4455 = vst.msk [vmem:[%s224 + $0xc0] sm:$0xff] %vm226, %v4423
      %4456 = vst.msk [vmem:[%s224 + $0xc8] sm:$0xff] %vm226, %v4424
      %4457 = vst.msk [vmem:[%s224 + $0xd0] sm:$0xff] %vm226, %v4425
      %4458 = vst.msk [vmem:[%s224 + $0xd8] sm:$0xff] %vm226, %v4426
      %4459 = vst.msk [vmem:[%s224 + $0xe0] sm:$0xff] %vm226, %v4427
      %4460 = vst.msk [vmem:[%s224 + $0xe8] sm:$0xff] %vm226, %v4428
      %4461 = vst.msk [vmem:[%s224 + $0xf0] sm:$0xff] %vm226, %v4429
      %4462 = vst.msk [vmem:[%s224 + $0xf8] sm:$0xff] %vm226, %v4430
      %s4463 = smul.u32 32, %s16
      %p4464 = scmp.lt.s32.totalorder %s4463, 63
      %s4465 = scalar_select %p4464, %s4463, 63
      %s4466 = smul.addr %s4465, 8
      %s4467 = scalar_lea.vmem %s5, %s4466
      // Predicated region
      $region41: #{model_forward.2} parent=39 // pred_check
        %p4468 = pneg %p144
      $region42: #{model_forward.2} parent=39 // pred_check_branch
        %4470 = sbr.rel (%p4468) target = $region44
      $region43: #{model_forward.2} parent=39 // pred_region
        %s4471 = smul.u32 32, %s16
      $region44: #{model_forward.2} parent=39 // pred_fallthru
        _
    $region40: #{model_forward.2} parent=5 // pred_fallthru
      _
    %p4472 = scmp.le.s32.totalorder 2, %s11
    // Predicated region
    $region45: #{model_forward.2} parent=5 // pred_check
      %p4473 = pneg %p4472
    $region46: #{model_forward.2} parent=5 // pred_check_branch
      %4475 = sbr.rel (%p4473) target = $region48
    $region47: #{model_forward.2} parent=5 // pred_region
      %s4476 = ssub.s32 %s11, 2
      // Predicated region
      $region49: #{model_forward.2} parent=47 // pred_check
        %p4477 = pneg %p150
      $region50: #{model_forward.2} parent=47 // pred_check_branch
        %4479 = sbr.rel (%p4477) target = $region52
      $region51: #{model_forward.2} parent=47 // pred_region
        %s4480 = smul.u32 32, %s17
        %p4481 = scmp.lt.s32.totalorder %s4480, 63
        %s4482 = scalar_select %p4481, %s4480, 63
        %s4483 = smul.addr %s4482, 8
        %s4484 = scalar_lea.vmem %s5, %s4483
      $region52: #{model_forward.2} parent=47 // pred_fallthru
        _
    $region48: #{model_forward.2} parent=5 // pred_fallthru
      _
  $region6: #{model_forward.2} parent=0 // loop_footer
    %s15 = sadd.s32 1, %s11
  $region7: #{model_forward.2} parent=0 // loop_footer_branch
    %10 = sbr.rel target = $region3
  $region8: #{model_forward.2} parent=0 // loop_exit
    _

</llo_original>
